<compile_context>
chip_gen: v7x
topology: tpu7x:2x2x1
jax: 0.10.0
libtpu: 0.0.40
codegen_flags: <defaults>
</compile_context>

<pallas_src>
import functools

import jax
import jax.numpy as jnp
from jax.experimental import pallas as pl
from jax.experimental.pallas import tpu as pltpu

_LANE = 128      # lane width: hidden feature dims are padded to a multiple of this
_ROW_ALIGN = 16  # sublane alignment safe for bf16 (and f32) batch tiles

_ACTIVATIONS = {
    "relu": lambda x: jnp.maximum(x, 0.0),
    "sigmoid": jax.nn.sigmoid,
    "tanh": jnp.tanh,
    "softplus": jax.nn.softplus,
    "elu": jax.nn.elu,
    "relu6": lambda x: jnp.clip(x, 0.0, 6.0),
    "leakyrelu": lambda x: jnp.where(x >= 0, x, 0.01 * x),
}


def _round_up(x, m):
    return ((x + m - 1) // m) * m


# ----------------------------------------------------------------------------- hardware


def _vmem_capacity_bytes():
    """Physical VMEM of the current chip; conservative fallback if query unavailable."""
    try:
        info = pltpu.get_tpu_info()
        cap = int(getattr(info, "vmem_capacity_bytes", 0) or 0)
        if cap > 0:
            return cap
    except Exception:
        pass
    return 64 << 20  # conservative default: v7x per-TensorCore VMEM


def _num_tensorcores():
    """Best-effort TensorCore count per device (2 on dual-TC parts, else 1)."""
    try:
        info = pltpu.get_tpu_info()
        for attr in ("num_cores", "num_tensorcores", "tensorcore_count", "core_count"):
            v = getattr(info, attr, None)
            if isinstance(v, int) and v > 0:
                return min(v, 2)
    except Exception:
        pass
    try:
        v = getattr(jax.devices()[0], "num_cores", None)
        if isinstance(v, int) and v > 0:
            return min(v, 2)
    except Exception:
        pass
    return 1


# ---------------------------------------------------------------------- params handling


def init_params(key, dim_input, dim_layers, dim_output):
    """Deterministic init mirroring torch.nn.Linear default:
    U(-1/sqrt(fan_in), 1/sqrt(fan_in)) for both weight and bias."""
    dims = [dim_input] + list(dim_layers) + [dim_output]
    params = []
    for fan_in, fan_out in zip(dims[:-1], dims[1:]):
        key, kw, kb = jax.random.split(key, 3)
        bound = 1.0 / jnp.sqrt(jnp.float32(fan_in))
        w = jax.random.uniform(kw, (fan_in, fan_out), jnp.float32, -bound, bound)
        b = jax.random.uniform(kb, (1, fan_out), jnp.float32, -bound, bound)
        params.append((w, b))
    return params


def prepare_params(params, compute_dtype=jnp.bfloat16):
    """One-time pad + cast of the weights (hoisted out of the per-call forward).

    Returns (padded_params, dims, dims_pad) where padded_params[i] = (W_bf16, b_f32),
    W: (fan_in_pad, fan_out_pad) with zero-padded extra rows/cols, b: (1, fan_out_pad).
    Input / output feature dims stay unpadded; hidden dims pad to multiples of 128.
    """
    dims = [params[0][0].shape[0]] + [w.shape[1] for (w, _) in params]
    dims_pad = ([dims[0]]
                + [_round_up(d, _LANE) for d in dims[1:-1]]
                + [dims[-1]])
    padded = []
    for li, (w, b) in enumerate(params):
        fi, fo = dims[li], dims[li + 1]
        fip, fop = dims_pad[li], dims_pad[li + 1]
        w_p = jnp.pad(jnp.asarray(w, jnp.float32),
                      ((0, fip - fi), (0, fop - fo))).astype(compute_dtype)
        b_p = jnp.pad(jnp.reshape(jnp.asarray(b, jnp.float32), (1, -1)),
                      ((0, 0), (0, fop - fo)))
        padded.append((w_p, b_p))
    return padded, tuple(dims), tuple(dims_pad)


# ------------------------------------------------------------------------------- kernel


def _make_mlp_kernel(n_layers, activation, compute_dtype):
    """Kernel over one batch tile: full MLP, statically unrolled over layers."""
    act = _ACTIVATIONS[activation]

    def kernel(*refs):
        x_ref, o_ref = refs[0], refs[-1]
        h = x_ref[...].astype(compute_dtype)                # bf16 operands for the MXU
        for li in range(n_layers):
            w_ref = refs[1 + 2 * li]
            b_ref = refs[2 + 2 * li]
            # bf16 x bf16 MXU matmul with f32 accumulation; bias + activation in f32.
            y = jnp.dot(h, w_ref[...], preferred_element_type=jnp.float32) + b_ref[...]
            # hidden layers use the chosen activation; final layer is always ReLU
            a = act(y) if li < n_layers - 1 else jnp.maximum(y, 0.0)
            h = a if li == n_layers - 1 else a.astype(compute_dtype)
        o_ref[...] = h.astype(o_ref.dtype)

    return kernel


# --------------------------------------------------------------------------- VMEM / tb


def _estimate_vmem_bytes(tb, dims_pad, n_layers, compute_dtype):
    """Per-tile VMEM footprint: weights counted ONCE (single-buffered), x/out
    double-buffered, intermediates as peak over adjacent layers (not the sum)."""
    itemsz = jnp.dtype(compute_dtype).itemsize
    w_bytes = sum(dims_pad[i] * dims_pad[i + 1] for i in range(n_layers)) * itemsz
    b_bytes = sum(dims_pad[1:]) * 4
    io_bytes = tb * (2 * dims_pad[0] * 4          # f32 input tile, double-buffered
                     + dims_pad[0] * itemsz       # in-kernel bf16 copy of the tile
                     + 2 * dims_pad[-1] * 4)      # f32 output tile, double-buffered
    if n_layers >= 2:
        inter_peak = max(dims_pad[i] + dims_pad[i + 1] for i in range(1, n_layers))
    else:
        inter_peak = 0
    inter_bytes = tb * inter_peak * (4 + itemsz)  # f32 activation + bf16 copy
    return w_bytes + b_bytes + io_bytes + inter_bytes


def _pick_batch_tile(B, dims_pad, n_layers, compute_dtype, vmem_cap, n_tc):
    """Largest tile that fits VMEM, targeting grid length == number of TensorCores
    (grid=(1,) on single-TC v5e/v6e, 2 steps on dual-TC parts)."""
    headroom = 8 << 20
    tb = _round_up(max(1, pl.cdiv(B, max(1, n_tc))), _ROW_ALIGN)
    while tb > _ROW_ALIGN and (_estimate_vmem_bytes(tb, dims_pad, n_layers, compute_dtype)
                               + headroom > vmem_cap):
        tb = max(_ROW_ALIGN, _round_up(tb // 2, _ROW_ALIGN))
    return tb
    # TODO(synk): for hidden layers wide enough that a single weight exceeds the VMEM
    # budget, fall back to tiling fan_out / K with pltpu.emit_pipeline instead of
    # keeping every weight fully resident.


# ------------------------------------------------------------------------------ forward


@functools.partial(jax.jit, static_argnames=("activation", "dims", "dims_pad", "tb",
                                             "vmem_cap", "single_buffer_weights",
                                             "compute_dtype"))
def _forward_impl(x, weights, biases, *, activation, dims, dims_pad, tb, vmem_cap,
                  single_buffer_weights, compute_dtype):
    n_layers = len(weights)
    B, din = x.shape
    assert din == dims[0]
    B_pad = _round_up(B, tb)
    x_p = x if B_pad == B else jnp.pad(x, ((0, B_pad - B), (0, 0)))

    resident_kwargs = {}
    if single_buffer_weights:
        # Constant index_map -> double-buffering is pure VMEM waste; keep one copy.
        resident_kwargs = dict(pipeline_mode=pl.Buffered(1))

    in_specs = [pl.BlockSpec((tb, dims_pad[0]), lambda i: (i, 0))]
    flat_args = [x_p]
    for li in range(n_layers):
        fip, fop = dims_pad[li], dims_pad[li + 1]
        flat_args += [weights[li], biases[li]]
        in_specs += [pl.BlockSpec((fip, fop), lambda i: (0, 0), **resident_kwargs),
                     pl.BlockSpec((1, fop), lambda i: (0, 0), **resident_kwargs)]

    dout = dims_pad[-1]
    itemsz = jnp.dtype(compute_dtype).itemsize
    mm_elems = sum(dims_pad[i] * dims_pad[i + 1] for i in range(n_layers))
    flops = 2 * B_pad * mm_elems
    transcendentals = (0 if activation in ("relu", "relu6", "leakyrelu")
                       else B_pad * sum(dims_pad[1:-1]))
    bytes_accessed = (B_pad * dims_pad[0] * x.dtype.itemsize      # x read
                      + B_pad * dout * 4                          # out write
                      + mm_elems * itemsz                         # weights
                      + sum(dims_pad[1:]) * 4)                    # biases

    needed = _estimate_vmem_bytes(tb, dims_pad, n_layers, compute_dtype)
    vmem_limit = int(min(max(needed + (8 << 20), 16 << 20), vmem_cap))

    out_p = pl.pallas_call(
        _make_mlp_kernel(n_layers, activation, compute_dtype),
        out_shape=jax.ShapeDtypeStruct((B_pad, dout), jnp.float32),
        grid_spec=pltpu.PrefetchScalarGridSpec(
            num_scalar_prefetch=0,
            grid=(B_pad // tb,),
            in_specs=in_specs,
            out_specs=pl.BlockSpec((tb, dout), lambda i: (i, 0)),
        ),
        compiler_params=pltpu.CompilerParams(
            dimension_semantics=("parallel",),
            vmem_limit_bytes=vmem_limit),
        cost_estimate=pl.CostEstimate(flops=int(flops),
                                      transcendentals=int(transcendentals),
                                      bytes_accessed=int(bytes_accessed)),
    )(*flat_args)

    return out_p[:B, :] if B_pad != B else out_p


def neural_net_forward(x, prepared, *, activation="relu", compute_dtype=jnp.bfloat16):
    """Fused MLP forward.

    x: (B, dim_input) f32.
    prepared: output of prepare_params(params) -- pre-padded / pre-cast weights.
    """
    padded_params, dims, dims_pad = prepared
    weights = tuple(w for (w, _) in padded_params)
    biases = tuple(b for (_, b) in padded_params)

    B = x.shape[0]
    n_tc = _num_tensorcores()
    vmem_cap = int(0.85 * _vmem_capacity_bytes())          # chip-aware cap (v7x: 64 MiB)
    tb = _pick_batch_tile(B, dims_pad, len(weights), compute_dtype, vmem_cap, n_tc)

    kwargs = dict(activation=activation, dims=dims, dims_pad=dims_pad, tb=tb,
                  vmem_cap=vmem_cap, compute_dtype=compute_dtype)
    try:
        return _forward_impl(x, weights, biases, single_buffer_weights=True, **kwargs)
    except Exception:
        # Fallback if this JAX build rejects single-buffered (Buffered(1)) specs.
        return _forward_impl(x, weights, biases, single_buffer_weights=False, **kwargs)


# ---------------------------------------------------------------------------- reference


def reference_forward(x, params, activation="relu", compute_dtype=jnp.float32):
    """Pure-JAX reference of NeuralNet.forward; compute_dtype controls matmul
    operand precision (f32 accumulation) so it can mirror the kernel's bf16 path."""
    act = _ACTIVATIONS[activation]
    h = x
    n = len(params)
    for i, (w, b) in enumerate(params):
        y = jnp.dot(h.astype(compute_dtype), w.astype(compute_dtype),
                    preferred_element_type=jnp.float32) + jnp.reshape(b, (1, -1))
        h = act(y) if i < n - 1 else jnp.maximum(y, 0.0)
    return h


if __name__ == "__main__":
    # NeuralNet(dim_input=32, dim_output=16, dim_layers=[64, 64], activation='relu').
    dim_input, dim_layers, dim_output = 32, [64, 64], 16
    batch = 512

    key = jax.random.PRNGKey(0)
    key, kx = jax.random.split(key)
    x = jax.random.normal(kx, (batch, dim_input), jnp.float32)
    params = init_params(key, dim_input, dim_layers, dim_output)

    # One-time pad + bf16 cast of the weights (hoisted out of the forward call).
    prepared = prepare_params(params)

    out = neural_net_forward(x, prepared, activation="relu")
    out = jax.block_until_ready(out)
    assert out.shape == (batch, dim_output)

    # Reference with matched precision (bf16 matmul operands, f32 accumulation).
    ref_bf16 = reference_forward(x, params, compute_dtype=jnp.bfloat16)
    assert jnp.allclose(out, ref_bf16, atol=2e-4, rtol=2e-4), "mismatch vs bf16 reference"

    # Sanity check vs full-f32 math (only bf16 rounding differences expected).
    ref_f32 = reference_forward(x, params, compute_dtype=jnp.float32)
    assert jnp.allclose(out, ref_f32, atol=5e-2, rtol=5e-2), "mismatch vs f32 reference"

    print("KERNEL_OK")
</pallas_src>

<mosaic_0001>
module attributes {stable_mosaic.version = 11 : i64} {
  func.func @kernel(%arg0: i32, %arg1: memref<512x32xf32, #tpu.memory_space<vmem>>, %arg2: memref<32x128xbf16, #tpu.memory_space<vmem>>, %arg3: memref<1x128xf32, #tpu.memory_space<vmem>>, %arg4: memref<128x128xbf16, #tpu.memory_space<vmem>>, %arg5: memref<1x128xf32, #tpu.memory_space<vmem>>, %arg6: memref<128x16xbf16, #tpu.memory_space<vmem>>, %arg7: memref<1x16xf32, #tpu.memory_space<vmem>>, %arg8: memref<512x16xf32, #tpu.memory_space<vmem>>) attributes {dimension_semantics = [#tpu.dimension_semantics<parallel>], iteration_bounds = array<i64: 1>, scalar_prefetch = 0 : i64, scratch_operands = 0 : i64, tpu.core_type = #tpu.core_type<tc>, window_params = [{transform_indices = @transform_0, window_bounds = array<i64: 512, 32>}, {pipeline_mode = #tpu.pipeline_mode<synchronous>, transform_indices = @transform_1, window_bounds = array<i64: 32, 128>}, {pipeline_mode = #tpu.pipeline_mode<synchronous>, transform_indices = @transform_2, window_bounds = array<i64: 1, 128>}, {pipeline_mode = #tpu.pipeline_mode<synchronous>, transform_indices = @transform_3, window_bounds = array<i64: 128, 128>}, {pipeline_mode = #tpu.pipeline_mode<synchronous>, transform_indices = @transform_4, window_bounds = array<i64: 1, 128>}, {pipeline_mode = #tpu.pipeline_mode<synchronous>, transform_indices = @transform_5, window_bounds = array<i64: 128, 16>}, {pipeline_mode = #tpu.pipeline_mode<synchronous>, transform_indices = @transform_6, window_bounds = array<i64: 1, 16>}, {transform_indices = @transform_7, window_bounds = array<i64: 512, 16>}]} {
    %c0 = arith.constant 0 : index
    %c0_0 = arith.constant 0 : index
    %0 = vector.load %arg1[%c0, %c0_0] : memref<512x32xf32, #tpu.memory_space<vmem>>, vector<512x32xf32>
    %1 = arith.truncf %0 : vector<512x32xf32> to vector<512x32xbf16>
    %c0_1 = arith.constant 0 : index
    %c0_2 = arith.constant 0 : index
    %2 = vector.load %arg2[%c0_1, %c0_2] : memref<32x128xbf16, #tpu.memory_space<vmem>>, vector<32x128xbf16>
    %cst = arith.constant dense<0.000000e+00> : vector<512x128xf32>
    %3 = tpu.matmul %1, %2, %cst {dimension_numbers = #tpu.dot_dimension_numbers<[1], [0], [0], [1], [0, 0, 1, 1], [], []>} : vector<512x32xbf16>, vector<32x128xbf16>, vector<512x128xf32> -> vector<512x128xf32>
    %c0_3 = arith.constant 0 : index
    %c0_4 = arith.constant 0 : index
    %4 = vector.load %arg3[%c0_3, %c0_4] : memref<1x128xf32, #tpu.memory_space<vmem>>, vector<1x128xf32>
    %5 = vector.broadcast %4 : vector<1x128xf32> to vector<512x128xf32>
    %6 = arith.addf %3, %5 : vector<512x128xf32>
    %cst_5 = arith.constant 0.000000e+00 : f32
    %7 = vector.broadcast %cst_5 : f32 to vector<512x128xf32>
    %8 = arith.maximumf %6, %7 : vector<512x128xf32>
    %9 = arith.truncf %8 : vector<512x128xf32> to vector<512x128xbf16>
    %c0_6 = arith.constant 0 : index
    %c0_7 = arith.constant 0 : index
    %10 = vector.load %arg4[%c0_6, %c0_7] : memref<128x128xbf16, #tpu.memory_space<vmem>>, vector<128x128xbf16>
    %cst_8 = arith.constant dense<0.000000e+00> : vector<512x128xf32>
    %11 = tpu.matmul %9, %10, %cst_8 {dimension_numbers = #tpu.dot_dimension_numbers<[1], [0], [0], [1], [0, 0, 1, 1], [], []>} : vector<512x128xbf16>, vector<128x128xbf16>, vector<512x128xf32> -> vector<512x128xf32>
    %c0_9 = arith.constant 0 : index
    %c0_10 = arith.constant 0 : index
    %12 = vector.load %arg5[%c0_9, %c0_10] : memref<1x128xf32, #tpu.memory_space<vmem>>, vector<1x128xf32>
    %13 = vector.broadcast %12 : vector<1x128xf32> to vector<512x128xf32>
    %14 = arith.addf %11, %13 : vector<512x128xf32>
    %cst_11 = arith.constant 0.000000e+00 : f32
    %15 = vector.broadcast %cst_11 : f32 to vector<512x128xf32>
    %16 = arith.maximumf %14, %15 : vector<512x128xf32>
    %17 = arith.truncf %16 : vector<512x128xf32> to vector<512x128xbf16>
    %c0_12 = arith.constant 0 : index
    %c0_13 = arith.constant 0 : index
    %18 = vector.load %arg6[%c0_12, %c0_13] : memref<128x16xbf16, #tpu.memory_space<vmem>>, vector<128x16xbf16>
    %cst_14 = arith.constant dense<0.000000e+00> : vector<512x16xf32>
    %19 = tpu.matmul %17, %18, %cst_14 {dimension_numbers = #tpu.dot_dimension_numbers<[1], [0], [0], [1], [0, 0, 1, 1], [], []>} : vector<512x128xbf16>, vector<128x16xbf16>, vector<512x16xf32> -> vector<512x16xf32>
    %c0_15 = arith.constant 0 : index
    %c0_16 = arith.constant 0 : index
    %20 = vector.load %arg7[%c0_15, %c0_16] : memref<1x16xf32, #tpu.memory_space<vmem>>, vector<1x16xf32>
    %21 = vector.broadcast %20 : vector<1x16xf32> to vector<512x16xf32>
    %22 = arith.addf %19, %21 : vector<512x16xf32>
    %cst_17 = arith.constant 0.000000e+00 : f32
    %23 = vector.broadcast %cst_17 : f32 to vector<512x16xf32>
    %24 = arith.maximumf %22, %23 : vector<512x16xf32>
    %c0_18 = arith.constant 0 : index
    %c0_19 = arith.constant 0 : index
    %25 = vector.load %arg8[%c0_18, %c0_19] : memref<512x16xf32, #tpu.memory_space<vmem>>, vector<512x16xf32>
    tpu.vector_store %arg8[%c0_18, %c0_19], %24 {strides = array<i32>} : memref<512x16xf32, #tpu.memory_space<vmem>>, vector<512x16xf32>,
    return
  }
  func.func @transform_0(%arg0: i32) -> (i32, i32) {
    %c0_i32 = arith.constant 0 : i32
    %c0_i32_0 = arith.constant 0 : i32
    return %arg0, %c0_i32 : i32, i32
  }
  func.func @transform_1(%arg0: i32) -> (i32, i32) {
    %c0_i32 = arith.constant 0 : i32
    %c0_i32_0 = arith.constant 0 : i32
    %c0_i32_1 = arith.constant 0 : i32
    return %c0_i32, %c0_i32_0 : i32, i32
  }
  func.func @transform_2(%arg0: i32) -> (i32, i32) {
    %c0_i32 = arith.constant 0 : i32
    %c0_i32_0 = arith.constant 0 : i32
    %c0_i32_1 = arith.constant 0 : i32
    return %c0_i32, %c0_i32_0 : i32, i32
  }
  func.func @transform_3(%arg0: i32) -> (i32, i32) {
    %c0_i32 = arith.constant 0 : i32
    %c0_i32_0 = arith.constant 0 : i32
    %c0_i32_1 = arith.constant 0 : i32
    return %c0_i32, %c0_i32_0 : i32, i32
  }
  func.func @transform_4(%arg0: i32) -> (i32, i32) {
    %c0_i32 = arith.constant 0 : i32
    %c0_i32_0 = arith.constant 0 : i32
    %c0_i32_1 = arith.constant 0 : i32
    return %c0_i32, %c0_i32_0 : i32, i32
  }
  func.func @transform_5(%arg0: i32) -> (i32, i32) {
    %c0_i32 = arith.constant 0 : i32
    %c0_i32_0 = arith.constant 0 : i32
    %c0_i32_1 = arith.constant 0 : i32
    return %c0_i32, %c0_i32_0 : i32, i32
  }
  func.func @transform_6(%arg0: i32) -> (i32, i32) {
    %c0_i32 = arith.constant 0 : i32
    %c0_i32_0 = arith.constant 0 : i32
    %c0_i32_1 = arith.constant 0 : i32
    return %c0_i32, %c0_i32_0 : i32, i32
  }
  func.func @transform_7(%arg0: i32) -> (i32, i32) {
    %c0_i32 = arith.constant 0 : i32
    %c0_i32_0 = arith.constant 0 : i32
    return %arg0, %c0_i32 : i32, i32
  }
}

module attributes {stable_mosaic.version = 11 : i64} {
  func.func @kernel(%arg0: i32, %arg1: memref<512x32xf32, #tpu.memory_space<vmem>>, %arg2: memref<32x128xbf16, #tpu.memory_space<vmem>>, %arg3: memref<1x128xf32, #tpu.memory_space<vmem>>, %arg4: memref<128x128xbf16, #tpu.memory_space<vmem>>, %arg5: memref<1x128xf32, #tpu.memory_space<vmem>>, %arg6: memref<128x16xbf16, #tpu.memory_space<vmem>>, %arg7: memref<1x16xf32, #tpu.memory_space<vmem>>, %arg8: memref<512x16xf32, #tpu.memory_space<vmem>>) attributes {dimension_semantics = [#tpu.dimension_semantics<parallel>], iteration_bounds = array<i64: 1>, scalar_prefetch = 0 : i64, scratch_operands = 0 : i64, tpu.core_type = #tpu.core_type<tc>, window_params = [{transform_indices = @transform_0, window_bounds = array<i64: 512, 32>}, {pipeline_mode = #tpu.pipeline_mode<synchronous>, transform_indices = @transform_1, window_bounds = array<i64: 32, 128>}, {pipeline_mode = #tpu.pipeline_mode<synchronous>, transform_indices = @transform_2, window_bounds = array<i64: 1, 128>}, {pipeline_mode = #tpu.pipeline_mode<synchronous>, transform_indices = @transform_3, window_bounds = array<i64: 128, 128>}, {pipeline_mode = #tpu.pipeline_mode<synchronous>, transform_indices = @transform_4, window_bounds = array<i64: 1, 128>}, {pipeline_mode = #tpu.pipeline_mode<synchronous>, transform_indices = @transform_5, window_bounds = array<i64: 128, 16>}, {pipeline_mode = #tpu.pipeline_mode<synchronous>, transform_indices = @transform_6, window_bounds = array<i64: 1, 16>}, {transform_indices = @transform_7, window_bounds = array<i64: 512, 16>}]} {
    %c0 = arith.constant 0 : index
    %c0_0 = arith.constant 0 : index
    %0 = vector.load %arg1[%c0, %c0_0] : memref<512x32xf32, #tpu.memory_space<vmem>>, vector<512x32xf32>
    %1 = arith.truncf %0 : vector<512x32xf32> to vector<512x32xbf16>
    %c0_1 = arith.constant 0 : index
    %c0_2 = arith.constant 0 : index
    %2 = vector.load %arg2[%c0_1, %c0_2] : memref<32x128xbf16, #tpu.memory_space<vmem>>, vector<32x128xbf16>
    %cst = arith.constant dense<0.000000e+00> : vector<512x128xf32>
    %3 = tpu.matmul %1, %2, %cst {dimension_numbers = #tpu.dot_dimension_numbers<[1], [0], [0], [1], [0, 0, 1, 1], [], []>} : vector<512x32xbf16>, vector<32x128xbf16>, vector<512x128xf32> -> vector<512x128xf32>
    %c0_3 = arith.constant 0 : index
    %c0_4 = arith.constant 0 : index
    %4 = vector.load %arg3[%c0_3, %c0_4] : memref<1x128xf32, #tpu.memory_space<vmem>>, vector<1x128xf32>
    %5 = vector.broadcast %4 : vector<1x128xf32> to vector<512x128xf32>
    %6 = arith.addf %3, %5 : vector<512x128xf32>
    %cst_5 = arith.constant 0.000000e+00 : f32
    %7 = vector.broadcast %cst_5 : f32 to vector<512x128xf32>
    %8 = arith.maximumf %6, %7 : vector<512x128xf32>
    %9 = arith.truncf %8 : vector<512x128xf32> to vector<512x128xbf16>
    %c0_6 = arith.constant 0 : index
    %c0_7 = arith.constant 0 : index
    %10 = vector.load %arg4[%c0_6, %c0_7] : memref<128x128xbf16, #tpu.memory_space<vmem>>, vector<128x128xbf16>
    %cst_8 = arith.constant dense<0.000000e+00> : vector<512x128xf32>
    %11 = tpu.matmul %9, %10, %cst_8 {dimension_numbers = #tpu.dot_dimension_numbers<[1], [0], [0], [1], [0, 0, 1, 1], [], []>} : vector<512x128xbf16>, vector<128x128xbf16>, vector<512x128xf32> -> vector<512x128xf32>
    %c0_9 = arith.constant 0 : index
    %c0_10 = arith.constant 0 : index
    %12 = vector.load %arg5[%c0_9, %c0_10] : memref<1x128xf32, #tpu.memory_space<vmem>>, vector<1x128xf32>
    %13 = vector.broadcast %12 : vector<1x128xf32> to vector<512x128xf32>
    %14 = arith.addf %11, %13 : vector<512x128xf32>
    %cst_11 = arith.constant 0.000000e+00 : f32
    %15 = vector.broadcast %cst_11 : f32 to vector<512x128xf32>
    %16 = arith.maximumf %14, %15 : vector<512x128xf32>
    %17 = arith.truncf %16 : vector<512x128xf32> to vector<512x128xbf16>
    %c0_12 = arith.constant 0 : index
    %c0_13 = arith.constant 0 : index
    %18 = vector.load %arg6[%c0_12, %c0_13] : memref<128x16xbf16, #tpu.memory_space<vmem>>, vector<128x16xbf16>
    %cst_14 = arith.constant dense<0.000000e+00> : vector<512x16xf32>
    %19 = tpu.matmul %17, %18, %cst_14 {dimension_numbers = #tpu.dot_dimension_numbers<[1], [0], [0], [1], [0, 0, 1, 1], [], []>} : vector<512x128xbf16>, vector<128x16xbf16>, vector<512x16xf32> -> vector<512x16xf32>
    %c0_15 = arith.constant 0 : index
    %c0_16 = arith.constant 0 : index
    %20 = vector.load %arg7[%c0_15, %c0_16] : memref<1x16xf32, #tpu.memory_space<vmem>>, vector<1x16xf32>
    %21 = vector.broadcast %20 : vector<1x16xf32> to vector<512x16xf32>
    %22 = arith.addf %19, %21 : vector<512x16xf32>
    %cst_17 = arith.constant 0.000000e+00 : f32
    %23 = vector.broadcast %cst_17 : f32 to vector<512x16xf32>
    %24 = arith.maximumf %22, %23 : vector<512x16xf32>
    %c0_18 = arith.constant 0 : index
    %c0_19 = arith.constant 0 : index
    %25 = vector.load %arg8[%c0_18, %c0_19] : memref<512x16xf32, #tpu.memory_space<vmem>>, vector<512x16xf32>
    tpu.vector_store %arg8[%c0_18, %c0_19], %24 {strides = array<i32>} : memref<512x16xf32, #tpu.memory_space<vmem>>, vector<512x16xf32>,
    return
  }
  func.func @transform_0(%arg0: i32) -> (i32, i32) {
    %c0_i32 = arith.constant 0 : i32
    %c0_i32_0 = arith.constant 0 : i32
    return %arg0, %c0_i32 : i32, i32
  }
  func.func @transform_1(%arg0: i32) -> (i32, i32) {
    %c0_i32 = arith.constant 0 : i32
    %c0_i32_0 = arith.constant 0 : i32
    %c0_i32_1 = arith.constant 0 : i32
    return %c0_i32, %c0_i32_0 : i32, i32
  }
  func.func @transform_2(%arg0: i32) -> (i32, i32) {
    %c0_i32 = arith.constant 0 : i32
    %c0_i32_0 = arith.constant 0 : i32
    %c0_i32_1 = arith.constant 0 : i32
    return %c0_i32, %c0_i32_0 : i32, i32
  }
  func.func @transform_3(%arg0: i32) -> (i32, i32) {
    %c0_i32 = arith.constant 0 : i32
    %c0_i32_0 = arith.constant 0 : i32
    %c0_i32_1 = arith.constant 0 : i32
    return %c0_i32, %c0_i32_0 : i32, i32
  }
  func.func @transform_4(%arg0: i32) -> (i32, i32) {
    %c0_i32 = arith.constant 0 : i32
    %c0_i32_0 = arith.constant 0 : i32
    %c0_i32_1 = arith.constant 0 : i32
    return %c0_i32, %c0_i32_0 : i32, i32
  }
  func.func @transform_5(%arg0: i32) -> (i32, i32) {
    %c0_i32 = arith.constant 0 : i32
    %c0_i32_0 = arith.constant 0 : i32
    %c0_i32_1 = arith.constant 0 : i32
    return %c0_i32, %c0_i32_0 : i32, i32
  }
  func.func @transform_6(%arg0: i32) -> (i32, i32) {
    %c0_i32 = arith.constant 0 : i32
    %c0_i32_0 = arith.constant 0 : i32
    %c0_i32_1 = arith.constant 0 : i32
    return %c0_i32, %c0_i32_0 : i32, i32
  }
  func.func @transform_7(%arg0: i32) -> (i32, i32) {
    %c0_i32 = arith.constant 0 : i32
    %c0_i32_0 = arith.constant 0 : i32
    return %arg0, %c0_i32 : i32, i32
  }
}

</mosaic_0001>

<llo_original>
// kernel: _forward_impl.1
$region0: #{_forward_impl.1}
  #allocation0 [shape = 'u32[]', space=smem, size = 0x4, offset = 0x4, fixed_abs, tag = 'smem constant byte address 0x4 - core index']
  #allocation1 [shape = 'u32[144,128]{1,0:T(1,128)}', space=vmem, size = 0x12000, scoped, tag = 'internal scratch']
  %s0 = inlined_call_operand.vmem [shape: f32[512,32], index: 0, kind: input, shape index: {}]
  %s1 = inlined_call_operand.vmem [shape: bf16[32,128], index: 1, kind: input, shape index: {}]
  %s2 = inlined_call_operand.vmem [shape: f32[1,128], index: 2, kind: input, shape index: {}]
  %s3 = inlined_call_operand.vmem [shape: bf16[128,128], index: 3, kind: input, shape index: {}]
  %s4 = inlined_call_operand.vmem [shape: f32[1,128], index: 4, kind: input, shape index: {}]
  %s5 = inlined_call_operand.vmem [shape: bf16[128,16], index: 5, kind: input, shape index: {}]
  %s6 = inlined_call_operand.vmem [shape: f32[1,16], index: 6, kind: input, shape index: {}]
  %s7 = inlined_call_operand.vmem [shape: f32[512,16], index: 7, kind: output, shape index: {}]
  %s8 = sld [smem:[#allocation0]]
  $region38: #{_forward_impl.1} parent=0
    _
  %s10 = ssub.s32 1, %s8
  %s11 = scalar_select 0, %s10, %s8
  // Predicated region
  $region2: #{_forward_impl.1} parent=0 // pred_check
    _
  $region3: #{_forward_impl.1} parent=0 // pred_check_branch
    %13 = sbr.rel (0) target = $region5
  $region4: #{_forward_impl.1} parent=0 // pred_region
    _
  $region5: #{_forward_impl.1} parent=0 // pred_fallthru
    _
  // Predicated region
  $region6: #{_forward_impl.1} parent=0 // pred_check
    _
  $region7: #{_forward_impl.1} parent=0 // pred_check_branch
    %15 = sbr.rel (0) target = $region9
  $region8: #{_forward_impl.1} parent=0 // pred_region
    _
  $region9: #{_forward_impl.1} parent=0 // pred_fallthru
    _
  // Predicated region
  $region10: #{_forward_impl.1} parent=0 // pred_check
    _
  $region11: #{_forward_impl.1} parent=0 // pred_check_branch
    %17 = sbr.rel (0) target = $region13
  $region12: #{_forward_impl.1} parent=0 // pred_region
    _
  $region13: #{_forward_impl.1} parent=0 // pred_fallthru
    _
  // Predicated region
  $region14: #{_forward_impl.1} parent=0 // pred_check
    _
  $region15: #{_forward_impl.1} parent=0 // pred_check_branch
    %19 = sbr.rel (0) target = $region17
  $region16: #{_forward_impl.1} parent=0 // pred_region
    _
  $region17: #{_forward_impl.1} parent=0 // pred_fallthru
    _
  // Predicated region
  $region18: #{_forward_impl.1} parent=0 // pred_check
    _
  $region19: #{_forward_impl.1} parent=0 // pred_check_branch
    %21 = sbr.rel (0) target = $region21
  $region20: #{_forward_impl.1} parent=0 // pred_region
    _
  $region21: #{_forward_impl.1} parent=0 // pred_fallthru
    _
  // Predicated region
  $region22: #{_forward_impl.1} parent=0 // pred_check
    _
  $region23: #{_forward_impl.1} parent=0 // pred_check_branch
    %23 = sbr.rel (0) target = $region25
  $region24: #{_forward_impl.1} parent=0 // pred_region
    _
  $region25: #{_forward_impl.1} parent=0 // pred_fallthru
    _
  // Predicated region
  $region26: #{_forward_impl.1} parent=0 // pred_check
    _
  $region27: #{_forward_impl.1} parent=0 // pred_check_branch
    %25 = sbr.rel (0) target = $region29
  $region28: #{_forward_impl.1} parent=0 // pred_region
    _
  $region29: #{_forward_impl.1} parent=0 // pred_fallthru
    _
  %v27 = vld [vmem:[%s0] sm:$0xff]
  %v28 = vld [vmem:[%s0 + $0x8] sm:$0xff]
  %v29 = vld [vmem:[%s0 + $0x10] sm:$0xff]
  %v30 = vld [vmem:[%s0 + $0x18] sm:$0xff]
  %v31 = vld [vmem:[%s0 + $0x20] sm:$0xff]
  %v32 = vld [vmem:[%s0 + $0x28] sm:$0xff]
  %v33 = vld [vmem:[%s0 + $0x30] sm:$0xff]
  %v34 = vld [vmem:[%s0 + $0x38] sm:$0xff]
  %v35 = vld [vmem:[%s0 + $0x40] sm:$0xff]
  %v36 = vld [vmem:[%s0 + $0x48] sm:$0xff]
  %v37 = vld [vmem:[%s0 + $0x50] sm:$0xff]
  %v38 = vld [vmem:[%s0 + $0x58] sm:$0xff]
  %v39 = vld [vmem:[%s0 + $0x60] sm:$0xff]
  %v40 = vld [vmem:[%s0 + $0x68] sm:$0xff]
  %v41 = vld [vmem:[%s0 + $0x70] sm:$0xff]
  %v42 = vld [vmem:[%s0 + $0x78] sm:$0xff]
  %v43 = vld [vmem:[%s0 + $0x80] sm:$0xff]
  %v44 = vld [vmem:[%s0 + $0x88] sm:$0xff]
  %v45 = vld [vmem:[%s0 + $0x90] sm:$0xff]
  %v46 = vld [vmem:[%s0 + $0x98] sm:$0xff]
  %v47 = vld [vmem:[%s0 + $0xa0] sm:$0xff]
  %v48 = vld [vmem:[%s0 + $0xa8] sm:$0xff]
  %v49 = vld [vmem:[%s0 + $0xb0] sm:$0xff]
  %v50 = vld [vmem:[%s0 + $0xb8] sm:$0xff]
  %v51 = vld [vmem:[%s0 + $0xc0] sm:$0xff]
  %v52 = vld [vmem:[%s0 + $0xc8] sm:$0xff]
  %v53 = vld [vmem:[%s0 + $0xd0] sm:$0xff]
  %v54 = vld [vmem:[%s0 + $0xd8] sm:$0xff]
  %v55 = vld [vmem:[%s0 + $0xe0] sm:$0xff]
  %v56 = vld [vmem:[%s0 + $0xe8] sm:$0xff]
  %v57 = vld [vmem:[%s0 + $0xf0] sm:$0xff]
  %v58 = vld [vmem:[%s0 + $0xf8] sm:$0xff]
  %v59 = vld [vmem:[%s0 + $0x100] sm:$0xff]
  %v60 = vld [vmem:[%s0 + $0x108] sm:$0xff]
  %v61 = vld [vmem:[%s0 + $0x110] sm:$0xff]
  %v62 = vld [vmem:[%s0 + $0x118] sm:$0xff]
  %v63 = vld [vmem:[%s0 + $0x120] sm:$0xff]
  %v64 = vld [vmem:[%s0 + $0x128] sm:$0xff]
  %v65 = vld [vmem:[%s0 + $0x130] sm:$0xff]
  %v66 = vld [vmem:[%s0 + $0x138] sm:$0xff]
  %v67 = vld [vmem:[%s0 + $0x140] sm:$0xff]
  %v68 = vld [vmem:[%s0 + $0x148] sm:$0xff]
  %v69 = vld [vmem:[%s0 + $0x150] sm:$0xff]
  %v70 = vld [vmem:[%s0 + $0x158] sm:$0xff]
  %v71 = vld [vmem:[%s0 + $0x160] sm:$0xff]
  %v72 = vld [vmem:[%s0 + $0x168] sm:$0xff]
  %v73 = vld [vmem:[%s0 + $0x170] sm:$0xff]
  %v74 = vld [vmem:[%s0 + $0x178] sm:$0xff]
  %v75 = vld [vmem:[%s0 + $0x180] sm:$0xff]
  %v76 = vld [vmem:[%s0 + $0x188] sm:$0xff]
  %v77 = vld [vmem:[%s0 + $0x190] sm:$0xff]
  %v78 = vld [vmem:[%s0 + $0x198] sm:$0xff]
  %v79 = vld [vmem:[%s0 + $0x1a0] sm:$0xff]
  %v80 = vld [vmem:[%s0 + $0x1a8] sm:$0xff]
  %v81 = vld [vmem:[%s0 + $0x1b0] sm:$0xff]
  %v82 = vld [vmem:[%s0 + $0x1b8] sm:$0xff]
  %v83 = vld [vmem:[%s0 + $0x1c0] sm:$0xff]
  %v84 = vld [vmem:[%s0 + $0x1c8] sm:$0xff]
  %v85 = vld [vmem:[%s0 + $0x1d0] sm:$0xff]
  %v86 = vld [vmem:[%s0 + $0x1d8] sm:$0xff]
  %v87 = vld [vmem:[%s0 + $0x1e0] sm:$0xff]
  %v88 = vld [vmem:[%s0 + $0x1e8] sm:$0xff]
  %v89 = vld [vmem:[%s0 + $0x1f0] sm:$0xff]
  %v90 = vld [vmem:[%s0 + $0x1f8] sm:$0xff]
  %v91 = vpack.c.bf16 %v28, %v27
  %v92 = vpack.c.bf16 %v30, %v29
  %v93 = vpack.c.bf16 %v32, %v31
  %v94 = vpack.c.bf16 %v34, %v33
  %v95 = vpack.c.bf16 %v36, %v35
  %v96 = vpack.c.bf16 %v38, %v37
  %v97 = vpack.c.bf16 %v40, %v39
  %v98 = vpack.c.bf16 %v42, %v41
  %v99 = vpack.c.bf16 %v44, %v43
  %v100 = vpack.c.bf16 %v46, %v45
  %v101 = vpack.c.bf16 %v48, %v47
  %v102 = vpack.c.bf16 %v50, %v49
  %v103 = vpack.c.bf16 %v52, %v51
  %v104 = vpack.c.bf16 %v54, %v53
  %v105 = vpack.c.bf16 %v56, %v55
  %v106 = vpack.c.bf16 %v58, %v57
  %v107 = vpack.c.bf16 %v60, %v59
  %v108 = vpack.c.bf16 %v62, %v61
  %v109 = vpack.c.bf16 %v64, %v63
  %v110 = vpack.c.bf16 %v66, %v65
  %v111 = vpack.c.bf16 %v68, %v67
  %v112 = vpack.c.bf16 %v70, %v69
  %v113 = vpack.c.bf16 %v72, %v71
  %v114 = vpack.c.bf16 %v74, %v73
  %v115 = vpack.c.bf16 %v76, %v75
  %v116 = vpack.c.bf16 %v78, %v77
  %v117 = vpack.c.bf16 %v80, %v79
  %v118 = vpack.c.bf16 %v82, %v81
  %v119 = vpack.c.bf16 %v84, %v83
  %v120 = vpack.c.bf16 %v86, %v85
  %v121 = vpack.c.bf16 %v88, %v87
  %v122 = vpack.c.bf16 %v90, %v89
  %v123 = vld [vmem:[%s1] sm:$0xf]
  %v124 = vld [vmem:[%s1 + $0x4] sm:$0xf]
  %v125 = vld [vmem:[%s1 + $0x8] sm:$0xf]
  %v126 = vld [vmem:[%s1 + $0xc] sm:$0xf]
  %v127 = vld [vmem:[%s2] sm:$0x1]
  %v129 = vlaneseq
  %v130 = vshrl.u32 %v129, 7
  %v131 = vsub.s32 0, %v130
  %v132 = vrot.slane %v127, %v131
  %v138 = vunpack.c.l.b16 %v123
  %v139 = vunpack.c.l.b16 %v124
  %v140 = vunpack.c.l.b16 %v125
  %v141 = vunpack.c.l.b16 %v126
  %v142 = vpack.c.b16 %v139, %v138
  %v143 = vpack.c.b16 %v141, %v140
  %vm146 = vcmask 261120
  %v148 = vsel %vm146, %v91, 0
  %v151 = vsel %vm146, %v92, 0
  %v154 = vsel %vm146, %v93, 0
  %v157 = vsel %vm146, %v94, 0
  %v160 = vsel %vm146, %v95, 0
  %v163 = vsel %vm146, %v96, 0
  %v166 = vsel %vm146, %v97, 0
  %v169 = vsel %vm146, %v98, 0
  %v172 = vsel %vm146, %v99, 0
  %v175 = vsel %vm146, %v100, 0
  %v178 = vsel %vm146, %v101, 0
  %v181 = vsel %vm146, %v102, 0
  %v184 = vsel %vm146, %v103, 0
  %v187 = vsel %vm146, %v104, 0
  %v190 = vsel %vm146, %v105, 0
  %v193 = vsel %vm146, %v106, 0
  %v196 = vsel %vm146, %v107, 0
  %v199 = vsel %vm146, %v108, 0
  %v202 = vsel %vm146, %v109, 0
  %v205 = vsel %vm146, %v110, 0
  %v208 = vsel %vm146, %v111, 0
  %v211 = vsel %vm146, %v112, 0
  %v214 = vsel %vm146, %v113, 0
  %v217 = vsel %vm146, %v114, 0
  %v220 = vsel %vm146, %v115, 0
  %v223 = vsel %vm146, %v116, 0
  %v226 = vsel %vm146, %v117, 0
  %v229 = vsel %vm146, %v118, 0
  %v232 = vsel %vm146, %v119, 0
  %v235 = vsel %vm146, %v120, 0
  %v238 = vsel %vm146, %v121, 0
  %v241 = vsel %vm146, %v122, 0
  %243 = vmatprep.subr.bf16.mxu0 0
  %244 = vmatpush1.bf16.msra.mxu0 %v142
  %245 = vmatprep.subr.bf16.mxu0 0
  %246 = vmatpush1.bf16.msra.mxu0 %v143
  %247 = vmatprep.subr.bf16.mxu0 0
  %248 = vmatpush1.bf16.msra.mxu0 0
  %249 = vmatprep.subr.bf16.mxu0 0
  %250 = vmatpush1.bf16.msra.mxu0 0
  %251 = vmatprep.subr.bf16.mxu0 0
  %252 = vmatpush1.bf16.msra.mxu0 0
  %253 = vmatprep.subr.bf16.mxu0 0
  %254 = vmatpush1.bf16.msra.mxu0 0
  %255 = vmatprep.subr.bf16.mxu0 0
  %256 = vmatpush1.bf16.msra.mxu0 0
  %257 = vmatprep.subr.bf16.mxu0 0
  %258 = vmatpush1.bf16.msra.mxu0 0
  %259 = vmatprep.subr.bf16.mxu0 0
  %260 = vmatpush1.bf16.msra.mxu0 0
  %261 = vmatprep.subr.bf16.mxu0 0
  %262 = vmatpush1.bf16.msra.mxu0 0
  %263 = vmatprep.subr.bf16.mxu0 0
  %264 = vmatpush1.bf16.msra.mxu0 0
  %265 = vmatprep.subr.bf16.mxu0 0
  %266 = vmatpush1.bf16.msra.mxu0 0
  %267 = vmatprep.subr.bf16.mxu0 0
  %268 = vmatpush1.bf16.msra.mxu0 0
  %269 = vmatprep.subr.bf16.mxu0 0
  %270 = vmatpush1.bf16.msra.mxu0 0
  %271 = vmatprep.subr.bf16.mxu0 0
  %272 = vmatpush1.bf16.msra.mxu0 0
  %273 = vmatprep.subr.bf16.mxu0 0
  %274 = vmatpush1.bf16.msra.mxu0 0
  %275 = vmatprep.mubr.bf16.mxu0 0
  %276 = vmatmul.mubr.bf16.gmra.mrb[0].mxu0 %v148
  %v277 = vpop.f32.mrb[0].mxu0
  %v278 = vadd.f32 %v132, %v277
  %v279 = vpop.f32.mrb[0].mxu0
  %v280 = vpop.f32.mrb[0].mxu0
  %v281 = vadd.f32 %v132, %v280
  %v282 = vpop.f32.mrb[0].mxu0
  %283 = vmatprep.mubr.bf16.mxu0 0
  %284 = vmatmul.mubr.bf16.gmra.mrb[0].mxu0 %v151
  %v285 = vpop.f32.mrb[0].mxu0
  %v286 = vadd.f32 %v132, %v285
  %v287 = vpop.f32.mrb[0].mxu0
  %v288 = vpop.f32.mrb[0].mxu0
  %v289 = vadd.f32 %v132, %v288
  %v290 = vpop.f32.mrb[0].mxu0
  %291 = vmatprep.mubr.bf16.mxu0 0
  %292 = vmatmul.mubr.bf16.gmra.mrb[0].mxu0 %v154
  %v293 = vpop.f32.mrb[0].mxu0
  %v294 = vadd.f32 %v132, %v293
  %v295 = vpop.f32.mrb[0].mxu0
  %v296 = vpop.f32.mrb[0].mxu0
  %v297 = vadd.f32 %v132, %v296
  %v298 = vpop.f32.mrb[0].mxu0
  %299 = vmatprep.mubr.bf16.mxu0 0
  %300 = vmatmul.mubr.bf16.gmra.mrb[0].mxu0 %v157
  %v301 = vpop.f32.mrb[0].mxu0
  %v302 = vadd.f32 %v132, %v301
  %v303 = vpop.f32.mrb[0].mxu0
  %v304 = vpop.f32.mrb[0].mxu0
  %v305 = vadd.f32 %v132, %v304
  %v306 = vpop.f32.mrb[0].mxu0
  %307 = vmatprep.mubr.bf16.mxu0 0
  %308 = vmatmul.mubr.bf16.gmra.mrb[0].mxu0 %v160
  %v309 = vpop.f32.mrb[0].mxu0
  %v310 = vadd.f32 %v132, %v309
  %v311 = vpop.f32.mrb[0].mxu0
  %v312 = vpop.f32.mrb[0].mxu0
  %v313 = vadd.f32 %v132, %v312
  %v314 = vpop.f32.mrb[0].mxu0
  %315 = vmatprep.mubr.bf16.mxu0 0
  %316 = vmatmul.mubr.bf16.gmra.mrb[0].mxu0 %v163
  %v317 = vpop.f32.mrb[0].mxu0
  %v318 = vadd.f32 %v132, %v317
  %v319 = vpop.f32.mrb[0].mxu0
  %v320 = vpop.f32.mrb[0].mxu0
  %v321 = vadd.f32 %v132, %v320
  %v322 = vpop.f32.mrb[0].mxu0
  %323 = vmatprep.mubr.bf16.mxu0 0
  %324 = vmatmul.mubr.bf16.gmra.mrb[0].mxu0 %v166
  %v325 = vpop.f32.mrb[0].mxu0
  %v326 = vadd.f32 %v132, %v325
  %v327 = vpop.f32.mrb[0].mxu0
  %v328 = vpop.f32.mrb[0].mxu0
  %v329 = vadd.f32 %v132, %v328
  %v330 = vpop.f32.mrb[0].mxu0
  %331 = vmatprep.mubr.bf16.mxu0 0
  %332 = vmatmul.mubr.bf16.gmra.mrb[0].mxu0 %v169
  %v333 = vpop.f32.mrb[0].mxu0
  %v334 = vadd.f32 %v132, %v333
  %v335 = vpop.f32.mrb[0].mxu0
  %v336 = vpop.f32.mrb[0].mxu0
  %v337 = vadd.f32 %v132, %v336
  %v338 = vpop.f32.mrb[0].mxu0
  %339 = vmatprep.mubr.bf16.mxu0 0
  %340 = vmatmul.mubr.bf16.gmra.mrb[0].mxu0 %v172
  %v341 = vpop.f32.mrb[0].mxu0
  %v342 = vadd.f32 %v132, %v341
  %v343 = vpop.f32.mrb[0].mxu0
  %v344 = vpop.f32.mrb[0].mxu0
  %v345 = vadd.f32 %v132, %v344
  %v346 = vpop.f32.mrb[0].mxu0
  %347 = vmatprep.mubr.bf16.mxu0 0
  %348 = vmatmul.mubr.bf16.gmra.mrb[0].mxu0 %v175
  %v349 = vpop.f32.mrb[0].mxu0
  %v350 = vadd.f32 %v132, %v349
  %v351 = vpop.f32.mrb[0].mxu0
  %v352 = vpop.f32.mrb[0].mxu0
  %v353 = vadd.f32 %v132, %v352
  %v354 = vpop.f32.mrb[0].mxu0
  %355 = vmatprep.mubr.bf16.mxu0 0
  %356 = vmatmul.mubr.bf16.gmra.mrb[0].mxu0 %v178
  %v357 = vpop.f32.mrb[0].mxu0
  %v358 = vadd.f32 %v132, %v357
  %v359 = vpop.f32.mrb[0].mxu0
  %v360 = vpop.f32.mrb[0].mxu0
  %v361 = vadd.f32 %v132, %v360
  %v362 = vpop.f32.mrb[0].mxu0
  %363 = vmatprep.mubr.bf16.mxu0 0
  %364 = vmatmul.mubr.bf16.gmra.mrb[0].mxu0 %v181
  %v365 = vpop.f32.mrb[0].mxu0
  %v366 = vadd.f32 %v132, %v365
  %v367 = vpop.f32.mrb[0].mxu0
  %v368 = vpop.f32.mrb[0].mxu0
  %v369 = vadd.f32 %v132, %v368
  %v370 = vpop.f32.mrb[0].mxu0
  %371 = vmatprep.mubr.bf16.mxu0 0
  %372 = vmatmul.mubr.bf16.gmra.mrb[0].mxu0 %v184
  %v373 = vpop.f32.mrb[0].mxu0
  %v374 = vadd.f32 %v132, %v373
  %v375 = vpop.f32.mrb[0].mxu0
  %v376 = vpop.f32.mrb[0].mxu0
  %v377 = vadd.f32 %v132, %v376
  %v378 = vpop.f32.mrb[0].mxu0
  %379 = vmatprep.mubr.bf16.mxu0 0
  %380 = vmatmul.mubr.bf16.gmra.mrb[0].mxu0 %v187
  %v381 = vpop.f32.mrb[0].mxu0
  %v382 = vadd.f32 %v132, %v381
  %v383 = vpop.f32.mrb[0].mxu0
  %v384 = vpop.f32.mrb[0].mxu0
  %v385 = vadd.f32 %v132, %v384
  %v386 = vpop.f32.mrb[0].mxu0
  %387 = vmatprep.mubr.bf16.mxu0 0
  %388 = vmatmul.mubr.bf16.gmra.mrb[0].mxu0 %v190
  %v389 = vpop.f32.mrb[0].mxu0
  %v390 = vadd.f32 %v132, %v389
  %v391 = vpop.f32.mrb[0].mxu0
  %v392 = vpop.f32.mrb[0].mxu0
  %v393 = vadd.f32 %v132, %v392
  %v394 = vpop.f32.mrb[0].mxu0
  %395 = vmatprep.mubr.bf16.mxu0 0
  %396 = vmatmul.mubr.bf16.gmra.mrb[0].mxu0 %v193
  %v397 = vpop.f32.mrb[0].mxu0
  %v398 = vadd.f32 %v132, %v397
  %v399 = vpop.f32.mrb[0].mxu0
  %v400 = vpop.f32.mrb[0].mxu0
  %v401 = vadd.f32 %v132, %v400
  %v402 = vpop.f32.mrb[0].mxu0
  %403 = vmatprep.mubr.bf16.mxu0 0
  %404 = vmatmul.mubr.bf16.gmra.mrb[0].mxu0 %v196
  %v405 = vpop.f32.mrb[0].mxu0
  %v406 = vadd.f32 %v132, %v405
  %v407 = vpop.f32.mrb[0].mxu0
  %v408 = vpop.f32.mrb[0].mxu0
  %v409 = vadd.f32 %v132, %v408
  %v410 = vpop.f32.mrb[0].mxu0
  %411 = vmatprep.mubr.bf16.mxu0 0
  %412 = vmatmul.mubr.bf16.gmra.mrb[0].mxu0 %v199
  %v413 = vpop.f32.mrb[0].mxu0
  %v414 = vadd.f32 %v132, %v413
  %v415 = vpop.f32.mrb[0].mxu0
  %v416 = vpop.f32.mrb[0].mxu0
  %v417 = vadd.f32 %v132, %v416
  %v418 = vpop.f32.mrb[0].mxu0
  %419 = vmatprep.mubr.bf16.mxu0 0
  %420 = vmatmul.mubr.bf16.gmra.mrb[0].mxu0 %v202
  %v421 = vpop.f32.mrb[0].mxu0
  %v422 = vadd.f32 %v132, %v421
  %v423 = vpop.f32.mrb[0].mxu0
  %v424 = vpop.f32.mrb[0].mxu0
  %v425 = vadd.f32 %v132, %v424
  %v426 = vpop.f32.mrb[0].mxu0
  %427 = vmatprep.mubr.bf16.mxu0 0
  %428 = vmatmul.mubr.bf16.gmra.mrb[0].mxu0 %v205
  %v429 = vpop.f32.mrb[0].mxu0
  %v430 = vadd.f32 %v132, %v429
  %v431 = vpop.f32.mrb[0].mxu0
  %v432 = vpop.f32.mrb[0].mxu0
  %v433 = vadd.f32 %v132, %v432
  %v434 = vpop.f32.mrb[0].mxu0
  %435 = vmatprep.mubr.bf16.mxu0 0
  %436 = vmatmul.mubr.bf16.gmra.mrb[0].mxu0 %v208
  %v437 = vpop.f32.mrb[0].mxu0
  %v438 = vadd.f32 %v132, %v437
  %v439 = vpop.f32.mrb[0].mxu0
  %v440 = vpop.f32.mrb[0].mxu0
  %v441 = vadd.f32 %v132, %v440
  %v442 = vpop.f32.mrb[0].mxu0
  %443 = vmatprep.mubr.bf16.mxu0 0
  %444 = vmatmul.mubr.bf16.gmra.mrb[0].mxu0 %v211
  %v445 = vpop.f32.mrb[0].mxu0
  %v446 = vadd.f32 %v132, %v445
  %v447 = vpop.f32.mrb[0].mxu0
  %v448 = vpop.f32.mrb[0].mxu0
  %v449 = vadd.f32 %v132, %v448
  %v450 = vpop.f32.mrb[0].mxu0
  %451 = vmatprep.mubr.bf16.mxu0 0
  %452 = vmatmul.mubr.bf16.gmra.mrb[0].mxu0 %v214
  %v453 = vpop.f32.mrb[0].mxu0
  %v454 = vadd.f32 %v132, %v453
  %v455 = vpop.f32.mrb[0].mxu0
  %v456 = vpop.f32.mrb[0].mxu0
  %v457 = vadd.f32 %v132, %v456
  %v458 = vpop.f32.mrb[0].mxu0
  %459 = vmatprep.mubr.bf16.mxu0 0
  %460 = vmatmul.mubr.bf16.gmra.mrb[0].mxu0 %v217
  %v461 = vpop.f32.mrb[0].mxu0
  %v462 = vadd.f32 %v132, %v461
  %v463 = vpop.f32.mrb[0].mxu0
  %v464 = vpop.f32.mrb[0].mxu0
  %v465 = vadd.f32 %v132, %v464
  %v466 = vpop.f32.mrb[0].mxu0
  %467 = vmatprep.mubr.bf16.mxu0 0
  %468 = vmatmul.mubr.bf16.gmra.mrb[0].mxu0 %v220
  %v469 = vpop.f32.mrb[0].mxu0
  %v470 = vadd.f32 %v132, %v469
  %v471 = vpop.f32.mrb[0].mxu0
  %v472 = vpop.f32.mrb[0].mxu0
  %v473 = vadd.f32 %v132, %v472
  %v474 = vpop.f32.mrb[0].mxu0
  %475 = vmatprep.mubr.bf16.mxu0 0
  %476 = vmatmul.mubr.bf16.gmra.mrb[0].mxu0 %v223
  %v477 = vpop.f32.mrb[0].mxu0
  %v478 = vadd.f32 %v132, %v477
  %v479 = vpop.f32.mrb[0].mxu0
  %v480 = vpop.f32.mrb[0].mxu0
  %v481 = vadd.f32 %v132, %v480
  %v482 = vpop.f32.mrb[0].mxu0
  %483 = vmatprep.mubr.bf16.mxu0 0
  %484 = vmatmul.mubr.bf16.gmra.mrb[0].mxu0 %v226
  %v485 = vpop.f32.mrb[0].mxu0
  %v486 = vadd.f32 %v132, %v485
  %v487 = vpop.f32.mrb[0].mxu0
  %v488 = vpop.f32.mrb[0].mxu0
  %v489 = vadd.f32 %v132, %v488
  %v490 = vpop.f32.mrb[0].mxu0
  %491 = vmatprep.mubr.bf16.mxu0 0
  %492 = vmatmul.mubr.bf16.gmra.mrb[0].mxu0 %v229
  %v493 = vpop.f32.mrb[0].mxu0
  %v494 = vadd.f32 %v132, %v493
  %v495 = vpop.f32.mrb[0].mxu0
  %v496 = vpop.f32.mrb[0].mxu0
  %v497 = vadd.f32 %v132, %v496
  %v498 = vpop.f32.mrb[0].mxu0
  %499 = vmatprep.mubr.bf16.mxu0 0
  %500 = vmatmul.mubr.bf16.gmra.mrb[0].mxu0 %v232
  %v501 = vpop.f32.mrb[0].mxu0
  %v502 = vadd.f32 %v132, %v501
  %v503 = vpop.f32.mrb[0].mxu0
  %v504 = vpop.f32.mrb[0].mxu0
  %v505 = vadd.f32 %v132, %v504
  %v506 = vpop.f32.mrb[0].mxu0
  %507 = vmatprep.mubr.bf16.mxu0 0
  %508 = vmatmul.mubr.bf16.gmra.mrb[0].mxu0 %v235
  %v509 = vpop.f32.mrb[0].mxu0
  %v510 = vadd.f32 %v132, %v509
  %v511 = vpop.f32.mrb[0].mxu0
  %v512 = vpop.f32.mrb[0].mxu0
  %v513 = vadd.f32 %v132, %v512
  %v514 = vpop.f32.mrb[0].mxu0
  %515 = vmatprep.mubr.bf16.mxu0 0
  %516 = vmatmul.mubr.bf16.gmra.mrb[0].mxu0 %v238
  %v517 = vpop.f32.mrb[0].mxu0
  %v518 = vadd.f32 %v132, %v517
  %v519 = vpop.f32.mrb[0].mxu0
  %v520 = vpop.f32.mrb[0].mxu0
  %v521 = vadd.f32 %v132, %v520
  %v522 = vpop.f32.mrb[0].mxu0
  %523 = vmatprep.mubr.bf16.mxu0 0
  %524 = vmatmul.mubr.bf16.gmra.mrb[0].mxu0 %v241
  %v525 = vpop.f32.mrb[0].mxu0
  %v526 = vadd.f32 %v132, %v525
  %v527 = vpop.f32.mrb[0].mxu0
  %v528 = vpop.f32.mrb[0].mxu0
  %v529 = vadd.f32 %v132, %v528
  %v530 = vpop.f32.mrb[0].mxu0
  %531 = vdwg.mxu0
  %v532 = vmax.f32 %v278, 0.0
  %v533 = vmax.f32 %v281, 0.0
  %v534 = vmax.f32 %v286, 0.0
  %v535 = vmax.f32 %v289, 0.0
  %v536 = vmax.f32 %v294, 0.0
  %v537 = vmax.f32 %v297, 0.0
  %v538 = vmax.f32 %v302, 0.0
  %v539 = vmax.f32 %v305, 0.0
  %v540 = vmax.f32 %v310, 0.0
  %v541 = vmax.f32 %v313, 0.0
  %v542 = vmax.f32 %v318, 0.0
  %v543 = vmax.f32 %v321, 0.0
  %v544 = vmax.f32 %v326, 0.0
  %v545 = vmax.f32 %v329, 0.0
  %v546 = vmax.f32 %v334, 0.0
  %v547 = vmax.f32 %v337, 0.0
  %v548 = vmax.f32 %v342, 0.0
  %v549 = vmax.f32 %v345, 0.0
  %v550 = vmax.f32 %v350, 0.0
  %v551 = vmax.f32 %v353, 0.0
  %v552 = vmax.f32 %v358, 0.0
  %v553 = vmax.f32 %v361, 0.0
  %v554 = vmax.f32 %v366, 0.0
  %v555 = vmax.f32 %v369, 0.0
  %v556 = vmax.f32 %v374, 0.0
  %v557 = vmax.f32 %v377, 0.0
  %v558 = vmax.f32 %v382, 0.0
  %v559 = vmax.f32 %v385, 0.0
  %v560 = vmax.f32 %v390, 0.0
  %v561 = vmax.f32 %v393, 0.0
  %v562 = vmax.f32 %v398, 0.0
  %v563 = vmax.f32 %v401, 0.0
  %v564 = vmax.f32 %v406, 0.0
  %v565 = vmax.f32 %v409, 0.0
  %v566 = vmax.f32 %v414, 0.0
  %v567 = vmax.f32 %v417, 0.0
  %v568 = vmax.f32 %v422, 0.0
  %v569 = vmax.f32 %v425, 0.0
  %v570 = vmax.f32 %v430, 0.0
  %v571 = vmax.f32 %v433, 0.0
  %v572 = vmax.f32 %v438, 0.0
  %v573 = vmax.f32 %v441, 0.0
  %v574 = vmax.f32 %v446, 0.0
  %v575 = vmax.f32 %v449, 0.0
  %v576 = vmax.f32 %v454, 0.0
  %v577 = vmax.f32 %v457, 0.0
  %v578 = vmax.f32 %v462, 0.0
  %v579 = vmax.f32 %v465, 0.0
  %v580 = vmax.f32 %v470, 0.0
  %v581 = vmax.f32 %v473, 0.0
  %v582 = vmax.f32 %v478, 0.0
  %v583 = vmax.f32 %v481, 0.0
  %v584 = vmax.f32 %v486, 0.0
  %v585 = vmax.f32 %v489, 0.0
  %v586 = vmax.f32 %v494, 0.0
  %v587 = vmax.f32 %v497, 0.0
  %v588 = vmax.f32 %v502, 0.0
  %v589 = vmax.f32 %v505, 0.0
  %v590 = vmax.f32 %v510, 0.0
  %v591 = vmax.f32 %v513, 0.0
  %v592 = vmax.f32 %v518, 0.0
  %v593 = vmax.f32 %v521, 0.0
  %v594 = vmax.f32 %v526, 0.0
  %v595 = vmax.f32 %v529, 0.0
  %v596 = vpack.c.bf16 %v533, %v532
  %v597 = vpack.c.bf16 %v535, %v534
  %v598 = vpack.c.bf16 %v537, %v536
  %v599 = vpack.c.bf16 %v539, %v538
  %v600 = vpack.c.bf16 %v541, %v540
  %v601 = vpack.c.bf16 %v543, %v542
  %v602 = vpack.c.bf16 %v545, %v544
  %v603 = vpack.c.bf16 %v547, %v546
  %v604 = vpack.c.bf16 %v549, %v548
  %v605 = vpack.c.bf16 %v551, %v550
  %v606 = vpack.c.bf16 %v553, %v552
  %v607 = vpack.c.bf16 %v555, %v554
  %v608 = vpack.c.bf16 %v557, %v556
  %v609 = vpack.c.bf16 %v559, %v558
  %v610 = vpack.c.bf16 %v561, %v560
  %v611 = vpack.c.bf16 %v563, %v562
  %v612 = vpack.c.bf16 %v565, %v564
  %v613 = vpack.c.bf16 %v567, %v566
  %v614 = vpack.c.bf16 %v569, %v568
  %v615 = vpack.c.bf16 %v571, %v570
  %v616 = vpack.c.bf16 %v573, %v572
  %v617 = vpack.c.bf16 %v575, %v574
  %v618 = vpack.c.bf16 %v577, %v576
  %v619 = vpack.c.bf16 %v579, %v578
  %v620 = vpack.c.bf16 %v581, %v580
  %v621 = vpack.c.bf16 %v583, %v582
  %v622 = vpack.c.bf16 %v585, %v584
  %v623 = vpack.c.bf16 %v587, %v586
  %v624 = vpack.c.bf16 %v589, %v588
  %v625 = vpack.c.bf16 %v591, %v590
  %v626 = vpack.c.bf16 %v593, %v592
  %v627 = vpack.c.bf16 %v595, %v594
  %v628 = vld [vmem:[%s3] sm:$0xf]
  %v629 = vld [vmem:[%s3 + $0x4] sm:$0xf]
  %v630 = vld [vmem:[%s3 + $0x8] sm:$0xf]
  %v631 = vld [vmem:[%s3 + $0xc] sm:$0xf]
  %v632 = vld [vmem:[%s3 + $0x10] sm:$0xf]
  %v633 = vld [vmem:[%s3 + $0x14] sm:$0xf]
  %v634 = vld [vmem:[%s3 + $0x18] sm:$0xf]
  %v635 = vld [vmem:[%s3 + $0x1c] sm:$0xf]
  %v636 = vld [vmem:[%s3 + $0x20] sm:$0xf]
  %v637 = vld [vmem:[%s3 + $0x24] sm:$0xf]
  %v638 = vld [vmem:[%s3 + $0x28] sm:$0xf]
  %v639 = vld [vmem:[%s3 + $0x2c] sm:$0xf]
  %v640 = vld [vmem:[%s3 + $0x30] sm:$0xf]
  %v641 = vld [vmem:[%s3 + $0x34] sm:$0xf]
  %v642 = vld [vmem:[%s3 + $0x38] sm:$0xf]
  %v643 = vld [vmem:[%s3 + $0x3c] sm:$0xf]
  %v644 = vld [vmem:[%s4] sm:$0x1]
  %v646 = vlaneseq
  %v647 = vshrl.u32 %v646, 7
  %v648 = vsub.s32 0, %v647
  %v649 = vrot.slane %v644, %v648
  %v667 = vunpack.c.l.b16 %v628
  %v668 = vunpack.c.l.b16 %v629
  %v669 = vunpack.c.l.b16 %v630
  %v670 = vunpack.c.l.b16 %v631
  %v671 = vunpack.c.l.b16 %v632
  %v672 = vunpack.c.l.b16 %v633
  %v673 = vunpack.c.l.b16 %v634
  %v674 = vunpack.c.l.b16 %v635
  %v675 = vunpack.c.l.b16 %v636
  %v676 = vunpack.c.l.b16 %v637
  %v677 = vunpack.c.l.b16 %v638
  %v678 = vunpack.c.l.b16 %v639
  %v679 = vunpack.c.l.b16 %v640
  %v680 = vunpack.c.l.b16 %v641
  %v681 = vunpack.c.l.b16 %v642
  %v682 = vunpack.c.l.b16 %v643
  %v683 = vpack.c.b16 %v668, %v667
  %v684 = vpack.c.b16 %v670, %v669
  %v685 = vpack.c.b16 %v672, %v671
  %v686 = vpack.c.b16 %v674, %v673
  %v687 = vpack.c.b16 %v676, %v675
  %v688 = vpack.c.b16 %v678, %v677
  %v689 = vpack.c.b16 %v680, %v679
  %v690 = vpack.c.b16 %v682, %v681
  %699 = vmatprep.subr.bf16.mxu0 0
  %700 = vmatpush1.bf16.msra.mxu0 %v683
  %701 = vmatprep.subr.bf16.mxu0 0
  %702 = vmatpush1.bf16.msra.mxu0 %v684
  %703 = vmatprep.subr.bf16.mxu0 0
  %704 = vmatpush1.bf16.msra.mxu0 %v685
  %705 = vmatprep.subr.bf16.mxu0 0
  %706 = vmatpush1.bf16.msra.mxu0 %v686
  %707 = vmatprep.subr.bf16.mxu0 0
  %708 = vmatpush1.bf16.msra.mxu0 %v687
  %709 = vmatprep.subr.bf16.mxu0 0
  %710 = vmatpush1.bf16.msra.mxu0 %v688
  %711 = vmatprep.subr.bf16.mxu0 0
  %712 = vmatpush1.bf16.msra.mxu0 %v689
  %713 = vmatprep.subr.bf16.mxu0 0
  %714 = vmatpush1.bf16.msra.mxu0 %v690
  %715 = vmatprep.subr.bf16.mxu0 0
  %716 = vmatpush1.bf16.msra.mxu0 0
  %717 = vmatprep.subr.bf16.mxu0 0
  %718 = vmatpush1.bf16.msra.mxu0 0
  %719 = vmatprep.subr.bf16.mxu0 0
  %720 = vmatpush1.bf16.msra.mxu0 0
  %721 = vmatprep.subr.bf16.mxu0 0
  %722 = vmatpush1.bf16.msra.mxu0 0
  %723 = vmatprep.subr.bf16.mxu0 0
  %724 = vmatpush1.bf16.msra.mxu0 0
  %725 = vmatprep.subr.bf16.mxu0 0
  %726 = vmatpush1.bf16.msra.mxu0 0
  %727 = vmatprep.subr.bf16.mxu0 0
  %728 = vmatpush1.bf16.msra.mxu0 0
  %729 = vmatprep.subr.bf16.mxu0 0
  %730 = vmatpush1.bf16.msra.mxu0 0
  %731 = vmatprep.mubr.bf16.mxu0 0
  %732 = vmatmul.mubr.bf16.gmra.mrb[0].mxu0 %v596
  %v733 = vpop.f32.mrb[0].mxu0
  %v734 = vadd.f32 %v649, %v733
  %v735 = vpop.f32.mrb[0].mxu0
  %v736 = vpop.f32.mrb[0].mxu0
  %v737 = vadd.f32 %v649, %v736
  %v738 = vpop.f32.mrb[0].mxu0
  %739 = vmatprep.mubr.bf16.mxu0 0
  %740 = vmatmul.mubr.bf16.gmra.mrb[0].mxu0 %v597
  %v741 = vpop.f32.mrb[0].mxu0
  %v742 = vadd.f32 %v649, %v741
  %v743 = vpop.f32.mrb[0].mxu0
  %v744 = vpop.f32.mrb[0].mxu0
  %v745 = vadd.f32 %v649, %v744
  %v746 = vpop.f32.mrb[0].mxu0
  %747 = vmatprep.mubr.bf16.mxu0 0
  %748 = vmatmul.mubr.bf16.gmra.mrb[0].mxu0 %v598
  %v749 = vpop.f32.mrb[0].mxu0
  %v750 = vadd.f32 %v649, %v749
  %v751 = vpop.f32.mrb[0].mxu0
  %v752 = vpop.f32.mrb[0].mxu0
  %v753 = vadd.f32 %v649, %v752
  %v754 = vpop.f32.mrb[0].mxu0
  %755 = vmatprep.mubr.bf16.mxu0 0
  %756 = vmatmul.mubr.bf16.gmra.mrb[0].mxu0 %v599
  %v757 = vpop.f32.mrb[0].mxu0
  %v758 = vadd.f32 %v649, %v757
  %v759 = vpop.f32.mrb[0].mxu0
  %v760 = vpop.f32.mrb[0].mxu0
  %v761 = vadd.f32 %v649, %v760
  %v762 = vpop.f32.mrb[0].mxu0
  %763 = vmatprep.mubr.bf16.mxu0 0
  %764 = vmatmul.mubr.bf16.gmra.mrb[0].mxu0 %v600
  %v765 = vpop.f32.mrb[0].mxu0
  %v766 = vadd.f32 %v649, %v765
  %v767 = vpop.f32.mrb[0].mxu0
  %v768 = vpop.f32.mrb[0].mxu0
  %v769 = vadd.f32 %v649, %v768
  %v770 = vpop.f32.mrb[0].mxu0
  %771 = vmatprep.mubr.bf16.mxu0 0
  %772 = vmatmul.mubr.bf16.gmra.mrb[0].mxu0 %v601
  %v773 = vpop.f32.mrb[0].mxu0
  %v774 = vadd.f32 %v649, %v773
  %v775 = vpop.f32.mrb[0].mxu0
  %v776 = vpop.f32.mrb[0].mxu0
  %v777 = vadd.f32 %v649, %v776
  %v778 = vpop.f32.mrb[0].mxu0
  %779 = vmatprep.mubr.bf16.mxu0 0
  %780 = vmatmul.mubr.bf16.gmra.mrb[0].mxu0 %v602
  %v781 = vpop.f32.mrb[0].mxu0
  %v782 = vadd.f32 %v649, %v781
  %v783 = vpop.f32.mrb[0].mxu0
  %v784 = vpop.f32.mrb[0].mxu0
  %v785 = vadd.f32 %v649, %v784
  %v786 = vpop.f32.mrb[0].mxu0
  %787 = vmatprep.mubr.bf16.mxu0 0
  %788 = vmatmul.mubr.bf16.gmra.mrb[0].mxu0 %v603
  %v789 = vpop.f32.mrb[0].mxu0
  %v790 = vadd.f32 %v649, %v789
  %v791 = vpop.f32.mrb[0].mxu0
  %v792 = vpop.f32.mrb[0].mxu0
  %v793 = vadd.f32 %v649, %v792
  %v794 = vpop.f32.mrb[0].mxu0
  %795 = vmatprep.mubr.bf16.mxu0 0
  %796 = vmatmul.mubr.bf16.gmra.mrb[0].mxu0 %v604
  %v797 = vpop.f32.mrb[0].mxu0
  %v798 = vadd.f32 %v649, %v797
  %v799 = vpop.f32.mrb[0].mxu0
  %v800 = vpop.f32.mrb[0].mxu0
  %v801 = vadd.f32 %v649, %v800
  %v802 = vpop.f32.mrb[0].mxu0
  %803 = vmatprep.mubr.bf16.mxu0 0
  %804 = vmatmul.mubr.bf16.gmra.mrb[0].mxu0 %v605
  %v805 = vpop.f32.mrb[0].mxu0
  %v806 = vadd.f32 %v649, %v805
  %v807 = vpop.f32.mrb[0].mxu0
  %v808 = vpop.f32.mrb[0].mxu0
  %v809 = vadd.f32 %v649, %v808
  %v810 = vpop.f32.mrb[0].mxu0
  %811 = vmatprep.mubr.bf16.mxu0 0
  %812 = vmatmul.mubr.bf16.gmra.mrb[0].mxu0 %v606
  %v813 = vpop.f32.mrb[0].mxu0
  %v814 = vadd.f32 %v649, %v813
  %v815 = vpop.f32.mrb[0].mxu0
  %v816 = vpop.f32.mrb[0].mxu0
  %v817 = vadd.f32 %v649, %v816
  %v818 = vpop.f32.mrb[0].mxu0
  %819 = vmatprep.mubr.bf16.mxu0 0
  %820 = vmatmul.mubr.bf16.gmra.mrb[0].mxu0 %v607
  %v821 = vpop.f32.mrb[0].mxu0
  %v822 = vadd.f32 %v649, %v821
  %v823 = vpop.f32.mrb[0].mxu0
  %v824 = vpop.f32.mrb[0].mxu0
  %v825 = vadd.f32 %v649, %v824
  %v826 = vpop.f32.mrb[0].mxu0
  %827 = vmatprep.mubr.bf16.mxu0 0
  %828 = vmatmul.mubr.bf16.gmra.mrb[0].mxu0 %v608
  %v829 = vpop.f32.mrb[0].mxu0
  %v830 = vadd.f32 %v649, %v829
  %v831 = vpop.f32.mrb[0].mxu0
  %v832 = vpop.f32.mrb[0].mxu0
  %v833 = vadd.f32 %v649, %v832
  %v834 = vpop.f32.mrb[0].mxu0
  %835 = vmatprep.mubr.bf16.mxu0 0
  %836 = vmatmul.mubr.bf16.gmra.mrb[0].mxu0 %v609
  %v837 = vpop.f32.mrb[0].mxu0
  %v838 = vadd.f32 %v649, %v837
  %v839 = vpop.f32.mrb[0].mxu0
  %v840 = vpop.f32.mrb[0].mxu0
  %v841 = vadd.f32 %v649, %v840
  %v842 = vpop.f32.mrb[0].mxu0
  %843 = vmatprep.mubr.bf16.mxu0 0
  %844 = vmatmul.mubr.bf16.gmra.mrb[0].mxu0 %v610
  %v845 = vpop.f32.mrb[0].mxu0
  %v846 = vadd.f32 %v649, %v845
  %v847 = vpop.f32.mrb[0].mxu0
  %v848 = vpop.f32.mrb[0].mxu0
  %v849 = vadd.f32 %v649, %v848
  %v850 = vpop.f32.mrb[0].mxu0
  %851 = vmatprep.mubr.bf16.mxu0 0
  %852 = vmatmul.mubr.bf16.gmra.mrb[0].mxu0 %v611
  %v853 = vpop.f32.mrb[0].mxu0
  %v854 = vadd.f32 %v649, %v853
  %v855 = vpop.f32.mrb[0].mxu0
  %v856 = vpop.f32.mrb[0].mxu0
  %v857 = vadd.f32 %v649, %v856
  %v858 = vpop.f32.mrb[0].mxu0
  %859 = vmatprep.mubr.bf16.mxu0 0
  %860 = vmatmul.mubr.bf16.gmra.mrb[0].mxu0 %v612
  %v861 = vpop.f32.mrb[0].mxu0
  %v862 = vadd.f32 %v649, %v861
  %v863 = vpop.f32.mrb[0].mxu0
  %v864 = vpop.f32.mrb[0].mxu0
  %v865 = vadd.f32 %v649, %v864
  %v866 = vpop.f32.mrb[0].mxu0
  %867 = vmatprep.mubr.bf16.mxu0 0
  %868 = vmatmul.mubr.bf16.gmra.mrb[0].mxu0 %v613
  %v869 = vpop.f32.mrb[0].mxu0
  %v870 = vadd.f32 %v649, %v869
  %v871 = vpop.f32.mrb[0].mxu0
  %v872 = vpop.f32.mrb[0].mxu0
  %v873 = vadd.f32 %v649, %v872
  %v874 = vpop.f32.mrb[0].mxu0
  %875 = vmatprep.mubr.bf16.mxu0 0
  %876 = vmatmul.mubr.bf16.gmra.mrb[0].mxu0 %v614
  %v877 = vpop.f32.mrb[0].mxu0
  %v878 = vadd.f32 %v649, %v877
  %v879 = vpop.f32.mrb[0].mxu0
  %v880 = vpop.f32.mrb[0].mxu0
  %v881 = vadd.f32 %v649, %v880
  %v882 = vpop.f32.mrb[0].mxu0
  %883 = vmatprep.mubr.bf16.mxu0 0
  %884 = vmatmul.mubr.bf16.gmra.mrb[0].mxu0 %v615
  %v885 = vpop.f32.mrb[0].mxu0
  %v886 = vadd.f32 %v649, %v885
  %v887 = vpop.f32.mrb[0].mxu0
  %v888 = vpop.f32.mrb[0].mxu0
  %v889 = vadd.f32 %v649, %v888
  %v890 = vpop.f32.mrb[0].mxu0
  %891 = vmatprep.mubr.bf16.mxu0 0
  %892 = vmatmul.mubr.bf16.gmra.mrb[0].mxu0 %v616
  %v893 = vpop.f32.mrb[0].mxu0
  %v894 = vadd.f32 %v649, %v893
  %v895 = vpop.f32.mrb[0].mxu0
  %v896 = vpop.f32.mrb[0].mxu0
  %v897 = vadd.f32 %v649, %v896
  %v898 = vpop.f32.mrb[0].mxu0
  %899 = vmatprep.mubr.bf16.mxu0 0
  %900 = vmatmul.mubr.bf16.gmra.mrb[0].mxu0 %v617
  %v901 = vpop.f32.mrb[0].mxu0
  %v902 = vadd.f32 %v649, %v901
  %v903 = vpop.f32.mrb[0].mxu0
  %v904 = vpop.f32.mrb[0].mxu0
  %v905 = vadd.f32 %v649, %v904
  %v906 = vpop.f32.mrb[0].mxu0
  %907 = vmatprep.mubr.bf16.mxu0 0
  %908 = vmatmul.mubr.bf16.gmra.mrb[0].mxu0 %v618
  %v909 = vpop.f32.mrb[0].mxu0
  %v910 = vadd.f32 %v649, %v909
  %v911 = vpop.f32.mrb[0].mxu0
  %v912 = vpop.f32.mrb[0].mxu0
  %v913 = vadd.f32 %v649, %v912
  %v914 = vpop.f32.mrb[0].mxu0
  %915 = vmatprep.mubr.bf16.mxu0 0
  %916 = vmatmul.mubr.bf16.gmra.mrb[0].mxu0 %v619
  %v917 = vpop.f32.mrb[0].mxu0
  %v918 = vadd.f32 %v649, %v917
  %v919 = vpop.f32.mrb[0].mxu0
  %v920 = vpop.f32.mrb[0].mxu0
  %v921 = vadd.f32 %v649, %v920
  %v922 = vpop.f32.mrb[0].mxu0
  %923 = vmatprep.mubr.bf16.mxu0 0
  %924 = vmatmul.mubr.bf16.gmra.mrb[0].mxu0 %v620
  %v925 = vpop.f32.mrb[0].mxu0
  %v926 = vadd.f32 %v649, %v925
  %v927 = vpop.f32.mrb[0].mxu0
  %v928 = vpop.f32.mrb[0].mxu0
  %v929 = vadd.f32 %v649, %v928
  %v930 = vpop.f32.mrb[0].mxu0
  %931 = vmatprep.mubr.bf16.mxu0 0
  %932 = vmatmul.mubr.bf16.gmra.mrb[0].mxu0 %v621
  %v933 = vpop.f32.mrb[0].mxu0
  %v934 = vadd.f32 %v649, %v933
  %v935 = vpop.f32.mrb[0].mxu0
  %v936 = vpop.f32.mrb[0].mxu0
  %v937 = vadd.f32 %v649, %v936
  %v938 = vpop.f32.mrb[0].mxu0
  %939 = vmatprep.mubr.bf16.mxu0 0
  %940 = vmatmul.mubr.bf16.gmra.mrb[0].mxu0 %v622
  %v941 = vpop.f32.mrb[0].mxu0
  %v942 = vadd.f32 %v649, %v941
  %v943 = vpop.f32.mrb[0].mxu0
  %v944 = vpop.f32.mrb[0].mxu0
  %v945 = vadd.f32 %v649, %v944
  %v946 = vpop.f32.mrb[0].mxu0
  %947 = vmatprep.mubr.bf16.mxu0 0
  %948 = vmatmul.mubr.bf16.gmra.mrb[0].mxu0 %v623
  %v949 = vpop.f32.mrb[0].mxu0
  %v950 = vadd.f32 %v649, %v949
  %v951 = vpop.f32.mrb[0].mxu0
  %v952 = vpop.f32.mrb[0].mxu0
  %v953 = vadd.f32 %v649, %v952
  %v954 = vpop.f32.mrb[0].mxu0
  %955 = vmatprep.mubr.bf16.mxu0 0
  %956 = vmatmul.mubr.bf16.gmra.mrb[0].mxu0 %v624
  %v957 = vpop.f32.mrb[0].mxu0
  %v958 = vadd.f32 %v649, %v957
  %v959 = vpop.f32.mrb[0].mxu0
  %v960 = vpop.f32.mrb[0].mxu0
  %v961 = vadd.f32 %v649, %v960
  %v962 = vpop.f32.mrb[0].mxu0
  %963 = vmatprep.mubr.bf16.mxu0 0
  %964 = vmatmul.mubr.bf16.gmra.mrb[0].mxu0 %v625
  %v965 = vpop.f32.mrb[0].mxu0
  %v966 = vadd.f32 %v649, %v965
  %v967 = vpop.f32.mrb[0].mxu0
  %v968 = vpop.f32.mrb[0].mxu0
  %v969 = vadd.f32 %v649, %v968
  %v970 = vpop.f32.mrb[0].mxu0
  %971 = vmatprep.mubr.bf16.mxu0 0
  %972 = vmatmul.mubr.bf16.gmra.mrb[0].mxu0 %v626
  %v973 = vpop.f32.mrb[0].mxu0
  %v974 = vadd.f32 %v649, %v973
  %v975 = vpop.f32.mrb[0].mxu0
  %v976 = vpop.f32.mrb[0].mxu0
  %v977 = vadd.f32 %v649, %v976
  %v978 = vpop.f32.mrb[0].mxu0
  %979 = vmatprep.mubr.bf16.mxu0 0
  %980 = vmatmul.mubr.bf16.gmra.mrb[0].mxu0 %v627
  %v981 = vpop.f32.mrb[0].mxu0
  %v982 = vadd.f32 %v649, %v981
  %v983 = vpop.f32.mrb[0].mxu0
  %v984 = vpop.f32.mrb[0].mxu0
  %v985 = vadd.f32 %v649, %v984
  %v986 = vpop.f32.mrb[0].mxu0
  %987 = vdwg.mxu0
  %v988 = vmax.f32 %v734, 0.0
  %v989 = vmax.f32 %v737, 0.0
  %v990 = vmax.f32 %v742, 0.0
  %v991 = vmax.f32 %v745, 0.0
  %v992 = vmax.f32 %v750, 0.0
  %v993 = vmax.f32 %v753, 0.0
  %v994 = vmax.f32 %v758, 0.0
  %v995 = vmax.f32 %v761, 0.0
  %v996 = vmax.f32 %v766, 0.0
  %v997 = vmax.f32 %v769, 0.0
  %v998 = vmax.f32 %v774, 0.0
  %v999 = vmax.f32 %v777, 0.0
  %v1000 = vmax.f32 %v782, 0.0
  %v1001 = vmax.f32 %v785, 0.0
  %v1002 = vmax.f32 %v790, 0.0
  %v1003 = vmax.f32 %v793, 0.0
  %v1004 = vmax.f32 %v798, 0.0
  %v1005 = vmax.f32 %v801, 0.0
  %v1006 = vmax.f32 %v806, 0.0
  %v1007 = vmax.f32 %v809, 0.0
  %v1008 = vmax.f32 %v814, 0.0
  %v1009 = vmax.f32 %v817, 0.0
  %v1010 = vmax.f32 %v822, 0.0
  %v1011 = vmax.f32 %v825, 0.0
  %v1012 = vmax.f32 %v830, 0.0
  %v1013 = vmax.f32 %v833, 0.0
  %v1014 = vmax.f32 %v838, 0.0
  %v1015 = vmax.f32 %v841, 0.0
  %v1016 = vmax.f32 %v846, 0.0
  %v1017 = vmax.f32 %v849, 0.0
  %v1018 = vmax.f32 %v854, 0.0
  %v1019 = vmax.f32 %v857, 0.0
  %v1020 = vmax.f32 %v862, 0.0
  %v1021 = vmax.f32 %v865, 0.0
  %v1022 = vmax.f32 %v870, 0.0
  %v1023 = vmax.f32 %v873, 0.0
  %v1024 = vmax.f32 %v878, 0.0
  %v1025 = vmax.f32 %v881, 0.0
  %v1026 = vmax.f32 %v886, 0.0
  %v1027 = vmax.f32 %v889, 0.0
  %v1028 = vmax.f32 %v894, 0.0
  %v1029 = vmax.f32 %v897, 0.0
  %v1030 = vmax.f32 %v902, 0.0
  %v1031 = vmax.f32 %v905, 0.0
  %v1032 = vmax.f32 %v910, 0.0
  %v1033 = vmax.f32 %v913, 0.0
  %v1034 = vmax.f32 %v918, 0.0
  %v1035 = vmax.f32 %v921, 0.0
  %v1036 = vmax.f32 %v926, 0.0
  %v1037 = vmax.f32 %v929, 0.0
  %v1038 = vmax.f32 %v934, 0.0
  %v1039 = vmax.f32 %v937, 0.0
  %v1040 = vmax.f32 %v942, 0.0
  %v1041 = vmax.f32 %v945, 0.0
  %v1042 = vmax.f32 %v950, 0.0
  %v1043 = vmax.f32 %v953, 0.0
  %v1044 = vmax.f32 %v958, 0.0
  %v1045 = vmax.f32 %v961, 0.0
  %v1046 = vmax.f32 %v966, 0.0
  %v1047 = vmax.f32 %v969, 0.0
  %v1048 = vmax.f32 %v974, 0.0
  %v1049 = vmax.f32 %v977, 0.0
  %v1050 = vmax.f32 %v982, 0.0
  %v1051 = vmax.f32 %v985, 0.0
  %v1052 = vpack.c.bf16 %v989, %v988
  %v1053 = vpack.c.bf16 %v991, %v990
  %v1054 = vpack.c.bf16 %v993, %v992
  %v1055 = vpack.c.bf16 %v995, %v994
  %v1056 = vpack.c.bf16 %v997, %v996
  %v1057 = vpack.c.bf16 %v999, %v998
  %v1058 = vpack.c.bf16 %v1001, %v1000
  %v1059 = vpack.c.bf16 %v1003, %v1002
  %v1060 = vpack.c.bf16 %v1005, %v1004
  %v1061 = vpack.c.bf16 %v1007, %v1006
  %v1062 = vpack.c.bf16 %v1009, %v1008
  %v1063 = vpack.c.bf16 %v1011, %v1010
  %v1064 = vpack.c.bf16 %v1013, %v1012
  %v1065 = vpack.c.bf16 %v1015, %v1014
  %v1066 = vpack.c.bf16 %v1017, %v1016
  %v1067 = vpack.c.bf16 %v1019, %v1018
  %v1068 = vpack.c.bf16 %v1021, %v1020
  %v1069 = vpack.c.bf16 %v1023, %v1022
  %v1070 = vpack.c.bf16 %v1025, %v1024
  %v1071 = vpack.c.bf16 %v1027, %v1026
  %v1072 = vpack.c.bf16 %v1029, %v1028
  %v1073 = vpack.c.bf16 %v1031, %v1030
  %v1074 = vpack.c.bf16 %v1033, %v1032
  %v1075 = vpack.c.bf16 %v1035, %v1034
  %v1076 = vpack.c.bf16 %v1037, %v1036
  %v1077 = vpack.c.bf16 %v1039, %v1038
  %v1078 = vpack.c.bf16 %v1041, %v1040
  %v1079 = vpack.c.bf16 %v1043, %v1042
  %v1080 = vpack.c.bf16 %v1045, %v1044
  %v1081 = vpack.c.bf16 %v1047, %v1046
  %v1082 = vpack.c.bf16 %v1049, %v1048
  %v1083 = vpack.c.bf16 %v1051, %v1050
  %v1084 = vld [vmem:[%s5] sm:$0xf]
  %v1085 = vld [vmem:[%s5 + $0x4] sm:$0xf]
  %v1086 = vld [vmem:[%s5 + $0x8] sm:$0xf]
  %v1087 = vld [vmem:[%s5 + $0xc] sm:$0xf]
  %v1088 = vld [vmem:[%s5 + $0x10] sm:$0xf]
  %v1089 = vld [vmem:[%s5 + $0x14] sm:$0xf]
  %v1090 = vld [vmem:[%s5 + $0x18] sm:$0xf]
  %v1091 = vld [vmem:[%s5 + $0x1c] sm:$0xf]
  %v1092 = vld [vmem:[%s5 + $0x20] sm:$0xf]
  %v1093 = vld [vmem:[%s5 + $0x24] sm:$0xf]
  %v1094 = vld [vmem:[%s5 + $0x28] sm:$0xf]
  %v1095 = vld [vmem:[%s5 + $0x2c] sm:$0xf]
  %v1096 = vld [vmem:[%s5 + $0x30] sm:$0xf]
  %v1097 = vld [vmem:[%s5 + $0x34] sm:$0xf]
  %v1098 = vld [vmem:[%s5 + $0x38] sm:$0xf]
  %v1099 = vld [vmem:[%s5 + $0x3c] sm:$0xf]
  %v1100 = vld [vmem:[%s6] sm:$0x1]
  %v1102 = vlaneseq
  %v1103 = vshrl.u32 %v1102, 7
  %v1104 = vsub.s32 0, %v1103
  %v1105 = vrot.slane %v1100, %v1104
  %v1123 = vunpack.c.l.b16 %v1084
  %v1124 = vunpack.c.l.b16 %v1085
  %v1125 = vunpack.c.l.b16 %v1086
  %v1126 = vunpack.c.l.b16 %v1087
  %v1127 = vunpack.c.l.b16 %v1088
  %v1128 = vunpack.c.l.b16 %v1089
  %v1129 = vunpack.c.l.b16 %v1090
  %v1130 = vunpack.c.l.b16 %v1091
  %v1131 = vunpack.c.l.b16 %v1092
  %v1132 = vunpack.c.l.b16 %v1093
  %v1133 = vunpack.c.l.b16 %v1094
  %v1134 = vunpack.c.l.b16 %v1095
  %v1135 = vunpack.c.l.b16 %v1096
  %v1136 = vunpack.c.l.b16 %v1097
  %v1137 = vunpack.c.l.b16 %v1098
  %v1138 = vunpack.c.l.b16 %v1099
  %v1139 = vpack.c.b16 %v1124, %v1123
  %v1140 = vpack.c.b16 %v1126, %v1125
  %v1141 = vpack.c.b16 %v1128, %v1127
  %v1142 = vpack.c.b16 %v1130, %v1129
  %v1143 = vpack.c.b16 %v1132, %v1131
  %v1144 = vpack.c.b16 %v1134, %v1133
  %v1145 = vpack.c.b16 %v1136, %v1135
  %v1146 = vpack.c.b16 %v1138, %v1137
  %1155 = vmatprep.subr.bf16.mxu0 0
  %1156 = vmatpush1.bf16.msra.mxu0 %v1139
  %1157 = vmatprep.subr.bf16.mxu0 0
  %1158 = vmatpush1.bf16.msra.mxu0 %v1140
  %1159 = vmatprep.subr.bf16.mxu0 0
  %1160 = vmatpush1.bf16.msra.mxu0 %v1141
  %1161 = vmatprep.subr.bf16.mxu0 0
  %1162 = vmatpush1.bf16.msra.mxu0 %v1142
  %1163 = vmatprep.subr.bf16.mxu0 0
  %1164 = vmatpush1.bf16.msra.mxu0 %v1143
  %1165 = vmatprep.subr.bf16.mxu0 0
  %1166 = vmatpush1.bf16.msra.mxu0 %v1144
  %1167 = vmatprep.subr.bf16.mxu0 0
  %1168 = vmatpush1.bf16.msra.mxu0 %v1145
  %1169 = vmatprep.subr.bf16.mxu0 0
  %1170 = vmatpush1.bf16.msra.mxu0 %v1146
  %1171 = vmatprep.subr.bf16.mxu0 0
  %1172 = vmatpush1.bf16.msra.mxu0 0
  %1173 = vmatprep.subr.bf16.mxu0 0
  %1174 = vmatpush1.bf16.msra.mxu0 0
  %1175 = vmatprep.subr.bf16.mxu0 0
  %1176 = vmatpush1.bf16.msra.mxu0 0
  %1177 = vmatprep.subr.bf16.mxu0 0
  %1178 = vmatpush1.bf16.msra.mxu0 0
  %1179 = vmatprep.subr.bf16.mxu0 0
  %1180 = vmatpush1.bf16.msra.mxu0 0
  %1181 = vmatprep.subr.bf16.mxu0 0
  %1182 = vmatpush1.bf16.msra.mxu0 0
  %1183 = vmatprep.subr.bf16.mxu0 0
  %1184 = vmatpush1.bf16.msra.mxu0 0
  %1185 = vmatprep.subr.bf16.mxu0 0
  %1186 = vmatpush1.bf16.msra.mxu0 0
  %1187 = vmatprep.mubr.bf16.mxu0 0
  %1188 = vmatmul.mubr.bf16.gmra.mrb[0].mxu0 %v1052
  %v1189 = vpop.f32.mrb[0].mxu0
  %v1190 = vadd.f32 %v1105, %v1189
  %v1191 = vpop.f32.mrb[0].mxu0
  %v1192 = vpop.f32.mrb[0].mxu0
  %v1193 = vadd.f32 %v1105, %v1192
  %v1194 = vpop.f32.mrb[0].mxu0
  %1195 = vmatprep.mubr.bf16.mxu0 0
  %1196 = vmatmul.mubr.bf16.gmra.mrb[0].mxu0 %v1053
  %v1197 = vpop.f32.mrb[0].mxu0
  %v1198 = vadd.f32 %v1105, %v1197
  %v1199 = vpop.f32.mrb[0].mxu0
  %v1200 = vpop.f32.mrb[0].mxu0
  %v1201 = vadd.f32 %v1105, %v1200
  %v1202 = vpop.f32.mrb[0].mxu0
  %1203 = vmatprep.mubr.bf16.mxu0 0
  %1204 = vmatmul.mubr.bf16.gmra.mrb[0].mxu0 %v1054
  %v1205 = vpop.f32.mrb[0].mxu0
  %v1206 = vadd.f32 %v1105, %v1205
  %v1207 = vpop.f32.mrb[0].mxu0
  %v1208 = vpop.f32.mrb[0].mxu0
  %v1209 = vadd.f32 %v1105, %v1208
  %v1210 = vpop.f32.mrb[0].mxu0
  %1211 = vmatprep.mubr.bf16.mxu0 0
  %1212 = vmatmul.mubr.bf16.gmra.mrb[0].mxu0 %v1055
  %v1213 = vpop.f32.mrb[0].mxu0
  %v1214 = vadd.f32 %v1105, %v1213
  %v1215 = vpop.f32.mrb[0].mxu0
  %v1216 = vpop.f32.mrb[0].mxu0
  %v1217 = vadd.f32 %v1105, %v1216
  %v1218 = vpop.f32.mrb[0].mxu0
  %1219 = vmatprep.mubr.bf16.mxu0 0
  %1220 = vmatmul.mubr.bf16.gmra.mrb[0].mxu0 %v1056
  %v1221 = vpop.f32.mrb[0].mxu0
  %v1222 = vadd.f32 %v1105, %v1221
  %v1223 = vpop.f32.mrb[0].mxu0
  %v1224 = vpop.f32.mrb[0].mxu0
  %v1225 = vadd.f32 %v1105, %v1224
  %v1226 = vpop.f32.mrb[0].mxu0
  %1227 = vmatprep.mubr.bf16.mxu0 0
  %1228 = vmatmul.mubr.bf16.gmra.mrb[0].mxu0 %v1057
  %v1229 = vpop.f32.mrb[0].mxu0
  %v1230 = vadd.f32 %v1105, %v1229
  %v1231 = vpop.f32.mrb[0].mxu0
  %v1232 = vpop.f32.mrb[0].mxu0
  %v1233 = vadd.f32 %v1105, %v1232
  %v1234 = vpop.f32.mrb[0].mxu0
  %1235 = vmatprep.mubr.bf16.mxu0 0
  %1236 = vmatmul.mubr.bf16.gmra.mrb[0].mxu0 %v1058
  %v1237 = vpop.f32.mrb[0].mxu0
  %v1238 = vadd.f32 %v1105, %v1237
  %v1239 = vpop.f32.mrb[0].mxu0
  %v1240 = vpop.f32.mrb[0].mxu0
  %v1241 = vadd.f32 %v1105, %v1240
  %v1242 = vpop.f32.mrb[0].mxu0
  %1243 = vmatprep.mubr.bf16.mxu0 0
  %1244 = vmatmul.mubr.bf16.gmra.mrb[0].mxu0 %v1059
  %v1245 = vpop.f32.mrb[0].mxu0
  %v1246 = vadd.f32 %v1105, %v1245
  %v1247 = vpop.f32.mrb[0].mxu0
  %v1248 = vpop.f32.mrb[0].mxu0
  %v1249 = vadd.f32 %v1105, %v1248
  %v1250 = vpop.f32.mrb[0].mxu0
  %1251 = vmatprep.mubr.bf16.mxu0 0
  %1252 = vmatmul.mubr.bf16.gmra.mrb[0].mxu0 %v1060
  %v1253 = vpop.f32.mrb[0].mxu0
  %v1254 = vadd.f32 %v1105, %v1253
  %v1255 = vpop.f32.mrb[0].mxu0
  %v1256 = vpop.f32.mrb[0].mxu0
  %v1257 = vadd.f32 %v1105, %v1256
  %v1258 = vpop.f32.mrb[0].mxu0
  %1259 = vmatprep.mubr.bf16.mxu0 0
  %1260 = vmatmul.mubr.bf16.gmra.mrb[0].mxu0 %v1061
  %v1261 = vpop.f32.mrb[0].mxu0
  %v1262 = vadd.f32 %v1105, %v1261
  %v1263 = vpop.f32.mrb[0].mxu0
  %v1264 = vpop.f32.mrb[0].mxu0
  %v1265 = vadd.f32 %v1105, %v1264
  %v1266 = vpop.f32.mrb[0].mxu0
  %1267 = vmatprep.mubr.bf16.mxu0 0
  %1268 = vmatmul.mubr.bf16.gmra.mrb[0].mxu0 %v1062
  %v1269 = vpop.f32.mrb[0].mxu0
  %v1270 = vadd.f32 %v1105, %v1269
  %v1271 = vpop.f32.mrb[0].mxu0
  %v1272 = vpop.f32.mrb[0].mxu0
  %v1273 = vadd.f32 %v1105, %v1272
  %v1274 = vpop.f32.mrb[0].mxu0
  %1275 = vmatprep.mubr.bf16.mxu0 0
  %1276 = vmatmul.mubr.bf16.gmra.mrb[0].mxu0 %v1063
  %v1277 = vpop.f32.mrb[0].mxu0
  %v1278 = vadd.f32 %v1105, %v1277
  %v1279 = vpop.f32.mrb[0].mxu0
  %v1280 = vpop.f32.mrb[0].mxu0
  %v1281 = vadd.f32 %v1105, %v1280
  %v1282 = vpop.f32.mrb[0].mxu0
  %1283 = vmatprep.mubr.bf16.mxu0 0
  %1284 = vmatmul.mubr.bf16.gmra.mrb[0].mxu0 %v1064
  %v1285 = vpop.f32.mrb[0].mxu0
  %v1286 = vadd.f32 %v1105, %v1285
  %v1287 = vpop.f32.mrb[0].mxu0
  %v1288 = vpop.f32.mrb[0].mxu0
  %v1289 = vadd.f32 %v1105, %v1288
  %v1290 = vpop.f32.mrb[0].mxu0
  %1291 = vmatprep.mubr.bf16.mxu0 0
  %1292 = vmatmul.mubr.bf16.gmra.mrb[0].mxu0 %v1065
  %v1293 = vpop.f32.mrb[0].mxu0
  %v1294 = vadd.f32 %v1105, %v1293
  %v1295 = vpop.f32.mrb[0].mxu0
  %v1296 = vpop.f32.mrb[0].mxu0
  %v1297 = vadd.f32 %v1105, %v1296
  %v1298 = vpop.f32.mrb[0].mxu0
  %1299 = vmatprep.mubr.bf16.mxu0 0
  %1300 = vmatmul.mubr.bf16.gmra.mrb[0].mxu0 %v1066
  %v1301 = vpop.f32.mrb[0].mxu0
  %v1302 = vadd.f32 %v1105, %v1301
  %v1303 = vpop.f32.mrb[0].mxu0
  %v1304 = vpop.f32.mrb[0].mxu0
  %v1305 = vadd.f32 %v1105, %v1304
  %v1306 = vpop.f32.mrb[0].mxu0
  %1307 = vmatprep.mubr.bf16.mxu0 0
  %1308 = vmatmul.mubr.bf16.gmra.mrb[0].mxu0 %v1067
  %v1309 = vpop.f32.mrb[0].mxu0
  %v1310 = vadd.f32 %v1105, %v1309
  %v1311 = vpop.f32.mrb[0].mxu0
  %v1312 = vpop.f32.mrb[0].mxu0
  %v1313 = vadd.f32 %v1105, %v1312
  %v1314 = vpop.f32.mrb[0].mxu0
  %1315 = vmatprep.mubr.bf16.mxu0 0
  %1316 = vmatmul.mubr.bf16.gmra.mrb[0].mxu0 %v1068
  %v1317 = vpop.f32.mrb[0].mxu0
  %v1318 = vadd.f32 %v1105, %v1317
  %v1319 = vpop.f32.mrb[0].mxu0
  %v1320 = vpop.f32.mrb[0].mxu0
  %v1321 = vadd.f32 %v1105, %v1320
  %v1322 = vpop.f32.mrb[0].mxu0
  %1323 = vmatprep.mubr.bf16.mxu0 0
  %1324 = vmatmul.mubr.bf16.gmra.mrb[0].mxu0 %v1069
  %v1325 = vpop.f32.mrb[0].mxu0
  %v1326 = vadd.f32 %v1105, %v1325
  %v1327 = vpop.f32.mrb[0].mxu0
  %v1328 = vpop.f32.mrb[0].mxu0
  %v1329 = vadd.f32 %v1105, %v1328
  %v1330 = vpop.f32.mrb[0].mxu0
  %1331 = vmatprep.mubr.bf16.mxu0 0
  %1332 = vmatmul.mubr.bf16.gmra.mrb[0].mxu0 %v1070
  %v1333 = vpop.f32.mrb[0].mxu0
  %v1334 = vadd.f32 %v1105, %v1333
  %v1335 = vpop.f32.mrb[0].mxu0
  %v1336 = vpop.f32.mrb[0].mxu0
  %v1337 = vadd.f32 %v1105, %v1336
  %v1338 = vpop.f32.mrb[0].mxu0
  %1339 = vmatprep.mubr.bf16.mxu0 0
  %1340 = vmatmul.mubr.bf16.gmra.mrb[0].mxu0 %v1071
  %v1341 = vpop.f32.mrb[0].mxu0
  %v1342 = vadd.f32 %v1105, %v1341
  %v1343 = vpop.f32.mrb[0].mxu0
  %v1344 = vpop.f32.mrb[0].mxu0
  %v1345 = vadd.f32 %v1105, %v1344
  %v1346 = vpop.f32.mrb[0].mxu0
  %1347 = vmatprep.mubr.bf16.mxu0 0
  %1348 = vmatmul.mubr.bf16.gmra.mrb[0].mxu0 %v1072
  %v1349 = vpop.f32.mrb[0].mxu0
  %v1350 = vadd.f32 %v1105, %v1349
  %v1351 = vpop.f32.mrb[0].mxu0
  %v1352 = vpop.f32.mrb[0].mxu0
  %v1353 = vadd.f32 %v1105, %v1352
  %v1354 = vpop.f32.mrb[0].mxu0
  %1355 = vmatprep.mubr.bf16.mxu0 0
  %1356 = vmatmul.mubr.bf16.gmra.mrb[0].mxu0 %v1073
  %v1357 = vpop.f32.mrb[0].mxu0
  %v1358 = vadd.f32 %v1105, %v1357
  %v1359 = vpop.f32.mrb[0].mxu0
  %v1360 = vpop.f32.mrb[0].mxu0
  %v1361 = vadd.f32 %v1105, %v1360
  %v1362 = vpop.f32.mrb[0].mxu0
  %1363 = vmatprep.mubr.bf16.mxu0 0
  %1364 = vmatmul.mubr.bf16.gmra.mrb[0].mxu0 %v1074
  %v1365 = vpop.f32.mrb[0].mxu0
  %v1366 = vadd.f32 %v1105, %v1365
  %v1367 = vpop.f32.mrb[0].mxu0
  %v1368 = vpop.f32.mrb[0].mxu0
  %v1369 = vadd.f32 %v1105, %v1368
  %v1370 = vpop.f32.mrb[0].mxu0
  %1371 = vmatprep.mubr.bf16.mxu0 0
  %1372 = vmatmul.mubr.bf16.gmra.mrb[0].mxu0 %v1075
  %v1373 = vpop.f32.mrb[0].mxu0
  %v1374 = vadd.f32 %v1105, %v1373
  %v1375 = vpop.f32.mrb[0].mxu0
  %v1376 = vpop.f32.mrb[0].mxu0
  %v1377 = vadd.f32 %v1105, %v1376
  %v1378 = vpop.f32.mrb[0].mxu0
  %1379 = vmatprep.mubr.bf16.mxu0 0
  %1380 = vmatmul.mubr.bf16.gmra.mrb[0].mxu0 %v1076
  %v1381 = vpop.f32.mrb[0].mxu0
  %v1382 = vadd.f32 %v1105, %v1381
  %v1383 = vpop.f32.mrb[0].mxu0
  %v1384 = vpop.f32.mrb[0].mxu0
  %v1385 = vadd.f32 %v1105, %v1384
  %v1386 = vpop.f32.mrb[0].mxu0
  %1387 = vmatprep.mubr.bf16.mxu0 0
  %1388 = vmatmul.mubr.bf16.gmra.mrb[0].mxu0 %v1077
  %v1389 = vpop.f32.mrb[0].mxu0
  %v1390 = vadd.f32 %v1105, %v1389
  %v1391 = vpop.f32.mrb[0].mxu0
  %v1392 = vpop.f32.mrb[0].mxu0
  %v1393 = vadd.f32 %v1105, %v1392
  %v1394 = vpop.f32.mrb[0].mxu0
  %1395 = vmatprep.mubr.bf16.mxu0 0
  %1396 = vmatmul.mubr.bf16.gmra.mrb[0].mxu0 %v1078
  %v1397 = vpop.f32.mrb[0].mxu0
  %v1398 = vadd.f32 %v1105, %v1397
  %v1399 = vpop.f32.mrb[0].mxu0
  %v1400 = vpop.f32.mrb[0].mxu0
  %v1401 = vadd.f32 %v1105, %v1400
  %v1402 = vpop.f32.mrb[0].mxu0
  %1403 = vmatprep.mubr.bf16.mxu0 0
  %1404 = vmatmul.mubr.bf16.gmra.mrb[0].mxu0 %v1079
  %v1405 = vpop.f32.mrb[0].mxu0
  %v1406 = vadd.f32 %v1105, %v1405
  %v1407 = vpop.f32.mrb[0].mxu0
  %v1408 = vpop.f32.mrb[0].mxu0
  %v1409 = vadd.f32 %v1105, %v1408
  %v1410 = vpop.f32.mrb[0].mxu0
  %1411 = vmatprep.mubr.bf16.mxu0 0
  %1412 = vmatmul.mubr.bf16.gmra.mrb[0].mxu0 %v1080
  %v1413 = vpop.f32.mrb[0].mxu0
  %v1414 = vadd.f32 %v1105, %v1413
  %v1415 = vpop.f32.mrb[0].mxu0
  %v1416 = vpop.f32.mrb[0].mxu0
  %v1417 = vadd.f32 %v1105, %v1416
  %v1418 = vpop.f32.mrb[0].mxu0
  %1419 = vmatprep.mubr.bf16.mxu0 0
  %1420 = vmatmul.mubr.bf16.gmra.mrb[0].mxu0 %v1081
  %v1421 = vpop.f32.mrb[0].mxu0
  %v1422 = vadd.f32 %v1105, %v1421
  %v1423 = vpop.f32.mrb[0].mxu0
  %v1424 = vpop.f32.mrb[0].mxu0
  %v1425 = vadd.f32 %v1105, %v1424
  %v1426 = vpop.f32.mrb[0].mxu0
  %1427 = vmatprep.mubr.bf16.mxu0 0
  %1428 = vmatmul.mubr.bf16.gmra.mrb[0].mxu0 %v1082
  %v1429 = vpop.f32.mrb[0].mxu0
  %v1430 = vadd.f32 %v1105, %v1429
  %v1431 = vpop.f32.mrb[0].mxu0
  %v1432 = vpop.f32.mrb[0].mxu0
  %v1433 = vadd.f32 %v1105, %v1432
  %v1434 = vpop.f32.mrb[0].mxu0
  %1435 = vmatprep.mubr.bf16.mxu0 0
  %1436 = vmatmul.mubr.bf16.gmra.mrb[0].mxu0 %v1083
  %v1437 = vpop.f32.mrb[0].mxu0
  %v1438 = vadd.f32 %v1105, %v1437
  %v1439 = vpop.f32.mrb[0].mxu0
  %v1440 = vpop.f32.mrb[0].mxu0
  %v1441 = vadd.f32 %v1105, %v1440
  %v1442 = vpop.f32.mrb[0].mxu0
  %1443 = vdwg.mxu0
  %v1444 = vmax.f32 %v1190, 0.0
  %v1445 = vmax.f32 %v1193, 0.0
  %v1446 = vmax.f32 %v1198, 0.0
  %v1447 = vmax.f32 %v1201, 0.0
  %v1448 = vmax.f32 %v1206, 0.0
  %v1449 = vmax.f32 %v1209, 0.0
  %v1450 = vmax.f32 %v1214, 0.0
  %v1451 = vmax.f32 %v1217, 0.0
  %v1452 = vmax.f32 %v1222, 0.0
  %v1453 = vmax.f32 %v1225, 0.0
  %v1454 = vmax.f32 %v1230, 0.0
  %v1455 = vmax.f32 %v1233, 0.0
  %v1456 = vmax.f32 %v1238, 0.0
  %v1457 = vmax.f32 %v1241, 0.0
  %v1458 = vmax.f32 %v1246, 0.0
  %v1459 = vmax.f32 %v1249, 0.0
  %v1460 = vmax.f32 %v1254, 0.0
  %v1461 = vmax.f32 %v1257, 0.0
  %v1462 = vmax.f32 %v1262, 0.0
  %v1463 = vmax.f32 %v1265, 0.0
  %v1464 = vmax.f32 %v1270, 0.0
  %v1465 = vmax.f32 %v1273, 0.0
  %v1466 = vmax.f32 %v1278, 0.0
  %v1467 = vmax.f32 %v1281, 0.0
  %v1468 = vmax.f32 %v1286, 0.0
  %v1469 = vmax.f32 %v1289, 0.0
  %v1470 = vmax.f32 %v1294, 0.0
  %v1471 = vmax.f32 %v1297, 0.0
  %v1472 = vmax.f32 %v1302, 0.0
  %v1473 = vmax.f32 %v1305, 0.0
  %v1474 = vmax.f32 %v1310, 0.0
  %v1475 = vmax.f32 %v1313, 0.0
  %v1476 = vmax.f32 %v1318, 0.0
  %v1477 = vmax.f32 %v1321, 0.0
  %v1478 = vmax.f32 %v1326, 0.0
  %v1479 = vmax.f32 %v1329, 0.0
  %v1480 = vmax.f32 %v1334, 0.0
  %v1481 = vmax.f32 %v1337, 0.0
  %v1482 = vmax.f32 %v1342, 0.0
  %v1483 = vmax.f32 %v1345, 0.0
  %v1484 = vmax.f32 %v1350, 0.0
  %v1485 = vmax.f32 %v1353, 0.0
  %v1486 = vmax.f32 %v1358, 0.0
  %v1487 = vmax.f32 %v1361, 0.0
  %v1488 = vmax.f32 %v1366, 0.0
  %v1489 = vmax.f32 %v1369, 0.0
  %v1490 = vmax.f32 %v1374, 0.0
  %v1491 = vmax.f32 %v1377, 0.0
  %v1492 = vmax.f32 %v1382, 0.0
  %v1493 = vmax.f32 %v1385, 0.0
  %v1494 = vmax.f32 %v1390, 0.0
  %v1495 = vmax.f32 %v1393, 0.0
  %v1496 = vmax.f32 %v1398, 0.0
  %v1497 = vmax.f32 %v1401, 0.0
  %v1498 = vmax.f32 %v1406, 0.0
  %v1499 = vmax.f32 %v1409, 0.0
  %v1500 = vmax.f32 %v1414, 0.0
  %v1501 = vmax.f32 %v1417, 0.0
  %v1502 = vmax.f32 %v1422, 0.0
  %v1503 = vmax.f32 %v1425, 0.0
  %v1504 = vmax.f32 %v1430, 0.0
  %v1505 = vmax.f32 %v1433, 0.0
  %v1506 = vmax.f32 %v1438, 0.0
  %v1507 = vmax.f32 %v1441, 0.0
  %vm1508 = vcmask 130048
  %1509 = vst.msk [vmem:[%s7] sm:$0xff] %vm1508, %v1444
  %1510 = vst.msk [vmem:[%s7 + $0x8] sm:$0xff] %vm1508, %v1445
  %1511 = vst.msk [vmem:[%s7 + $0x10] sm:$0xff] %vm1508, %v1446
  %1512 = vst.msk [vmem:[%s7 + $0x18] sm:$0xff] %vm1508, %v1447
  %1513 = vst.msk [vmem:[%s7 + $0x20] sm:$0xff] %vm1508, %v1448
  %1514 = vst.msk [vmem:[%s7 + $0x28] sm:$0xff] %vm1508, %v1449
  %1515 = vst.msk [vmem:[%s7 + $0x30] sm:$0xff] %vm1508, %v1450
  %1516 = vst.msk [vmem:[%s7 + $0x38] sm:$0xff] %vm1508, %v1451
  %1517 = vst.msk [vmem:[%s7 + $0x40] sm:$0xff] %vm1508, %v1452
  %1518 = vst.msk [vmem:[%s7 + $0x48] sm:$0xff] %vm1508, %v1453
  %1519 = vst.msk [vmem:[%s7 + $0x50] sm:$0xff] %vm1508, %v1454
  %1520 = vst.msk [vmem:[%s7 + $0x58] sm:$0xff] %vm1508, %v1455
  %1521 = vst.msk [vmem:[%s7 + $0x60] sm:$0xff] %vm1508, %v1456
  %1522 = vst.msk [vmem:[%s7 + $0x68] sm:$0xff] %vm1508, %v1457
  %1523 = vst.msk [vmem:[%s7 + $0x70] sm:$0xff] %vm1508, %v1458
  %1524 = vst.msk [vmem:[%s7 + $0x78] sm:$0xff] %vm1508, %v1459
  %1525 = vst.msk [vmem:[%s7 + $0x80] sm:$0xff] %vm1508, %v1460
  %1526 = vst.msk [vmem:[%s7 + $0x88] sm:$0xff] %vm1508, %v1461
  %1527 = vst.msk [vmem:[%s7 + $0x90] sm:$0xff] %vm1508, %v1462
  %1528 = vst.msk [vmem:[%s7 + $0x98] sm:$0xff] %vm1508, %v1463
  %1529 = vst.msk [vmem:[%s7 + $0xa0] sm:$0xff] %vm1508, %v1464
  %1530 = vst.msk [vmem:[%s7 + $0xa8] sm:$0xff] %vm1508, %v1465
  %1531 = vst.msk [vmem:[%s7 + $0xb0] sm:$0xff] %vm1508, %v1466
  %1532 = vst.msk [vmem:[%s7 + $0xb8] sm:$0xff] %vm1508, %v1467
  %1533 = vst.msk [vmem:[%s7 + $0xc0] sm:$0xff] %vm1508, %v1468
  %1534 = vst.msk [vmem:[%s7 + $0xc8] sm:$0xff] %vm1508, %v1469
  %1535 = vst.msk [vmem:[%s7 + $0xd0] sm:$0xff] %vm1508, %v1470
  %1536 = vst.msk [vmem:[%s7 + $0xd8] sm:$0xff] %vm1508, %v1471
  %1537 = vst.msk [vmem:[%s7 + $0xe0] sm:$0xff] %vm1508, %v1472
  %1538 = vst.msk [vmem:[%s7 + $0xe8] sm:$0xff] %vm1508, %v1473
  %1539 = vst.msk [vmem:[%s7 + $0xf0] sm:$0xff] %vm1508, %v1474
  %1540 = vst.msk [vmem:[%s7 + $0xf8] sm:$0xff] %vm1508, %v1475
  %1541 = vst.msk [vmem:[%s7 + $0x100] sm:$0xff] %vm1508, %v1476
  %1542 = vst.msk [vmem:[%s7 + $0x108] sm:$0xff] %vm1508, %v1477
  %1543 = vst.msk [vmem:[%s7 + $0x110] sm:$0xff] %vm1508, %v1478
  %1544 = vst.msk [vmem:[%s7 + $0x118] sm:$0xff] %vm1508, %v1479
  %1545 = vst.msk [vmem:[%s7 + $0x120] sm:$0xff] %vm1508, %v1480
  %1546 = vst.msk [vmem:[%s7 + $0x128] sm:$0xff] %vm1508, %v1481
  %1547 = vst.msk [vmem:[%s7 + $0x130] sm:$0xff] %vm1508, %v1482
  %1548 = vst.msk [vmem:[%s7 + $0x138] sm:$0xff] %vm1508, %v1483
  %1549 = vst.msk [vmem:[%s7 + $0x140] sm:$0xff] %vm1508, %v1484
  %1550 = vst.msk [vmem:[%s7 + $0x148] sm:$0xff] %vm1508, %v1485
  %1551 = vst.msk [vmem:[%s7 + $0x150] sm:$0xff] %vm1508, %v1486
  %1552 = vst.msk [vmem:[%s7 + $0x158] sm:$0xff] %vm1508, %v1487
  %1553 = vst.msk [vmem:[%s7 + $0x160] sm:$0xff] %vm1508, %v1488
  %1554 = vst.msk [vmem:[%s7 + $0x168] sm:$0xff] %vm1508, %v1489
  %1555 = vst.msk [vmem:[%s7 + $0x170] sm:$0xff] %vm1508, %v1490
  %1556 = vst.msk [vmem:[%s7 + $0x178] sm:$0xff] %vm1508, %v1491
  %1557 = vst.msk [vmem:[%s7 + $0x180] sm:$0xff] %vm1508, %v1492
  %1558 = vst.msk [vmem:[%s7 + $0x188] sm:$0xff] %vm1508, %v1493
  %1559 = vst.msk [vmem:[%s7 + $0x190] sm:$0xff] %vm1508, %v1494
  %1560 = vst.msk [vmem:[%s7 + $0x198] sm:$0xff] %vm1508, %v1495
  %1561 = vst.msk [vmem:[%s7 + $0x1a0] sm:$0xff] %vm1508, %v1496
  %1562 = vst.msk [vmem:[%s7 + $0x1a8] sm:$0xff] %vm1508, %v1497
  %1563 = vst.msk [vmem:[%s7 + $0x1b0] sm:$0xff] %vm1508, %v1498
  %1564 = vst.msk [vmem:[%s7 + $0x1b8] sm:$0xff] %vm1508, %v1499
  %1565 = vst.msk [vmem:[%s7 + $0x1c0] sm:$0xff] %vm1508, %v1500
  %1566 = vst.msk [vmem:[%s7 + $0x1c8] sm:$0xff] %vm1508, %v1501
  %1567 = vst.msk [vmem:[%s7 + $0x1d0] sm:$0xff] %vm1508, %v1502
  %1568 = vst.msk [vmem:[%s7 + $0x1d8] sm:$0xff] %vm1508, %v1503
  %1569 = vst.msk [vmem:[%s7 + $0x1e0] sm:$0xff] %vm1508, %v1504
  %1570 = vst.msk [vmem:[%s7 + $0x1e8] sm:$0xff] %vm1508, %v1505
  %1571 = vst.msk [vmem:[%s7 + $0x1f0] sm:$0xff] %vm1508, %v1506
  %1572 = vst.msk [vmem:[%s7 + $0x1f8] sm:$0xff] %vm1508, %v1507
  // Predicated region
  $region30: #{_forward_impl.1} parent=0 // pred_check
    _
  $region31: #{_forward_impl.1} parent=0 // pred_check_branch
    %1574 = sbr.rel (0) target = $region33
  $region32: #{_forward_impl.1} parent=0 // pred_region
    _
  $region33: #{_forward_impl.1} parent=0 // pred_fallthru
    _
  // Predicated region
  $region34: #{_forward_impl.1} parent=0 // pred_check
    _
  $region35: #{_forward_impl.1} parent=0 // pred_check_branch
    %1576 = sbr.rel (0) target = $region37
  $region36: #{_forward_impl.1} parent=0 // pred_region
    _
  $region37: #{_forward_impl.1} parent=0 // pred_fallthru
    _

// kernel: _forward_impl.1
$region0: #{_forward_impl.1}
  #allocation0 [shape = 'u32[]', space=smem, size = 0x4, offset = 0x4, fixed_abs, tag = 'smem constant byte address 0x4 - core index']
  #allocation1 [shape = 'u32[144,128]{1,0:T(1,128)}', space=vmem, size = 0x12000, scoped, tag = 'internal scratch']
  %s0 = inlined_call_operand.vmem [shape: f32[512,32], index: 0, kind: input, shape index: {}]
  %s1 = inlined_call_operand.vmem [shape: bf16[32,128], index: 1, kind: input, shape index: {}]
  %s2 = inlined_call_operand.vmem [shape: f32[1,128], index: 2, kind: input, shape index: {}]
  %s3 = inlined_call_operand.vmem [shape: bf16[128,128], index: 3, kind: input, shape index: {}]
  %s4 = inlined_call_operand.vmem [shape: f32[1,128], index: 4, kind: input, shape index: {}]
  %s5 = inlined_call_operand.vmem [shape: bf16[128,16], index: 5, kind: input, shape index: {}]
  %s6 = inlined_call_operand.vmem [shape: f32[1,16], index: 6, kind: input, shape index: {}]
  %s7 = inlined_call_operand.vmem [shape: f32[512,16], index: 7, kind: output, shape index: {}]
  %s8 = sld [smem:[#allocation0]]
  $region38: #{_forward_impl.1} parent=0
    _
  %s10 = ssub.s32 1, %s8
  %s11 = scalar_select 0, %s10, %s8
  // Predicated region
  $region2: #{_forward_impl.1} parent=0 // pred_check
    _
  $region3: #{_forward_impl.1} parent=0 // pred_check_branch
    %13 = sbr.rel (0) target = $region5
  $region4: #{_forward_impl.1} parent=0 // pred_region
    _
  $region5: #{_forward_impl.1} parent=0 // pred_fallthru
    _
  // Predicated region
  $region6: #{_forward_impl.1} parent=0 // pred_check
    _
  $region7: #{_forward_impl.1} parent=0 // pred_check_branch
    %15 = sbr.rel (0) target = $region9
  $region8: #{_forward_impl.1} parent=0 // pred_region
    _
  $region9: #{_forward_impl.1} parent=0 // pred_fallthru
    _
  // Predicated region
  $region10: #{_forward_impl.1} parent=0 // pred_check
    _
  $region11: #{_forward_impl.1} parent=0 // pred_check_branch
    %17 = sbr.rel (0) target = $region13
  $region12: #{_forward_impl.1} parent=0 // pred_region
    _
  $region13: #{_forward_impl.1} parent=0 // pred_fallthru
    _
  // Predicated region
  $region14: #{_forward_impl.1} parent=0 // pred_check
    _
  $region15: #{_forward_impl.1} parent=0 // pred_check_branch
    %19 = sbr.rel (0) target = $region17
  $region16: #{_forward_impl.1} parent=0 // pred_region
    _
  $region17: #{_forward_impl.1} parent=0 // pred_fallthru
    _
  // Predicated region
  $region18: #{_forward_impl.1} parent=0 // pred_check
    _
  $region19: #{_forward_impl.1} parent=0 // pred_check_branch
    %21 = sbr.rel (0) target = $region21
  $region20: #{_forward_impl.1} parent=0 // pred_region
    _
  $region21: #{_forward_impl.1} parent=0 // pred_fallthru
    _
  // Predicated region
  $region22: #{_forward_impl.1} parent=0 // pred_check
    _
  $region23: #{_forward_impl.1} parent=0 // pred_check_branch
    %23 = sbr.rel (0) target = $region25
  $region24: #{_forward_impl.1} parent=0 // pred_region
    _
  $region25: #{_forward_impl.1} parent=0 // pred_fallthru
    _
  // Predicated region
  $region26: #{_forward_impl.1} parent=0 // pred_check
    _
  $region27: #{_forward_impl.1} parent=0 // pred_check_branch
    %25 = sbr.rel (0) target = $region29
  $region28: #{_forward_impl.1} parent=0 // pred_region
    _
  $region29: #{_forward_impl.1} parent=0 // pred_fallthru
    _
  %v27 = vld [vmem:[%s0] sm:$0xff]
  %v28 = vld [vmem:[%s0 + $0x8] sm:$0xff]
  %v29 = vld [vmem:[%s0 + $0x10] sm:$0xff]
  %v30 = vld [vmem:[%s0 + $0x18] sm:$0xff]
  %v31 = vld [vmem:[%s0 + $0x20] sm:$0xff]
  %v32 = vld [vmem:[%s0 + $0x28] sm:$0xff]
  %v33 = vld [vmem:[%s0 + $0x30] sm:$0xff]
  %v34 = vld [vmem:[%s0 + $0x38] sm:$0xff]
  %v35 = vld [vmem:[%s0 + $0x40] sm:$0xff]
  %v36 = vld [vmem:[%s0 + $0x48] sm:$0xff]
  %v37 = vld [vmem:[%s0 + $0x50] sm:$0xff]
  %v38 = vld [vmem:[%s0 + $0x58] sm:$0xff]
  %v39 = vld [vmem:[%s0 + $0x60] sm:$0xff]
  %v40 = vld [vmem:[%s0 + $0x68] sm:$0xff]
  %v41 = vld [vmem:[%s0 + $0x70] sm:$0xff]
  %v42 = vld [vmem:[%s0 + $0x78] sm:$0xff]
  %v43 = vld [vmem:[%s0 + $0x80] sm:$0xff]
  %v44 = vld [vmem:[%s0 + $0x88] sm:$0xff]
  %v45 = vld [vmem:[%s0 + $0x90] sm:$0xff]
  %v46 = vld [vmem:[%s0 + $0x98] sm:$0xff]
  %v47 = vld [vmem:[%s0 + $0xa0] sm:$0xff]
  %v48 = vld [vmem:[%s0 + $0xa8] sm:$0xff]
  %v49 = vld [vmem:[%s0 + $0xb0] sm:$0xff]
  %v50 = vld [vmem:[%s0 + $0xb8] sm:$0xff]
  %v51 = vld [vmem:[%s0 + $0xc0] sm:$0xff]
  %v52 = vld [vmem:[%s0 + $0xc8] sm:$0xff]
  %v53 = vld [vmem:[%s0 + $0xd0] sm:$0xff]
  %v54 = vld [vmem:[%s0 + $0xd8] sm:$0xff]
  %v55 = vld [vmem:[%s0 + $0xe0] sm:$0xff]
  %v56 = vld [vmem:[%s0 + $0xe8] sm:$0xff]
  %v57 = vld [vmem:[%s0 + $0xf0] sm:$0xff]
  %v58 = vld [vmem:[%s0 + $0xf8] sm:$0xff]
  %v59 = vld [vmem:[%s0 + $0x100] sm:$0xff]
  %v60 = vld [vmem:[%s0 + $0x108] sm:$0xff]
  %v61 = vld [vmem:[%s0 + $0x110] sm:$0xff]
  %v62 = vld [vmem:[%s0 + $0x118] sm:$0xff]
  %v63 = vld [vmem:[%s0 + $0x120] sm:$0xff]
  %v64 = vld [vmem:[%s0 + $0x128] sm:$0xff]
  %v65 = vld [vmem:[%s0 + $0x130] sm:$0xff]
  %v66 = vld [vmem:[%s0 + $0x138] sm:$0xff]
  %v67 = vld [vmem:[%s0 + $0x140] sm:$0xff]
  %v68 = vld [vmem:[%s0 + $0x148] sm:$0xff]
  %v69 = vld [vmem:[%s0 + $0x150] sm:$0xff]
  %v70 = vld [vmem:[%s0 + $0x158] sm:$0xff]
  %v71 = vld [vmem:[%s0 + $0x160] sm:$0xff]
  %v72 = vld [vmem:[%s0 + $0x168] sm:$0xff]
  %v73 = vld [vmem:[%s0 + $0x170] sm:$0xff]
  %v74 = vld [vmem:[%s0 + $0x178] sm:$0xff]
  %v75 = vld [vmem:[%s0 + $0x180] sm:$0xff]
  %v76 = vld [vmem:[%s0 + $0x188] sm:$0xff]
  %v77 = vld [vmem:[%s0 + $0x190] sm:$0xff]
  %v78 = vld [vmem:[%s0 + $0x198] sm:$0xff]
  %v79 = vld [vmem:[%s0 + $0x1a0] sm:$0xff]
  %v80 = vld [vmem:[%s0 + $0x1a8] sm:$0xff]
  %v81 = vld [vmem:[%s0 + $0x1b0] sm:$0xff]
  %v82 = vld [vmem:[%s0 + $0x1b8] sm:$0xff]
  %v83 = vld [vmem:[%s0 + $0x1c0] sm:$0xff]
  %v84 = vld [vmem:[%s0 + $0x1c8] sm:$0xff]
  %v85 = vld [vmem:[%s0 + $0x1d0] sm:$0xff]
  %v86 = vld [vmem:[%s0 + $0x1d8] sm:$0xff]
  %v87 = vld [vmem:[%s0 + $0x1e0] sm:$0xff]
  %v88 = vld [vmem:[%s0 + $0x1e8] sm:$0xff]
  %v89 = vld [vmem:[%s0 + $0x1f0] sm:$0xff]
  %v90 = vld [vmem:[%s0 + $0x1f8] sm:$0xff]
  %v91 = vpack.c.bf16 %v28, %v27
  %v92 = vpack.c.bf16 %v30, %v29
  %v93 = vpack.c.bf16 %v32, %v31
  %v94 = vpack.c.bf16 %v34, %v33
  %v95 = vpack.c.bf16 %v36, %v35
  %v96 = vpack.c.bf16 %v38, %v37
  %v97 = vpack.c.bf16 %v40, %v39
  %v98 = vpack.c.bf16 %v42, %v41
  %v99 = vpack.c.bf16 %v44, %v43
  %v100 = vpack.c.bf16 %v46, %v45
  %v101 = vpack.c.bf16 %v48, %v47
  %v102 = vpack.c.bf16 %v50, %v49
  %v103 = vpack.c.bf16 %v52, %v51
  %v104 = vpack.c.bf16 %v54, %v53
  %v105 = vpack.c.bf16 %v56, %v55
  %v106 = vpack.c.bf16 %v58, %v57
  %v107 = vpack.c.bf16 %v60, %v59
  %v108 = vpack.c.bf16 %v62, %v61
  %v109 = vpack.c.bf16 %v64, %v63
  %v110 = vpack.c.bf16 %v66, %v65
  %v111 = vpack.c.bf16 %v68, %v67
  %v112 = vpack.c.bf16 %v70, %v69
  %v113 = vpack.c.bf16 %v72, %v71
  %v114 = vpack.c.bf16 %v74, %v73
  %v115 = vpack.c.bf16 %v76, %v75
  %v116 = vpack.c.bf16 %v78, %v77
  %v117 = vpack.c.bf16 %v80, %v79
  %v118 = vpack.c.bf16 %v82, %v81
  %v119 = vpack.c.bf16 %v84, %v83
  %v120 = vpack.c.bf16 %v86, %v85
  %v121 = vpack.c.bf16 %v88, %v87
  %v122 = vpack.c.bf16 %v90, %v89
  %v123 = vld [vmem:[%s1] sm:$0xf]
  %v124 = vld [vmem:[%s1 + $0x4] sm:$0xf]
  %v125 = vld [vmem:[%s1 + $0x8] sm:$0xf]
  %v126 = vld [vmem:[%s1 + $0xc] sm:$0xf]
  %v127 = vld [vmem:[%s2] sm:$0x1]
  %v129 = vlaneseq
  %v130 = vshrl.u32 %v129, 7
  %v131 = vsub.s32 0, %v130
  %v132 = vrot.slane %v127, %v131
  %v138 = vunpack.c.l.b16 %v123
  %v139 = vunpack.c.l.b16 %v124
  %v140 = vunpack.c.l.b16 %v125
  %v141 = vunpack.c.l.b16 %v126
  %v142 = vpack.c.b16 %v139, %v138
  %v143 = vpack.c.b16 %v141, %v140
  %vm146 = vcmask 261120
  %v148 = vsel %vm146, %v91, 0
  %v151 = vsel %vm146, %v92, 0
  %v154 = vsel %vm146, %v93, 0
  %v157 = vsel %vm146, %v94, 0
  %v160 = vsel %vm146, %v95, 0
  %v163 = vsel %vm146, %v96, 0
  %v166 = vsel %vm146, %v97, 0
  %v169 = vsel %vm146, %v98, 0
  %v172 = vsel %vm146, %v99, 0
  %v175 = vsel %vm146, %v100, 0
  %v178 = vsel %vm146, %v101, 0
  %v181 = vsel %vm146, %v102, 0
  %v184 = vsel %vm146, %v103, 0
  %v187 = vsel %vm146, %v104, 0
  %v190 = vsel %vm146, %v105, 0
  %v193 = vsel %vm146, %v106, 0
  %v196 = vsel %vm146, %v107, 0
  %v199 = vsel %vm146, %v108, 0
  %v202 = vsel %vm146, %v109, 0
  %v205 = vsel %vm146, %v110, 0
  %v208 = vsel %vm146, %v111, 0
  %v211 = vsel %vm146, %v112, 0
  %v214 = vsel %vm146, %v113, 0
  %v217 = vsel %vm146, %v114, 0
  %v220 = vsel %vm146, %v115, 0
  %v223 = vsel %vm146, %v116, 0
  %v226 = vsel %vm146, %v117, 0
  %v229 = vsel %vm146, %v118, 0
  %v232 = vsel %vm146, %v119, 0
  %v235 = vsel %vm146, %v120, 0
  %v238 = vsel %vm146, %v121, 0
  %v241 = vsel %vm146, %v122, 0
  %243 = vmatprep.subr.bf16.mxu0 0
  %244 = vmatpush1.bf16.msra.mxu0 %v142
  %245 = vmatprep.subr.bf16.mxu0 0
  %246 = vmatpush1.bf16.msra.mxu0 %v143
  %247 = vmatprep.subr.bf16.mxu0 0
  %248 = vmatpush1.bf16.msra.mxu0 0
  %249 = vmatprep.subr.bf16.mxu0 0
  %250 = vmatpush1.bf16.msra.mxu0 0
  %251 = vmatprep.subr.bf16.mxu0 0
  %252 = vmatpush1.bf16.msra.mxu0 0
  %253 = vmatprep.subr.bf16.mxu0 0
  %254 = vmatpush1.bf16.msra.mxu0 0
  %255 = vmatprep.subr.bf16.mxu0 0
  %256 = vmatpush1.bf16.msra.mxu0 0
  %257 = vmatprep.subr.bf16.mxu0 0
  %258 = vmatpush1.bf16.msra.mxu0 0
  %259 = vmatprep.subr.bf16.mxu0 0
  %260 = vmatpush1.bf16.msra.mxu0 0
  %261 = vmatprep.subr.bf16.mxu0 0
  %262 = vmatpush1.bf16.msra.mxu0 0
  %263 = vmatprep.subr.bf16.mxu0 0
  %264 = vmatpush1.bf16.msra.mxu0 0
  %265 = vmatprep.subr.bf16.mxu0 0
  %266 = vmatpush1.bf16.msra.mxu0 0
  %267 = vmatprep.subr.bf16.mxu0 0
  %268 = vmatpush1.bf16.msra.mxu0 0
  %269 = vmatprep.subr.bf16.mxu0 0
  %270 = vmatpush1.bf16.msra.mxu0 0
  %271 = vmatprep.subr.bf16.mxu0 0
  %272 = vmatpush1.bf16.msra.mxu0 0
  %273 = vmatprep.subr.bf16.mxu0 0
  %274 = vmatpush1.bf16.msra.mxu0 0
  %275 = vmatprep.mubr.bf16.mxu0 0
  %276 = vmatmul.mubr.bf16.gmra.mrb[0].mxu0 %v148
  %v277 = vpop.f32.mrb[0].mxu0
  %v278 = vadd.f32 %v132, %v277
  %v279 = vpop.f32.mrb[0].mxu0
  %v280 = vpop.f32.mrb[0].mxu0
  %v281 = vadd.f32 %v132, %v280
  %v282 = vpop.f32.mrb[0].mxu0
  %283 = vmatprep.mubr.bf16.mxu0 0
  %284 = vmatmul.mubr.bf16.gmra.mrb[0].mxu0 %v151
  %v285 = vpop.f32.mrb[0].mxu0
  %v286 = vadd.f32 %v132, %v285
  %v287 = vpop.f32.mrb[0].mxu0
  %v288 = vpop.f32.mrb[0].mxu0
  %v289 = vadd.f32 %v132, %v288
  %v290 = vpop.f32.mrb[0].mxu0
  %291 = vmatprep.mubr.bf16.mxu0 0
  %292 = vmatmul.mubr.bf16.gmra.mrb[0].mxu0 %v154
  %v293 = vpop.f32.mrb[0].mxu0
  %v294 = vadd.f32 %v132, %v293
  %v295 = vpop.f32.mrb[0].mxu0
  %v296 = vpop.f32.mrb[0].mxu0
  %v297 = vadd.f32 %v132, %v296
  %v298 = vpop.f32.mrb[0].mxu0
  %299 = vmatprep.mubr.bf16.mxu0 0
  %300 = vmatmul.mubr.bf16.gmra.mrb[0].mxu0 %v157
  %v301 = vpop.f32.mrb[0].mxu0
  %v302 = vadd.f32 %v132, %v301
  %v303 = vpop.f32.mrb[0].mxu0
  %v304 = vpop.f32.mrb[0].mxu0
  %v305 = vadd.f32 %v132, %v304
  %v306 = vpop.f32.mrb[0].mxu0
  %307 = vmatprep.mubr.bf16.mxu0 0
  %308 = vmatmul.mubr.bf16.gmra.mrb[0].mxu0 %v160
  %v309 = vpop.f32.mrb[0].mxu0
  %v310 = vadd.f32 %v132, %v309
  %v311 = vpop.f32.mrb[0].mxu0
  %v312 = vpop.f32.mrb[0].mxu0
  %v313 = vadd.f32 %v132, %v312
  %v314 = vpop.f32.mrb[0].mxu0
  %315 = vmatprep.mubr.bf16.mxu0 0
  %316 = vmatmul.mubr.bf16.gmra.mrb[0].mxu0 %v163
  %v317 = vpop.f32.mrb[0].mxu0
  %v318 = vadd.f32 %v132, %v317
  %v319 = vpop.f32.mrb[0].mxu0
  %v320 = vpop.f32.mrb[0].mxu0
  %v321 = vadd.f32 %v132, %v320
  %v322 = vpop.f32.mrb[0].mxu0
  %323 = vmatprep.mubr.bf16.mxu0 0
  %324 = vmatmul.mubr.bf16.gmra.mrb[0].mxu0 %v166
  %v325 = vpop.f32.mrb[0].mxu0
  %v326 = vadd.f32 %v132, %v325
  %v327 = vpop.f32.mrb[0].mxu0
  %v328 = vpop.f32.mrb[0].mxu0
  %v329 = vadd.f32 %v132, %v328
  %v330 = vpop.f32.mrb[0].mxu0
  %331 = vmatprep.mubr.bf16.mxu0 0
  %332 = vmatmul.mubr.bf16.gmra.mrb[0].mxu0 %v169
  %v333 = vpop.f32.mrb[0].mxu0
  %v334 = vadd.f32 %v132, %v333
  %v335 = vpop.f32.mrb[0].mxu0
  %v336 = vpop.f32.mrb[0].mxu0
  %v337 = vadd.f32 %v132, %v336
  %v338 = vpop.f32.mrb[0].mxu0
  %339 = vmatprep.mubr.bf16.mxu0 0
  %340 = vmatmul.mubr.bf16.gmra.mrb[0].mxu0 %v172
  %v341 = vpop.f32.mrb[0].mxu0
  %v342 = vadd.f32 %v132, %v341
  %v343 = vpop.f32.mrb[0].mxu0
  %v344 = vpop.f32.mrb[0].mxu0
  %v345 = vadd.f32 %v132, %v344
  %v346 = vpop.f32.mrb[0].mxu0
  %347 = vmatprep.mubr.bf16.mxu0 0
  %348 = vmatmul.mubr.bf16.gmra.mrb[0].mxu0 %v175
  %v349 = vpop.f32.mrb[0].mxu0
  %v350 = vadd.f32 %v132, %v349
  %v351 = vpop.f32.mrb[0].mxu0
  %v352 = vpop.f32.mrb[0].mxu0
  %v353 = vadd.f32 %v132, %v352
  %v354 = vpop.f32.mrb[0].mxu0
  %355 = vmatprep.mubr.bf16.mxu0 0
  %356 = vmatmul.mubr.bf16.gmra.mrb[0].mxu0 %v178
  %v357 = vpop.f32.mrb[0].mxu0
  %v358 = vadd.f32 %v132, %v357
  %v359 = vpop.f32.mrb[0].mxu0
  %v360 = vpop.f32.mrb[0].mxu0
  %v361 = vadd.f32 %v132, %v360
  %v362 = vpop.f32.mrb[0].mxu0
  %363 = vmatprep.mubr.bf16.mxu0 0
  %364 = vmatmul.mubr.bf16.gmra.mrb[0].mxu0 %v181
  %v365 = vpop.f32.mrb[0].mxu0
  %v366 = vadd.f32 %v132, %v365
  %v367 = vpop.f32.mrb[0].mxu0
  %v368 = vpop.f32.mrb[0].mxu0
  %v369 = vadd.f32 %v132, %v368
  %v370 = vpop.f32.mrb[0].mxu0
  %371 = vmatprep.mubr.bf16.mxu0 0
  %372 = vmatmul.mubr.bf16.gmra.mrb[0].mxu0 %v184
  %v373 = vpop.f32.mrb[0].mxu0
  %v374 = vadd.f32 %v132, %v373
  %v375 = vpop.f32.mrb[0].mxu0
  %v376 = vpop.f32.mrb[0].mxu0
  %v377 = vadd.f32 %v132, %v376
  %v378 = vpop.f32.mrb[0].mxu0
  %379 = vmatprep.mubr.bf16.mxu0 0
  %380 = vmatmul.mubr.bf16.gmra.mrb[0].mxu0 %v187
  %v381 = vpop.f32.mrb[0].mxu0
  %v382 = vadd.f32 %v132, %v381
  %v383 = vpop.f32.mrb[0].mxu0
  %v384 = vpop.f32.mrb[0].mxu0
  %v385 = vadd.f32 %v132, %v384
  %v386 = vpop.f32.mrb[0].mxu0
  %387 = vmatprep.mubr.bf16.mxu0 0
  %388 = vmatmul.mubr.bf16.gmra.mrb[0].mxu0 %v190
  %v389 = vpop.f32.mrb[0].mxu0
  %v390 = vadd.f32 %v132, %v389
  %v391 = vpop.f32.mrb[0].mxu0
  %v392 = vpop.f32.mrb[0].mxu0
  %v393 = vadd.f32 %v132, %v392
  %v394 = vpop.f32.mrb[0].mxu0
  %395 = vmatprep.mubr.bf16.mxu0 0
  %396 = vmatmul.mubr.bf16.gmra.mrb[0].mxu0 %v193
  %v397 = vpop.f32.mrb[0].mxu0
  %v398 = vadd.f32 %v132, %v397
  %v399 = vpop.f32.mrb[0].mxu0
  %v400 = vpop.f32.mrb[0].mxu0
  %v401 = vadd.f32 %v132, %v400
  %v402 = vpop.f32.mrb[0].mxu0
  %403 = vmatprep.mubr.bf16.mxu0 0
  %404 = vmatmul.mubr.bf16.gmra.mrb[0].mxu0 %v196
  %v405 = vpop.f32.mrb[0].mxu0
  %v406 = vadd.f32 %v132, %v405
  %v407 = vpop.f32.mrb[0].mxu0
  %v408 = vpop.f32.mrb[0].mxu0
  %v409 = vadd.f32 %v132, %v408
  %v410 = vpop.f32.mrb[0].mxu0
  %411 = vmatprep.mubr.bf16.mxu0 0
  %412 = vmatmul.mubr.bf16.gmra.mrb[0].mxu0 %v199
  %v413 = vpop.f32.mrb[0].mxu0
  %v414 = vadd.f32 %v132, %v413
  %v415 = vpop.f32.mrb[0].mxu0
  %v416 = vpop.f32.mrb[0].mxu0
  %v417 = vadd.f32 %v132, %v416
  %v418 = vpop.f32.mrb[0].mxu0
  %419 = vmatprep.mubr.bf16.mxu0 0
  %420 = vmatmul.mubr.bf16.gmra.mrb[0].mxu0 %v202
  %v421 = vpop.f32.mrb[0].mxu0
  %v422 = vadd.f32 %v132, %v421
  %v423 = vpop.f32.mrb[0].mxu0
  %v424 = vpop.f32.mrb[0].mxu0
  %v425 = vadd.f32 %v132, %v424
  %v426 = vpop.f32.mrb[0].mxu0
  %427 = vmatprep.mubr.bf16.mxu0 0
  %428 = vmatmul.mubr.bf16.gmra.mrb[0].mxu0 %v205
  %v429 = vpop.f32.mrb[0].mxu0
  %v430 = vadd.f32 %v132, %v429
  %v431 = vpop.f32.mrb[0].mxu0
  %v432 = vpop.f32.mrb[0].mxu0
  %v433 = vadd.f32 %v132, %v432
  %v434 = vpop.f32.mrb[0].mxu0
  %435 = vmatprep.mubr.bf16.mxu0 0
  %436 = vmatmul.mubr.bf16.gmra.mrb[0].mxu0 %v208
  %v437 = vpop.f32.mrb[0].mxu0
  %v438 = vadd.f32 %v132, %v437
  %v439 = vpop.f32.mrb[0].mxu0
  %v440 = vpop.f32.mrb[0].mxu0
  %v441 = vadd.f32 %v132, %v440
  %v442 = vpop.f32.mrb[0].mxu0
  %443 = vmatprep.mubr.bf16.mxu0 0
  %444 = vmatmul.mubr.bf16.gmra.mrb[0].mxu0 %v211
  %v445 = vpop.f32.mrb[0].mxu0
  %v446 = vadd.f32 %v132, %v445
  %v447 = vpop.f32.mrb[0].mxu0
  %v448 = vpop.f32.mrb[0].mxu0
  %v449 = vadd.f32 %v132, %v448
  %v450 = vpop.f32.mrb[0].mxu0
  %451 = vmatprep.mubr.bf16.mxu0 0
  %452 = vmatmul.mubr.bf16.gmra.mrb[0].mxu0 %v214
  %v453 = vpop.f32.mrb[0].mxu0
  %v454 = vadd.f32 %v132, %v453
  %v455 = vpop.f32.mrb[0].mxu0
  %v456 = vpop.f32.mrb[0].mxu0
  %v457 = vadd.f32 %v132, %v456
  %v458 = vpop.f32.mrb[0].mxu0
  %459 = vmatprep.mubr.bf16.mxu0 0
  %460 = vmatmul.mubr.bf16.gmra.mrb[0].mxu0 %v217
  %v461 = vpop.f32.mrb[0].mxu0
  %v462 = vadd.f32 %v132, %v461
  %v463 = vpop.f32.mrb[0].mxu0
  %v464 = vpop.f32.mrb[0].mxu0
  %v465 = vadd.f32 %v132, %v464
  %v466 = vpop.f32.mrb[0].mxu0
  %467 = vmatprep.mubr.bf16.mxu0 0
  %468 = vmatmul.mubr.bf16.gmra.mrb[0].mxu0 %v220
  %v469 = vpop.f32.mrb[0].mxu0
  %v470 = vadd.f32 %v132, %v469
  %v471 = vpop.f32.mrb[0].mxu0
  %v472 = vpop.f32.mrb[0].mxu0
  %v473 = vadd.f32 %v132, %v472
  %v474 = vpop.f32.mrb[0].mxu0
  %475 = vmatprep.mubr.bf16.mxu0 0
  %476 = vmatmul.mubr.bf16.gmra.mrb[0].mxu0 %v223
  %v477 = vpop.f32.mrb[0].mxu0
  %v478 = vadd.f32 %v132, %v477
  %v479 = vpop.f32.mrb[0].mxu0
  %v480 = vpop.f32.mrb[0].mxu0
  %v481 = vadd.f32 %v132, %v480
  %v482 = vpop.f32.mrb[0].mxu0
  %483 = vmatprep.mubr.bf16.mxu0 0
  %484 = vmatmul.mubr.bf16.gmra.mrb[0].mxu0 %v226
  %v485 = vpop.f32.mrb[0].mxu0
  %v486 = vadd.f32 %v132, %v485
  %v487 = vpop.f32.mrb[0].mxu0
  %v488 = vpop.f32.mrb[0].mxu0
  %v489 = vadd.f32 %v132, %v488
  %v490 = vpop.f32.mrb[0].mxu0
  %491 = vmatprep.mubr.bf16.mxu0 0
  %492 = vmatmul.mubr.bf16.gmra.mrb[0].mxu0 %v229
  %v493 = vpop.f32.mrb[0].mxu0
  %v494 = vadd.f32 %v132, %v493
  %v495 = vpop.f32.mrb[0].mxu0
  %v496 = vpop.f32.mrb[0].mxu0
  %v497 = vadd.f32 %v132, %v496
  %v498 = vpop.f32.mrb[0].mxu0
  %499 = vmatprep.mubr.bf16.mxu0 0
  %500 = vmatmul.mubr.bf16.gmra.mrb[0].mxu0 %v232
  %v501 = vpop.f32.mrb[0].mxu0
  %v502 = vadd.f32 %v132, %v501
  %v503 = vpop.f32.mrb[0].mxu0
  %v504 = vpop.f32.mrb[0].mxu0
  %v505 = vadd.f32 %v132, %v504
  %v506 = vpop.f32.mrb[0].mxu0
  %507 = vmatprep.mubr.bf16.mxu0 0
  %508 = vmatmul.mubr.bf16.gmra.mrb[0].mxu0 %v235
  %v509 = vpop.f32.mrb[0].mxu0
  %v510 = vadd.f32 %v132, %v509
  %v511 = vpop.f32.mrb[0].mxu0
  %v512 = vpop.f32.mrb[0].mxu0
  %v513 = vadd.f32 %v132, %v512
  %v514 = vpop.f32.mrb[0].mxu0
  %515 = vmatprep.mubr.bf16.mxu0 0
  %516 = vmatmul.mubr.bf16.gmra.mrb[0].mxu0 %v238
  %v517 = vpop.f32.mrb[0].mxu0
  %v518 = vadd.f32 %v132, %v517
  %v519 = vpop.f32.mrb[0].mxu0
  %v520 = vpop.f32.mrb[0].mxu0
  %v521 = vadd.f32 %v132, %v520
  %v522 = vpop.f32.mrb[0].mxu0
  %523 = vmatprep.mubr.bf16.mxu0 0
  %524 = vmatmul.mubr.bf16.gmra.mrb[0].mxu0 %v241
  %v525 = vpop.f32.mrb[0].mxu0
  %v526 = vadd.f32 %v132, %v525
  %v527 = vpop.f32.mrb[0].mxu0
  %v528 = vpop.f32.mrb[0].mxu0
  %v529 = vadd.f32 %v132, %v528
  %v530 = vpop.f32.mrb[0].mxu0
  %531 = vdwg.mxu0
  %v532 = vmax.f32 %v278, 0.0
  %v533 = vmax.f32 %v281, 0.0
  %v534 = vmax.f32 %v286, 0.0
  %v535 = vmax.f32 %v289, 0.0
  %v536 = vmax.f32 %v294, 0.0
  %v537 = vmax.f32 %v297, 0.0
  %v538 = vmax.f32 %v302, 0.0
  %v539 = vmax.f32 %v305, 0.0
  %v540 = vmax.f32 %v310, 0.0
  %v541 = vmax.f32 %v313, 0.0
  %v542 = vmax.f32 %v318, 0.0
  %v543 = vmax.f32 %v321, 0.0
  %v544 = vmax.f32 %v326, 0.0
  %v545 = vmax.f32 %v329, 0.0
  %v546 = vmax.f32 %v334, 0.0
  %v547 = vmax.f32 %v337, 0.0
  %v548 = vmax.f32 %v342, 0.0
  %v549 = vmax.f32 %v345, 0.0
  %v550 = vmax.f32 %v350, 0.0
  %v551 = vmax.f32 %v353, 0.0
  %v552 = vmax.f32 %v358, 0.0
  %v553 = vmax.f32 %v361, 0.0
  %v554 = vmax.f32 %v366, 0.0
  %v555 = vmax.f32 %v369, 0.0
  %v556 = vmax.f32 %v374, 0.0
  %v557 = vmax.f32 %v377, 0.0
  %v558 = vmax.f32 %v382, 0.0
  %v559 = vmax.f32 %v385, 0.0
  %v560 = vmax.f32 %v390, 0.0
  %v561 = vmax.f32 %v393, 0.0
  %v562 = vmax.f32 %v398, 0.0
  %v563 = vmax.f32 %v401, 0.0
  %v564 = vmax.f32 %v406, 0.0
  %v565 = vmax.f32 %v409, 0.0
  %v566 = vmax.f32 %v414, 0.0
  %v567 = vmax.f32 %v417, 0.0
  %v568 = vmax.f32 %v422, 0.0
  %v569 = vmax.f32 %v425, 0.0
  %v570 = vmax.f32 %v430, 0.0
  %v571 = vmax.f32 %v433, 0.0
  %v572 = vmax.f32 %v438, 0.0
  %v573 = vmax.f32 %v441, 0.0
  %v574 = vmax.f32 %v446, 0.0
  %v575 = vmax.f32 %v449, 0.0
  %v576 = vmax.f32 %v454, 0.0
  %v577 = vmax.f32 %v457, 0.0
  %v578 = vmax.f32 %v462, 0.0
  %v579 = vmax.f32 %v465, 0.0
  %v580 = vmax.f32 %v470, 0.0
  %v581 = vmax.f32 %v473, 0.0
  %v582 = vmax.f32 %v478, 0.0
  %v583 = vmax.f32 %v481, 0.0
  %v584 = vmax.f32 %v486, 0.0
  %v585 = vmax.f32 %v489, 0.0
  %v586 = vmax.f32 %v494, 0.0
  %v587 = vmax.f32 %v497, 0.0
  %v588 = vmax.f32 %v502, 0.0
  %v589 = vmax.f32 %v505, 0.0
  %v590 = vmax.f32 %v510, 0.0
  %v591 = vmax.f32 %v513, 0.0
  %v592 = vmax.f32 %v518, 0.0
  %v593 = vmax.f32 %v521, 0.0
  %v594 = vmax.f32 %v526, 0.0
  %v595 = vmax.f32 %v529, 0.0
  %v596 = vpack.c.bf16 %v533, %v532
  %v597 = vpack.c.bf16 %v535, %v534
  %v598 = vpack.c.bf16 %v537, %v536
  %v599 = vpack.c.bf16 %v539, %v538
  %v600 = vpack.c.bf16 %v541, %v540
  %v601 = vpack.c.bf16 %v543, %v542
  %v602 = vpack.c.bf16 %v545, %v544
  %v603 = vpack.c.bf16 %v547, %v546
  %v604 = vpack.c.bf16 %v549, %v548
  %v605 = vpack.c.bf16 %v551, %v550
  %v606 = vpack.c.bf16 %v553, %v552
  %v607 = vpack.c.bf16 %v555, %v554
  %v608 = vpack.c.bf16 %v557, %v556
  %v609 = vpack.c.bf16 %v559, %v558
  %v610 = vpack.c.bf16 %v561, %v560
  %v611 = vpack.c.bf16 %v563, %v562
  %v612 = vpack.c.bf16 %v565, %v564
  %v613 = vpack.c.bf16 %v567, %v566
  %v614 = vpack.c.bf16 %v569, %v568
  %v615 = vpack.c.bf16 %v571, %v570
  %v616 = vpack.c.bf16 %v573, %v572
  %v617 = vpack.c.bf16 %v575, %v574
  %v618 = vpack.c.bf16 %v577, %v576
  %v619 = vpack.c.bf16 %v579, %v578
  %v620 = vpack.c.bf16 %v581, %v580
  %v621 = vpack.c.bf16 %v583, %v582
  %v622 = vpack.c.bf16 %v585, %v584
  %v623 = vpack.c.bf16 %v587, %v586
  %v624 = vpack.c.bf16 %v589, %v588
  %v625 = vpack.c.bf16 %v591, %v590
  %v626 = vpack.c.bf16 %v593, %v592
  %v627 = vpack.c.bf16 %v595, %v594
  %v628 = vld [vmem:[%s3] sm:$0xf]
  %v629 = vld [vmem:[%s3 + $0x4] sm:$0xf]
  %v630 = vld [vmem:[%s3 + $0x8] sm:$0xf]
  %v631 = vld [vmem:[%s3 + $0xc] sm:$0xf]
  %v632 = vld [vmem:[%s3 + $0x10] sm:$0xf]
  %v633 = vld [vmem:[%s3 + $0x14] sm:$0xf]
  %v634 = vld [vmem:[%s3 + $0x18] sm:$0xf]
  %v635 = vld [vmem:[%s3 + $0x1c] sm:$0xf]
  %v636 = vld [vmem:[%s3 + $0x20] sm:$0xf]
  %v637 = vld [vmem:[%s3 + $0x24] sm:$0xf]
  %v638 = vld [vmem:[%s3 + $0x28] sm:$0xf]
  %v639 = vld [vmem:[%s3 + $0x2c] sm:$0xf]
  %v640 = vld [vmem:[%s3 + $0x30] sm:$0xf]
  %v641 = vld [vmem:[%s3 + $0x34] sm:$0xf]
  %v642 = vld [vmem:[%s3 + $0x38] sm:$0xf]
  %v643 = vld [vmem:[%s3 + $0x3c] sm:$0xf]
  %v644 = vld [vmem:[%s4] sm:$0x1]
  %v646 = vlaneseq
  %v647 = vshrl.u32 %v646, 7
  %v648 = vsub.s32 0, %v647
  %v649 = vrot.slane %v644, %v648
  %v667 = vunpack.c.l.b16 %v628
  %v668 = vunpack.c.l.b16 %v629
  %v669 = vunpack.c.l.b16 %v630
  %v670 = vunpack.c.l.b16 %v631
  %v671 = vunpack.c.l.b16 %v632
  %v672 = vunpack.c.l.b16 %v633
  %v673 = vunpack.c.l.b16 %v634
  %v674 = vunpack.c.l.b16 %v635
  %v675 = vunpack.c.l.b16 %v636
  %v676 = vunpack.c.l.b16 %v637
  %v677 = vunpack.c.l.b16 %v638
  %v678 = vunpack.c.l.b16 %v639
  %v679 = vunpack.c.l.b16 %v640
  %v680 = vunpack.c.l.b16 %v641
  %v681 = vunpack.c.l.b16 %v642
  %v682 = vunpack.c.l.b16 %v643
  %v683 = vpack.c.b16 %v668, %v667
  %v684 = vpack.c.b16 %v670, %v669
  %v685 = vpack.c.b16 %v672, %v671
  %v686 = vpack.c.b16 %v674, %v673
  %v687 = vpack.c.b16 %v676, %v675
  %v688 = vpack.c.b16 %v678, %v677
  %v689 = vpack.c.b16 %v680, %v679
  %v690 = vpack.c.b16 %v682, %v681
  %699 = vmatprep.subr.bf16.mxu0 0
  %700 = vmatpush1.bf16.msra.mxu0 %v683
  %701 = vmatprep.subr.bf16.mxu0 0
  %702 = vmatpush1.bf16.msra.mxu0 %v684
  %703 = vmatprep.subr.bf16.mxu0 0
  %704 = vmatpush1.bf16.msra.mxu0 %v685
  %705 = vmatprep.subr.bf16.mxu0 0
  %706 = vmatpush1.bf16.msra.mxu0 %v686
  %707 = vmatprep.subr.bf16.mxu0 0
  %708 = vmatpush1.bf16.msra.mxu0 %v687
  %709 = vmatprep.subr.bf16.mxu0 0
  %710 = vmatpush1.bf16.msra.mxu0 %v688
  %711 = vmatprep.subr.bf16.mxu0 0
  %712 = vmatpush1.bf16.msra.mxu0 %v689
  %713 = vmatprep.subr.bf16.mxu0 0
  %714 = vmatpush1.bf16.msra.mxu0 %v690
  %715 = vmatprep.subr.bf16.mxu0 0
  %716 = vmatpush1.bf16.msra.mxu0 0
  %717 = vmatprep.subr.bf16.mxu0 0
  %718 = vmatpush1.bf16.msra.mxu0 0
  %719 = vmatprep.subr.bf16.mxu0 0
  %720 = vmatpush1.bf16.msra.mxu0 0
  %721 = vmatprep.subr.bf16.mxu0 0
  %722 = vmatpush1.bf16.msra.mxu0 0
  %723 = vmatprep.subr.bf16.mxu0 0
  %724 = vmatpush1.bf16.msra.mxu0 0
  %725 = vmatprep.subr.bf16.mxu0 0
  %726 = vmatpush1.bf16.msra.mxu0 0
  %727 = vmatprep.subr.bf16.mxu0 0
  %728 = vmatpush1.bf16.msra.mxu0 0
  %729 = vmatprep.subr.bf16.mxu0 0
  %730 = vmatpush1.bf16.msra.mxu0 0
  %731 = vmatprep.mubr.bf16.mxu0 0
  %732 = vmatmul.mubr.bf16.gmra.mrb[0].mxu0 %v596
  %v733 = vpop.f32.mrb[0].mxu0
  %v734 = vadd.f32 %v649, %v733
  %v735 = vpop.f32.mrb[0].mxu0
  %v736 = vpop.f32.mrb[0].mxu0
  %v737 = vadd.f32 %v649, %v736
  %v738 = vpop.f32.mrb[0].mxu0
  %739 = vmatprep.mubr.bf16.mxu0 0
  %740 = vmatmul.mubr.bf16.gmra.mrb[0].mxu0 %v597
  %v741 = vpop.f32.mrb[0].mxu0
  %v742 = vadd.f32 %v649, %v741
  %v743 = vpop.f32.mrb[0].mxu0
  %v744 = vpop.f32.mrb[0].mxu0
  %v745 = vadd.f32 %v649, %v744
  %v746 = vpop.f32.mrb[0].mxu0
  %747 = vmatprep.mubr.bf16.mxu0 0
  %748 = vmatmul.mubr.bf16.gmra.mrb[0].mxu0 %v598
  %v749 = vpop.f32.mrb[0].mxu0
  %v750 = vadd.f32 %v649, %v749
  %v751 = vpop.f32.mrb[0].mxu0
  %v752 = vpop.f32.mrb[0].mxu0
  %v753 = vadd.f32 %v649, %v752
  %v754 = vpop.f32.mrb[0].mxu0
  %755 = vmatprep.mubr.bf16.mxu0 0
  %756 = vmatmul.mubr.bf16.gmra.mrb[0].mxu0 %v599
  %v757 = vpop.f32.mrb[0].mxu0
  %v758 = vadd.f32 %v649, %v757
  %v759 = vpop.f32.mrb[0].mxu0
  %v760 = vpop.f32.mrb[0].mxu0
  %v761 = vadd.f32 %v649, %v760
  %v762 = vpop.f32.mrb[0].mxu0
  %763 = vmatprep.mubr.bf16.mxu0 0
  %764 = vmatmul.mubr.bf16.gmra.mrb[0].mxu0 %v600
  %v765 = vpop.f32.mrb[0].mxu0
  %v766 = vadd.f32 %v649, %v765
  %v767 = vpop.f32.mrb[0].mxu0
  %v768 = vpop.f32.mrb[0].mxu0
  %v769 = vadd.f32 %v649, %v768
  %v770 = vpop.f32.mrb[0].mxu0
  %771 = vmatprep.mubr.bf16.mxu0 0
  %772 = vmatmul.mubr.bf16.gmra.mrb[0].mxu0 %v601
  %v773 = vpop.f32.mrb[0].mxu0
  %v774 = vadd.f32 %v649, %v773
  %v775 = vpop.f32.mrb[0].mxu0
  %v776 = vpop.f32.mrb[0].mxu0
  %v777 = vadd.f32 %v649, %v776
  %v778 = vpop.f32.mrb[0].mxu0
  %779 = vmatprep.mubr.bf16.mxu0 0
  %780 = vmatmul.mubr.bf16.gmra.mrb[0].mxu0 %v602
  %v781 = vpop.f32.mrb[0].mxu0
  %v782 = vadd.f32 %v649, %v781
  %v783 = vpop.f32.mrb[0].mxu0
  %v784 = vpop.f32.mrb[0].mxu0
  %v785 = vadd.f32 %v649, %v784
  %v786 = vpop.f32.mrb[0].mxu0
  %787 = vmatprep.mubr.bf16.mxu0 0
  %788 = vmatmul.mubr.bf16.gmra.mrb[0].mxu0 %v603
  %v789 = vpop.f32.mrb[0].mxu0
  %v790 = vadd.f32 %v649, %v789
  %v791 = vpop.f32.mrb[0].mxu0
  %v792 = vpop.f32.mrb[0].mxu0
  %v793 = vadd.f32 %v649, %v792
  %v794 = vpop.f32.mrb[0].mxu0
  %795 = vmatprep.mubr.bf16.mxu0 0
  %796 = vmatmul.mubr.bf16.gmra.mrb[0].mxu0 %v604
  %v797 = vpop.f32.mrb[0].mxu0
  %v798 = vadd.f32 %v649, %v797
  %v799 = vpop.f32.mrb[0].mxu0
  %v800 = vpop.f32.mrb[0].mxu0
  %v801 = vadd.f32 %v649, %v800
  %v802 = vpop.f32.mrb[0].mxu0
  %803 = vmatprep.mubr.bf16.mxu0 0
  %804 = vmatmul.mubr.bf16.gmra.mrb[0].mxu0 %v605
  %v805 = vpop.f32.mrb[0].mxu0
  %v806 = vadd.f32 %v649, %v805
  %v807 = vpop.f32.mrb[0].mxu0
  %v808 = vpop.f32.mrb[0].mxu0
  %v809 = vadd.f32 %v649, %v808
  %v810 = vpop.f32.mrb[0].mxu0
  %811 = vmatprep.mubr.bf16.mxu0 0
  %812 = vmatmul.mubr.bf16.gmra.mrb[0].mxu0 %v606
  %v813 = vpop.f32.mrb[0].mxu0
  %v814 = vadd.f32 %v649, %v813
  %v815 = vpop.f32.mrb[0].mxu0
  %v816 = vpop.f32.mrb[0].mxu0
  %v817 = vadd.f32 %v649, %v816
  %v818 = vpop.f32.mrb[0].mxu0
  %819 = vmatprep.mubr.bf16.mxu0 0
  %820 = vmatmul.mubr.bf16.gmra.mrb[0].mxu0 %v607
  %v821 = vpop.f32.mrb[0].mxu0
  %v822 = vadd.f32 %v649, %v821
  %v823 = vpop.f32.mrb[0].mxu0
  %v824 = vpop.f32.mrb[0].mxu0
  %v825 = vadd.f32 %v649, %v824
  %v826 = vpop.f32.mrb[0].mxu0
  %827 = vmatprep.mubr.bf16.mxu0 0
  %828 = vmatmul.mubr.bf16.gmra.mrb[0].mxu0 %v608
  %v829 = vpop.f32.mrb[0].mxu0
  %v830 = vadd.f32 %v649, %v829
  %v831 = vpop.f32.mrb[0].mxu0
  %v832 = vpop.f32.mrb[0].mxu0
  %v833 = vadd.f32 %v649, %v832
  %v834 = vpop.f32.mrb[0].mxu0
  %835 = vmatprep.mubr.bf16.mxu0 0
  %836 = vmatmul.mubr.bf16.gmra.mrb[0].mxu0 %v609
  %v837 = vpop.f32.mrb[0].mxu0
  %v838 = vadd.f32 %v649, %v837
  %v839 = vpop.f32.mrb[0].mxu0
  %v840 = vpop.f32.mrb[0].mxu0
  %v841 = vadd.f32 %v649, %v840
  %v842 = vpop.f32.mrb[0].mxu0
  %843 = vmatprep.mubr.bf16.mxu0 0
  %844 = vmatmul.mubr.bf16.gmra.mrb[0].mxu0 %v610
  %v845 = vpop.f32.mrb[0].mxu0
  %v846 = vadd.f32 %v649, %v845
  %v847 = vpop.f32.mrb[0].mxu0
  %v848 = vpop.f32.mrb[0].mxu0
  %v849 = vadd.f32 %v649, %v848
  %v850 = vpop.f32.mrb[0].mxu0
  %851 = vmatprep.mubr.bf16.mxu0 0
  %852 = vmatmul.mubr.bf16.gmra.mrb[0].mxu0 %v611
  %v853 = vpop.f32.mrb[0].mxu0
  %v854 = vadd.f32 %v649, %v853
  %v855 = vpop.f32.mrb[0].mxu0
  %v856 = vpop.f32.mrb[0].mxu0
  %v857 = vadd.f32 %v649, %v856
  %v858 = vpop.f32.mrb[0].mxu0
  %859 = vmatprep.mubr.bf16.mxu0 0
  %860 = vmatmul.mubr.bf16.gmra.mrb[0].mxu0 %v612
  %v861 = vpop.f32.mrb[0].mxu0
  %v862 = vadd.f32 %v649, %v861
  %v863 = vpop.f32.mrb[0].mxu0
  %v864 = vpop.f32.mrb[0].mxu0
  %v865 = vadd.f32 %v649, %v864
  %v866 = vpop.f32.mrb[0].mxu0
  %867 = vmatprep.mubr.bf16.mxu0 0
  %868 = vmatmul.mubr.bf16.gmra.mrb[0].mxu0 %v613
  %v869 = vpop.f32.mrb[0].mxu0
  %v870 = vadd.f32 %v649, %v869
  %v871 = vpop.f32.mrb[0].mxu0
  %v872 = vpop.f32.mrb[0].mxu0
  %v873 = vadd.f32 %v649, %v872
  %v874 = vpop.f32.mrb[0].mxu0
  %875 = vmatprep.mubr.bf16.mxu0 0
  %876 = vmatmul.mubr.bf16.gmra.mrb[0].mxu0 %v614
  %v877 = vpop.f32.mrb[0].mxu0
  %v878 = vadd.f32 %v649, %v877
  %v879 = vpop.f32.mrb[0].mxu0
  %v880 = vpop.f32.mrb[0].mxu0
  %v881 = vadd.f32 %v649, %v880
  %v882 = vpop.f32.mrb[0].mxu0
  %883 = vmatprep.mubr.bf16.mxu0 0
  %884 = vmatmul.mubr.bf16.gmra.mrb[0].mxu0 %v615
  %v885 = vpop.f32.mrb[0].mxu0
  %v886 = vadd.f32 %v649, %v885
  %v887 = vpop.f32.mrb[0].mxu0
  %v888 = vpop.f32.mrb[0].mxu0
  %v889 = vadd.f32 %v649, %v888
  %v890 = vpop.f32.mrb[0].mxu0
  %891 = vmatprep.mubr.bf16.mxu0 0
  %892 = vmatmul.mubr.bf16.gmra.mrb[0].mxu0 %v616
  %v893 = vpop.f32.mrb[0].mxu0
  %v894 = vadd.f32 %v649, %v893
  %v895 = vpop.f32.mrb[0].mxu0
  %v896 = vpop.f32.mrb[0].mxu0
  %v897 = vadd.f32 %v649, %v896
  %v898 = vpop.f32.mrb[0].mxu0
  %899 = vmatprep.mubr.bf16.mxu0 0
  %900 = vmatmul.mubr.bf16.gmra.mrb[0].mxu0 %v617
  %v901 = vpop.f32.mrb[0].mxu0
  %v902 = vadd.f32 %v649, %v901
  %v903 = vpop.f32.mrb[0].mxu0
  %v904 = vpop.f32.mrb[0].mxu0
  %v905 = vadd.f32 %v649, %v904
  %v906 = vpop.f32.mrb[0].mxu0
  %907 = vmatprep.mubr.bf16.mxu0 0
  %908 = vmatmul.mubr.bf16.gmra.mrb[0].mxu0 %v618
  %v909 = vpop.f32.mrb[0].mxu0
  %v910 = vadd.f32 %v649, %v909
  %v911 = vpop.f32.mrb[0].mxu0
  %v912 = vpop.f32.mrb[0].mxu0
  %v913 = vadd.f32 %v649, %v912
  %v914 = vpop.f32.mrb[0].mxu0
  %915 = vmatprep.mubr.bf16.mxu0 0
  %916 = vmatmul.mubr.bf16.gmra.mrb[0].mxu0 %v619
  %v917 = vpop.f32.mrb[0].mxu0
  %v918 = vadd.f32 %v649, %v917
  %v919 = vpop.f32.mrb[0].mxu0
  %v920 = vpop.f32.mrb[0].mxu0
  %v921 = vadd.f32 %v649, %v920
  %v922 = vpop.f32.mrb[0].mxu0
  %923 = vmatprep.mubr.bf16.mxu0 0
  %924 = vmatmul.mubr.bf16.gmra.mrb[0].mxu0 %v620
  %v925 = vpop.f32.mrb[0].mxu0
  %v926 = vadd.f32 %v649, %v925
  %v927 = vpop.f32.mrb[0].mxu0
  %v928 = vpop.f32.mrb[0].mxu0
  %v929 = vadd.f32 %v649, %v928
  %v930 = vpop.f32.mrb[0].mxu0
  %931 = vmatprep.mubr.bf16.mxu0 0
  %932 = vmatmul.mubr.bf16.gmra.mrb[0].mxu0 %v621
  %v933 = vpop.f32.mrb[0].mxu0
  %v934 = vadd.f32 %v649, %v933
  %v935 = vpop.f32.mrb[0].mxu0
  %v936 = vpop.f32.mrb[0].mxu0
  %v937 = vadd.f32 %v649, %v936
  %v938 = vpop.f32.mrb[0].mxu0
  %939 = vmatprep.mubr.bf16.mxu0 0
  %940 = vmatmul.mubr.bf16.gmra.mrb[0].mxu0 %v622
  %v941 = vpop.f32.mrb[0].mxu0
  %v942 = vadd.f32 %v649, %v941
  %v943 = vpop.f32.mrb[0].mxu0
  %v944 = vpop.f32.mrb[0].mxu0
  %v945 = vadd.f32 %v649, %v944
  %v946 = vpop.f32.mrb[0].mxu0
  %947 = vmatprep.mubr.bf16.mxu0 0
  %948 = vmatmul.mubr.bf16.gmra.mrb[0].mxu0 %v623
  %v949 = vpop.f32.mrb[0].mxu0
  %v950 = vadd.f32 %v649, %v949
  %v951 = vpop.f32.mrb[0].mxu0
  %v952 = vpop.f32.mrb[0].mxu0
  %v953 = vadd.f32 %v649, %v952
  %v954 = vpop.f32.mrb[0].mxu0
  %955 = vmatprep.mubr.bf16.mxu0 0
  %956 = vmatmul.mubr.bf16.gmra.mrb[0].mxu0 %v624
  %v957 = vpop.f32.mrb[0].mxu0
  %v958 = vadd.f32 %v649, %v957
  %v959 = vpop.f32.mrb[0].mxu0
  %v960 = vpop.f32.mrb[0].mxu0
  %v961 = vadd.f32 %v649, %v960
  %v962 = vpop.f32.mrb[0].mxu0
  %963 = vmatprep.mubr.bf16.mxu0 0
  %964 = vmatmul.mubr.bf16.gmra.mrb[0].mxu0 %v625
  %v965 = vpop.f32.mrb[0].mxu0
  %v966 = vadd.f32 %v649, %v965
  %v967 = vpop.f32.mrb[0].mxu0
  %v968 = vpop.f32.mrb[0].mxu0
  %v969 = vadd.f32 %v649, %v968
  %v970 = vpop.f32.mrb[0].mxu0
  %971 = vmatprep.mubr.bf16.mxu0 0
  %972 = vmatmul.mubr.bf16.gmra.mrb[0].mxu0 %v626
  %v973 = vpop.f32.mrb[0].mxu0
  %v974 = vadd.f32 %v649, %v973
  %v975 = vpop.f32.mrb[0].mxu0
  %v976 = vpop.f32.mrb[0].mxu0
  %v977 = vadd.f32 %v649, %v976
  %v978 = vpop.f32.mrb[0].mxu0
  %979 = vmatprep.mubr.bf16.mxu0 0
  %980 = vmatmul.mubr.bf16.gmra.mrb[0].mxu0 %v627
  %v981 = vpop.f32.mrb[0].mxu0
  %v982 = vadd.f32 %v649, %v981
  %v983 = vpop.f32.mrb[0].mxu0
  %v984 = vpop.f32.mrb[0].mxu0
  %v985 = vadd.f32 %v649, %v984
  %v986 = vpop.f32.mrb[0].mxu0
  %987 = vdwg.mxu0
  %v988 = vmax.f32 %v734, 0.0
  %v989 = vmax.f32 %v737, 0.0
  %v990 = vmax.f32 %v742, 0.0
  %v991 = vmax.f32 %v745, 0.0
  %v992 = vmax.f32 %v750, 0.0
  %v993 = vmax.f32 %v753, 0.0
  %v994 = vmax.f32 %v758, 0.0
  %v995 = vmax.f32 %v761, 0.0
  %v996 = vmax.f32 %v766, 0.0
  %v997 = vmax.f32 %v769, 0.0
  %v998 = vmax.f32 %v774, 0.0
  %v999 = vmax.f32 %v777, 0.0
  %v1000 = vmax.f32 %v782, 0.0
  %v1001 = vmax.f32 %v785, 0.0
  %v1002 = vmax.f32 %v790, 0.0
  %v1003 = vmax.f32 %v793, 0.0
  %v1004 = vmax.f32 %v798, 0.0
  %v1005 = vmax.f32 %v801, 0.0
  %v1006 = vmax.f32 %v806, 0.0
  %v1007 = vmax.f32 %v809, 0.0
  %v1008 = vmax.f32 %v814, 0.0
  %v1009 = vmax.f32 %v817, 0.0
  %v1010 = vmax.f32 %v822, 0.0
  %v1011 = vmax.f32 %v825, 0.0
  %v1012 = vmax.f32 %v830, 0.0
  %v1013 = vmax.f32 %v833, 0.0
  %v1014 = vmax.f32 %v838, 0.0
  %v1015 = vmax.f32 %v841, 0.0
  %v1016 = vmax.f32 %v846, 0.0
  %v1017 = vmax.f32 %v849, 0.0
  %v1018 = vmax.f32 %v854, 0.0
  %v1019 = vmax.f32 %v857, 0.0
  %v1020 = vmax.f32 %v862, 0.0
  %v1021 = vmax.f32 %v865, 0.0
  %v1022 = vmax.f32 %v870, 0.0
  %v1023 = vmax.f32 %v873, 0.0
  %v1024 = vmax.f32 %v878, 0.0
  %v1025 = vmax.f32 %v881, 0.0
  %v1026 = vmax.f32 %v886, 0.0
  %v1027 = vmax.f32 %v889, 0.0
  %v1028 = vmax.f32 %v894, 0.0
  %v1029 = vmax.f32 %v897, 0.0
  %v1030 = vmax.f32 %v902, 0.0
  %v1031 = vmax.f32 %v905, 0.0
  %v1032 = vmax.f32 %v910, 0.0
  %v1033 = vmax.f32 %v913, 0.0
  %v1034 = vmax.f32 %v918, 0.0
  %v1035 = vmax.f32 %v921, 0.0
  %v1036 = vmax.f32 %v926, 0.0
  %v1037 = vmax.f32 %v929, 0.0
  %v1038 = vmax.f32 %v934, 0.0
  %v1039 = vmax.f32 %v937, 0.0
  %v1040 = vmax.f32 %v942, 0.0
  %v1041 = vmax.f32 %v945, 0.0
  %v1042 = vmax.f32 %v950, 0.0
  %v1043 = vmax.f32 %v953, 0.0
  %v1044 = vmax.f32 %v958, 0.0
  %v1045 = vmax.f32 %v961, 0.0
  %v1046 = vmax.f32 %v966, 0.0
  %v1047 = vmax.f32 %v969, 0.0
  %v1048 = vmax.f32 %v974, 0.0
  %v1049 = vmax.f32 %v977, 0.0
  %v1050 = vmax.f32 %v982, 0.0
  %v1051 = vmax.f32 %v985, 0.0
  %v1052 = vpack.c.bf16 %v989, %v988
  %v1053 = vpack.c.bf16 %v991, %v990
  %v1054 = vpack.c.bf16 %v993, %v992
  %v1055 = vpack.c.bf16 %v995, %v994
  %v1056 = vpack.c.bf16 %v997, %v996
  %v1057 = vpack.c.bf16 %v999, %v998
  %v1058 = vpack.c.bf16 %v1001, %v1000
  %v1059 = vpack.c.bf16 %v1003, %v1002
  %v1060 = vpack.c.bf16 %v1005, %v1004
  %v1061 = vpack.c.bf16 %v1007, %v1006
  %v1062 = vpack.c.bf16 %v1009, %v1008
  %v1063 = vpack.c.bf16 %v1011, %v1010
  %v1064 = vpack.c.bf16 %v1013, %v1012
  %v1065 = vpack.c.bf16 %v1015, %v1014
  %v1066 = vpack.c.bf16 %v1017, %v1016
  %v1067 = vpack.c.bf16 %v1019, %v1018
  %v1068 = vpack.c.bf16 %v1021, %v1020
  %v1069 = vpack.c.bf16 %v1023, %v1022
  %v1070 = vpack.c.bf16 %v1025, %v1024
  %v1071 = vpack.c.bf16 %v1027, %v1026
  %v1072 = vpack.c.bf16 %v1029, %v1028
  %v1073 = vpack.c.bf16 %v1031, %v1030
  %v1074 = vpack.c.bf16 %v1033, %v1032
  %v1075 = vpack.c.bf16 %v1035, %v1034
  %v1076 = vpack.c.bf16 %v1037, %v1036
  %v1077 = vpack.c.bf16 %v1039, %v1038
  %v1078 = vpack.c.bf16 %v1041, %v1040
  %v1079 = vpack.c.bf16 %v1043, %v1042
  %v1080 = vpack.c.bf16 %v1045, %v1044
  %v1081 = vpack.c.bf16 %v1047, %v1046
  %v1082 = vpack.c.bf16 %v1049, %v1048
  %v1083 = vpack.c.bf16 %v1051, %v1050
  %v1084 = vld [vmem:[%s5] sm:$0xf]
  %v1085 = vld [vmem:[%s5 + $0x4] sm:$0xf]
  %v1086 = vld [vmem:[%s5 + $0x8] sm:$0xf]
  %v1087 = vld [vmem:[%s5 + $0xc] sm:$0xf]
  %v1088 = vld [vmem:[%s5 + $0x10] sm:$0xf]
  %v1089 = vld [vmem:[%s5 + $0x14] sm:$0xf]
  %v1090 = vld [vmem:[%s5 + $0x18] sm:$0xf]
  %v1091 = vld [vmem:[%s5 + $0x1c] sm:$0xf]
  %v1092 = vld [vmem:[%s5 + $0x20] sm:$0xf]
  %v1093 = vld [vmem:[%s5 + $0x24] sm:$0xf]
  %v1094 = vld [vmem:[%s5 + $0x28] sm:$0xf]
  %v1095 = vld [vmem:[%s5 + $0x2c] sm:$0xf]
  %v1096 = vld [vmem:[%s5 + $0x30] sm:$0xf]
  %v1097 = vld [vmem:[%s5 + $0x34] sm:$0xf]
  %v1098 = vld [vmem:[%s5 + $0x38] sm:$0xf]
  %v1099 = vld [vmem:[%s5 + $0x3c] sm:$0xf]
  %v1100 = vld [vmem:[%s6] sm:$0x1]
  %v1102 = vlaneseq
  %v1103 = vshrl.u32 %v1102, 7
  %v1104 = vsub.s32 0, %v1103
  %v1105 = vrot.slane %v1100, %v1104
  %v1123 = vunpack.c.l.b16 %v1084
  %v1124 = vunpack.c.l.b16 %v1085
  %v1125 = vunpack.c.l.b16 %v1086
  %v1126 = vunpack.c.l.b16 %v1087
  %v1127 = vunpack.c.l.b16 %v1088
  %v1128 = vunpack.c.l.b16 %v1089
  %v1129 = vunpack.c.l.b16 %v1090
  %v1130 = vunpack.c.l.b16 %v1091
  %v1131 = vunpack.c.l.b16 %v1092
  %v1132 = vunpack.c.l.b16 %v1093
  %v1133 = vunpack.c.l.b16 %v1094
  %v1134 = vunpack.c.l.b16 %v1095
  %v1135 = vunpack.c.l.b16 %v1096
  %v1136 = vunpack.c.l.b16 %v1097
  %v1137 = vunpack.c.l.b16 %v1098
  %v1138 = vunpack.c.l.b16 %v1099
  %v1139 = vpack.c.b16 %v1124, %v1123
  %v1140 = vpack.c.b16 %v1126, %v1125
  %v1141 = vpack.c.b16 %v1128, %v1127
  %v1142 = vpack.c.b16 %v1130, %v1129
  %v1143 = vpack.c.b16 %v1132, %v1131
  %v1144 = vpack.c.b16 %v1134, %v1133
  %v1145 = vpack.c.b16 %v1136, %v1135
  %v1146 = vpack.c.b16 %v1138, %v1137
  %1155 = vmatprep.subr.bf16.mxu0 0
  %1156 = vmatpush1.bf16.msra.mxu0 %v1139
  %1157 = vmatprep.subr.bf16.mxu0 0
  %1158 = vmatpush1.bf16.msra.mxu0 %v1140
  %1159 = vmatprep.subr.bf16.mxu0 0
  %1160 = vmatpush1.bf16.msra.mxu0 %v1141
  %1161 = vmatprep.subr.bf16.mxu0 0
  %1162 = vmatpush1.bf16.msra.mxu0 %v1142
  %1163 = vmatprep.subr.bf16.mxu0 0
  %1164 = vmatpush1.bf16.msra.mxu0 %v1143
  %1165 = vmatprep.subr.bf16.mxu0 0
  %1166 = vmatpush1.bf16.msra.mxu0 %v1144
  %1167 = vmatprep.subr.bf16.mxu0 0
  %1168 = vmatpush1.bf16.msra.mxu0 %v1145
  %1169 = vmatprep.subr.bf16.mxu0 0
  %1170 = vmatpush1.bf16.msra.mxu0 %v1146
  %1171 = vmatprep.subr.bf16.mxu0 0
  %1172 = vmatpush1.bf16.msra.mxu0 0
  %1173 = vmatprep.subr.bf16.mxu0 0
  %1174 = vmatpush1.bf16.msra.mxu0 0
  %1175 = vmatprep.subr.bf16.mxu0 0
  %1176 = vmatpush1.bf16.msra.mxu0 0
  %1177 = vmatprep.subr.bf16.mxu0 0
  %1178 = vmatpush1.bf16.msra.mxu0 0
  %1179 = vmatprep.subr.bf16.mxu0 0
  %1180 = vmatpush1.bf16.msra.mxu0 0
  %1181 = vmatprep.subr.bf16.mxu0 0
  %1182 = vmatpush1.bf16.msra.mxu0 0
  %1183 = vmatprep.subr.bf16.mxu0 0
  %1184 = vmatpush1.bf16.msra.mxu0 0
  %1185 = vmatprep.subr.bf16.mxu0 0
  %1186 = vmatpush1.bf16.msra.mxu0 0
  %1187 = vmatprep.mubr.bf16.mxu0 0
  %1188 = vmatmul.mubr.bf16.gmra.mrb[0].mxu0 %v1052
  %v1189 = vpop.f32.mrb[0].mxu0
  %v1190 = vadd.f32 %v1105, %v1189
  %v1191 = vpop.f32.mrb[0].mxu0
  %v1192 = vpop.f32.mrb[0].mxu0
  %v1193 = vadd.f32 %v1105, %v1192
  %v1194 = vpop.f32.mrb[0].mxu0
  %1195 = vmatprep.mubr.bf16.mxu0 0
  %1196 = vmatmul.mubr.bf16.gmra.mrb[0].mxu0 %v1053
  %v1197 = vpop.f32.mrb[0].mxu0
  %v1198 = vadd.f32 %v1105, %v1197
  %v1199 = vpop.f32.mrb[0].mxu0
  %v1200 = vpop.f32.mrb[0].mxu0
  %v1201 = vadd.f32 %v1105, %v1200
  %v1202 = vpop.f32.mrb[0].mxu0
  %1203 = vmatprep.mubr.bf16.mxu0 0
  %1204 = vmatmul.mubr.bf16.gmra.mrb[0].mxu0 %v1054
  %v1205 = vpop.f32.mrb[0].mxu0
  %v1206 = vadd.f32 %v1105, %v1205
  %v1207 = vpop.f32.mrb[0].mxu0
  %v1208 = vpop.f32.mrb[0].mxu0
  %v1209 = vadd.f32 %v1105, %v1208
  %v1210 = vpop.f32.mrb[0].mxu0
  %1211 = vmatprep.mubr.bf16.mxu0 0
  %1212 = vmatmul.mubr.bf16.gmra.mrb[0].mxu0 %v1055
  %v1213 = vpop.f32.mrb[0].mxu0
  %v1214 = vadd.f32 %v1105, %v1213
  %v1215 = vpop.f32.mrb[0].mxu0
  %v1216 = vpop.f32.mrb[0].mxu0
  %v1217 = vadd.f32 %v1105, %v1216
  %v1218 = vpop.f32.mrb[0].mxu0
  %1219 = vmatprep.mubr.bf16.mxu0 0
  %1220 = vmatmul.mubr.bf16.gmra.mrb[0].mxu0 %v1056
  %v1221 = vpop.f32.mrb[0].mxu0
  %v1222 = vadd.f32 %v1105, %v1221
  %v1223 = vpop.f32.mrb[0].mxu0
  %v1224 = vpop.f32.mrb[0].mxu0
  %v1225 = vadd.f32 %v1105, %v1224
  %v1226 = vpop.f32.mrb[0].mxu0
  %1227 = vmatprep.mubr.bf16.mxu0 0
  %1228 = vmatmul.mubr.bf16.gmra.mrb[0].mxu0 %v1057
  %v1229 = vpop.f32.mrb[0].mxu0
  %v1230 = vadd.f32 %v1105, %v1229
  %v1231 = vpop.f32.mrb[0].mxu0
  %v1232 = vpop.f32.mrb[0].mxu0
  %v1233 = vadd.f32 %v1105, %v1232
  %v1234 = vpop.f32.mrb[0].mxu0
  %1235 = vmatprep.mubr.bf16.mxu0 0
  %1236 = vmatmul.mubr.bf16.gmra.mrb[0].mxu0 %v1058
  %v1237 = vpop.f32.mrb[0].mxu0
  %v1238 = vadd.f32 %v1105, %v1237
  %v1239 = vpop.f32.mrb[0].mxu0
  %v1240 = vpop.f32.mrb[0].mxu0
  %v1241 = vadd.f32 %v1105, %v1240
  %v1242 = vpop.f32.mrb[0].mxu0
  %1243 = vmatprep.mubr.bf16.mxu0 0
  %1244 = vmatmul.mubr.bf16.gmra.mrb[0].mxu0 %v1059
  %v1245 = vpop.f32.mrb[0].mxu0
  %v1246 = vadd.f32 %v1105, %v1245
  %v1247 = vpop.f32.mrb[0].mxu0
  %v1248 = vpop.f32.mrb[0].mxu0
  %v1249 = vadd.f32 %v1105, %v1248
  %v1250 = vpop.f32.mrb[0].mxu0
  %1251 = vmatprep.mubr.bf16.mxu0 0
  %1252 = vmatmul.mubr.bf16.gmra.mrb[0].mxu0 %v1060
  %v1253 = vpop.f32.mrb[0].mxu0
  %v1254 = vadd.f32 %v1105, %v1253
  %v1255 = vpop.f32.mrb[0].mxu0
  %v1256 = vpop.f32.mrb[0].mxu0
  %v1257 = vadd.f32 %v1105, %v1256
  %v1258 = vpop.f32.mrb[0].mxu0
  %1259 = vmatprep.mubr.bf16.mxu0 0
  %1260 = vmatmul.mubr.bf16.gmra.mrb[0].mxu0 %v1061
  %v1261 = vpop.f32.mrb[0].mxu0
  %v1262 = vadd.f32 %v1105, %v1261
  %v1263 = vpop.f32.mrb[0].mxu0
  %v1264 = vpop.f32.mrb[0].mxu0
  %v1265 = vadd.f32 %v1105, %v1264
  %v1266 = vpop.f32.mrb[0].mxu0
  %1267 = vmatprep.mubr.bf16.mxu0 0
  %1268 = vmatmul.mubr.bf16.gmra.mrb[0].mxu0 %v1062
  %v1269 = vpop.f32.mrb[0].mxu0
  %v1270 = vadd.f32 %v1105, %v1269
  %v1271 = vpop.f32.mrb[0].mxu0
  %v1272 = vpop.f32.mrb[0].mxu0
  %v1273 = vadd.f32 %v1105, %v1272
  %v1274 = vpop.f32.mrb[0].mxu0
  %1275 = vmatprep.mubr.bf16.mxu0 0
  %1276 = vmatmul.mubr.bf16.gmra.mrb[0].mxu0 %v1063
  %v1277 = vpop.f32.mrb[0].mxu0
  %v1278 = vadd.f32 %v1105, %v1277
  %v1279 = vpop.f32.mrb[0].mxu0
  %v1280 = vpop.f32.mrb[0].mxu0
  %v1281 = vadd.f32 %v1105, %v1280
  %v1282 = vpop.f32.mrb[0].mxu0
  %1283 = vmatprep.mubr.bf16.mxu0 0
  %1284 = vmatmul.mubr.bf16.gmra.mrb[0].mxu0 %v1064
  %v1285 = vpop.f32.mrb[0].mxu0
  %v1286 = vadd.f32 %v1105, %v1285
  %v1287 = vpop.f32.mrb[0].mxu0
  %v1288 = vpop.f32.mrb[0].mxu0
  %v1289 = vadd.f32 %v1105, %v1288
  %v1290 = vpop.f32.mrb[0].mxu0
  %1291 = vmatprep.mubr.bf16.mxu0 0
  %1292 = vmatmul.mubr.bf16.gmra.mrb[0].mxu0 %v1065
  %v1293 = vpop.f32.mrb[0].mxu0
  %v1294 = vadd.f32 %v1105, %v1293
  %v1295 = vpop.f32.mrb[0].mxu0
  %v1296 = vpop.f32.mrb[0].mxu0
  %v1297 = vadd.f32 %v1105, %v1296
  %v1298 = vpop.f32.mrb[0].mxu0
  %1299 = vmatprep.mubr.bf16.mxu0 0
  %1300 = vmatmul.mubr.bf16.gmra.mrb[0].mxu0 %v1066
  %v1301 = vpop.f32.mrb[0].mxu0
  %v1302 = vadd.f32 %v1105, %v1301
  %v1303 = vpop.f32.mrb[0].mxu0
  %v1304 = vpop.f32.mrb[0].mxu0
  %v1305 = vadd.f32 %v1105, %v1304
  %v1306 = vpop.f32.mrb[0].mxu0
  %1307 = vmatprep.mubr.bf16.mxu0 0
  %1308 = vmatmul.mubr.bf16.gmra.mrb[0].mxu0 %v1067
  %v1309 = vpop.f32.mrb[0].mxu0
  %v1310 = vadd.f32 %v1105, %v1309
  %v1311 = vpop.f32.mrb[0].mxu0
  %v1312 = vpop.f32.mrb[0].mxu0
  %v1313 = vadd.f32 %v1105, %v1312
  %v1314 = vpop.f32.mrb[0].mxu0
  %1315 = vmatprep.mubr.bf16.mxu0 0
  %1316 = vmatmul.mubr.bf16.gmra.mrb[0].mxu0 %v1068
  %v1317 = vpop.f32.mrb[0].mxu0
  %v1318 = vadd.f32 %v1105, %v1317
  %v1319 = vpop.f32.mrb[0].mxu0
  %v1320 = vpop.f32.mrb[0].mxu0
  %v1321 = vadd.f32 %v1105, %v1320
  %v1322 = vpop.f32.mrb[0].mxu0
  %1323 = vmatprep.mubr.bf16.mxu0 0
  %1324 = vmatmul.mubr.bf16.gmra.mrb[0].mxu0 %v1069
  %v1325 = vpop.f32.mrb[0].mxu0
  %v1326 = vadd.f32 %v1105, %v1325
  %v1327 = vpop.f32.mrb[0].mxu0
  %v1328 = vpop.f32.mrb[0].mxu0
  %v1329 = vadd.f32 %v1105, %v1328
  %v1330 = vpop.f32.mrb[0].mxu0
  %1331 = vmatprep.mubr.bf16.mxu0 0
  %1332 = vmatmul.mubr.bf16.gmra.mrb[0].mxu0 %v1070
  %v1333 = vpop.f32.mrb[0].mxu0
  %v1334 = vadd.f32 %v1105, %v1333
  %v1335 = vpop.f32.mrb[0].mxu0
  %v1336 = vpop.f32.mrb[0].mxu0
  %v1337 = vadd.f32 %v1105, %v1336
  %v1338 = vpop.f32.mrb[0].mxu0
  %1339 = vmatprep.mubr.bf16.mxu0 0
  %1340 = vmatmul.mubr.bf16.gmra.mrb[0].mxu0 %v1071
  %v1341 = vpop.f32.mrb[0].mxu0
  %v1342 = vadd.f32 %v1105, %v1341
  %v1343 = vpop.f32.mrb[0].mxu0
  %v1344 = vpop.f32.mrb[0].mxu0
  %v1345 = vadd.f32 %v1105, %v1344
  %v1346 = vpop.f32.mrb[0].mxu0
  %1347 = vmatprep.mubr.bf16.mxu0 0
  %1348 = vmatmul.mubr.bf16.gmra.mrb[0].mxu0 %v1072
  %v1349 = vpop.f32.mrb[0].mxu0
  %v1350 = vadd.f32 %v1105, %v1349
  %v1351 = vpop.f32.mrb[0].mxu0
  %v1352 = vpop.f32.mrb[0].mxu0
  %v1353 = vadd.f32 %v1105, %v1352
  %v1354 = vpop.f32.mrb[0].mxu0
  %1355 = vmatprep.mubr.bf16.mxu0 0
  %1356 = vmatmul.mubr.bf16.gmra.mrb[0].mxu0 %v1073
  %v1357 = vpop.f32.mrb[0].mxu0
  %v1358 = vadd.f32 %v1105, %v1357
  %v1359 = vpop.f32.mrb[0].mxu0
  %v1360 = vpop.f32.mrb[0].mxu0
  %v1361 = vadd.f32 %v1105, %v1360
  %v1362 = vpop.f32.mrb[0].mxu0
  %1363 = vmatprep.mubr.bf16.mxu0 0
  %1364 = vmatmul.mubr.bf16.gmra.mrb[0].mxu0 %v1074
  %v1365 = vpop.f32.mrb[0].mxu0
  %v1366 = vadd.f32 %v1105, %v1365
  %v1367 = vpop.f32.mrb[0].mxu0
  %v1368 = vpop.f32.mrb[0].mxu0
  %v1369 = vadd.f32 %v1105, %v1368
  %v1370 = vpop.f32.mrb[0].mxu0
  %1371 = vmatprep.mubr.bf16.mxu0 0
  %1372 = vmatmul.mubr.bf16.gmra.mrb[0].mxu0 %v1075
  %v1373 = vpop.f32.mrb[0].mxu0
  %v1374 = vadd.f32 %v1105, %v1373
  %v1375 = vpop.f32.mrb[0].mxu0
  %v1376 = vpop.f32.mrb[0].mxu0
  %v1377 = vadd.f32 %v1105, %v1376
  %v1378 = vpop.f32.mrb[0].mxu0
  %1379 = vmatprep.mubr.bf16.mxu0 0
  %1380 = vmatmul.mubr.bf16.gmra.mrb[0].mxu0 %v1076
  %v1381 = vpop.f32.mrb[0].mxu0
  %v1382 = vadd.f32 %v1105, %v1381
  %v1383 = vpop.f32.mrb[0].mxu0
  %v1384 = vpop.f32.mrb[0].mxu0
  %v1385 = vadd.f32 %v1105, %v1384
  %v1386 = vpop.f32.mrb[0].mxu0
  %1387 = vmatprep.mubr.bf16.mxu0 0
  %1388 = vmatmul.mubr.bf16.gmra.mrb[0].mxu0 %v1077
  %v1389 = vpop.f32.mrb[0].mxu0
  %v1390 = vadd.f32 %v1105, %v1389
  %v1391 = vpop.f32.mrb[0].mxu0
  %v1392 = vpop.f32.mrb[0].mxu0
  %v1393 = vadd.f32 %v1105, %v1392
  %v1394 = vpop.f32.mrb[0].mxu0
  %1395 = vmatprep.mubr.bf16.mxu0 0
  %1396 = vmatmul.mubr.bf16.gmra.mrb[0].mxu0 %v1078
  %v1397 = vpop.f32.mrb[0].mxu0
  %v1398 = vadd.f32 %v1105, %v1397
  %v1399 = vpop.f32.mrb[0].mxu0
  %v1400 = vpop.f32.mrb[0].mxu0
  %v1401 = vadd.f32 %v1105, %v1400
  %v1402 = vpop.f32.mrb[0].mxu0
  %1403 = vmatprep.mubr.bf16.mxu0 0
  %1404 = vmatmul.mubr.bf16.gmra.mrb[0].mxu0 %v1079
  %v1405 = vpop.f32.mrb[0].mxu0
  %v1406 = vadd.f32 %v1105, %v1405
  %v1407 = vpop.f32.mrb[0].mxu0
  %v1408 = vpop.f32.mrb[0].mxu0
  %v1409 = vadd.f32 %v1105, %v1408
  %v1410 = vpop.f32.mrb[0].mxu0
  %1411 = vmatprep.mubr.bf16.mxu0 0
  %1412 = vmatmul.mubr.bf16.gmra.mrb[0].mxu0 %v1080
  %v1413 = vpop.f32.mrb[0].mxu0
  %v1414 = vadd.f32 %v1105, %v1413
  %v1415 = vpop.f32.mrb[0].mxu0
  %v1416 = vpop.f32.mrb[0].mxu0
  %v1417 = vadd.f32 %v1105, %v1416
  %v1418 = vpop.f32.mrb[0].mxu0
  %1419 = vmatprep.mubr.bf16.mxu0 0
  %1420 = vmatmul.mubr.bf16.gmra.mrb[0].mxu0 %v1081
  %v1421 = vpop.f32.mrb[0].mxu0
  %v1422 = vadd.f32 %v1105, %v1421
  %v1423 = vpop.f32.mrb[0].mxu0
  %v1424 = vpop.f32.mrb[0].mxu0
  %v1425 = vadd.f32 %v1105, %v1424
  %v1426 = vpop.f32.mrb[0].mxu0
  %1427 = vmatprep.mubr.bf16.mxu0 0
  %1428 = vmatmul.mubr.bf16.gmra.mrb[0].mxu0 %v1082
  %v1429 = vpop.f32.mrb[0].mxu0
  %v1430 = vadd.f32 %v1105, %v1429
  %v1431 = vpop.f32.mrb[0].mxu0
  %v1432 = vpop.f32.mrb[0].mxu0
  %v1433 = vadd.f32 %v1105, %v1432
  %v1434 = vpop.f32.mrb[0].mxu0
  %1435 = vmatprep.mubr.bf16.mxu0 0
  %1436 = vmatmul.mubr.bf16.gmra.mrb[0].mxu0 %v1083
  %v1437 = vpop.f32.mrb[0].mxu0
  %v1438 = vadd.f32 %v1105, %v1437
  %v1439 = vpop.f32.mrb[0].mxu0
  %v1440 = vpop.f32.mrb[0].mxu0
  %v1441 = vadd.f32 %v1105, %v1440
  %v1442 = vpop.f32.mrb[0].mxu0
  %1443 = vdwg.mxu0
  %v1444 = vmax.f32 %v1190, 0.0
  %v1445 = vmax.f32 %v1193, 0.0
  %v1446 = vmax.f32 %v1198, 0.0
  %v1447 = vmax.f32 %v1201, 0.0
  %v1448 = vmax.f32 %v1206, 0.0
  %v1449 = vmax.f32 %v1209, 0.0
  %v1450 = vmax.f32 %v1214, 0.0
  %v1451 = vmax.f32 %v1217, 0.0
  %v1452 = vmax.f32 %v1222, 0.0
  %v1453 = vmax.f32 %v1225, 0.0
  %v1454 = vmax.f32 %v1230, 0.0
  %v1455 = vmax.f32 %v1233, 0.0
  %v1456 = vmax.f32 %v1238, 0.0
  %v1457 = vmax.f32 %v1241, 0.0
  %v1458 = vmax.f32 %v1246, 0.0
  %v1459 = vmax.f32 %v1249, 0.0
  %v1460 = vmax.f32 %v1254, 0.0
  %v1461 = vmax.f32 %v1257, 0.0
  %v1462 = vmax.f32 %v1262, 0.0
  %v1463 = vmax.f32 %v1265, 0.0
  %v1464 = vmax.f32 %v1270, 0.0
  %v1465 = vmax.f32 %v1273, 0.0
  %v1466 = vmax.f32 %v1278, 0.0
  %v1467 = vmax.f32 %v1281, 0.0
  %v1468 = vmax.f32 %v1286, 0.0
  %v1469 = vmax.f32 %v1289, 0.0
  %v1470 = vmax.f32 %v1294, 0.0
  %v1471 = vmax.f32 %v1297, 0.0
  %v1472 = vmax.f32 %v1302, 0.0
  %v1473 = vmax.f32 %v1305, 0.0
  %v1474 = vmax.f32 %v1310, 0.0
  %v1475 = vmax.f32 %v1313, 0.0
  %v1476 = vmax.f32 %v1318, 0.0
  %v1477 = vmax.f32 %v1321, 0.0
  %v1478 = vmax.f32 %v1326, 0.0
  %v1479 = vmax.f32 %v1329, 0.0
  %v1480 = vmax.f32 %v1334, 0.0
  %v1481 = vmax.f32 %v1337, 0.0
  %v1482 = vmax.f32 %v1342, 0.0
  %v1483 = vmax.f32 %v1345, 0.0
  %v1484 = vmax.f32 %v1350, 0.0
  %v1485 = vmax.f32 %v1353, 0.0
  %v1486 = vmax.f32 %v1358, 0.0
  %v1487 = vmax.f32 %v1361, 0.0
  %v1488 = vmax.f32 %v1366, 0.0
  %v1489 = vmax.f32 %v1369, 0.0
  %v1490 = vmax.f32 %v1374, 0.0
  %v1491 = vmax.f32 %v1377, 0.0
  %v1492 = vmax.f32 %v1382, 0.0
  %v1493 = vmax.f32 %v1385, 0.0
  %v1494 = vmax.f32 %v1390, 0.0
  %v1495 = vmax.f32 %v1393, 0.0
  %v1496 = vmax.f32 %v1398, 0.0
  %v1497 = vmax.f32 %v1401, 0.0
  %v1498 = vmax.f32 %v1406, 0.0
  %v1499 = vmax.f32 %v1409, 0.0
  %v1500 = vmax.f32 %v1414, 0.0
  %v1501 = vmax.f32 %v1417, 0.0
  %v1502 = vmax.f32 %v1422, 0.0
  %v1503 = vmax.f32 %v1425, 0.0
  %v1504 = vmax.f32 %v1430, 0.0
  %v1505 = vmax.f32 %v1433, 0.0
  %v1506 = vmax.f32 %v1438, 0.0
  %v1507 = vmax.f32 %v1441, 0.0
  %vm1508 = vcmask 130048
  %1509 = vst.msk [vmem:[%s7] sm:$0xff] %vm1508, %v1444
  %1510 = vst.msk [vmem:[%s7 + $0x8] sm:$0xff] %vm1508, %v1445
  %1511 = vst.msk [vmem:[%s7 + $0x10] sm:$0xff] %vm1508, %v1446
  %1512 = vst.msk [vmem:[%s7 + $0x18] sm:$0xff] %vm1508, %v1447
  %1513 = vst.msk [vmem:[%s7 + $0x20] sm:$0xff] %vm1508, %v1448
  %1514 = vst.msk [vmem:[%s7 + $0x28] sm:$0xff] %vm1508, %v1449
  %1515 = vst.msk [vmem:[%s7 + $0x30] sm:$0xff] %vm1508, %v1450
  %1516 = vst.msk [vmem:[%s7 + $0x38] sm:$0xff] %vm1508, %v1451
  %1517 = vst.msk [vmem:[%s7 + $0x40] sm:$0xff] %vm1508, %v1452
  %1518 = vst.msk [vmem:[%s7 + $0x48] sm:$0xff] %vm1508, %v1453
  %1519 = vst.msk [vmem:[%s7 + $0x50] sm:$0xff] %vm1508, %v1454
  %1520 = vst.msk [vmem:[%s7 + $0x58] sm:$0xff] %vm1508, %v1455
  %1521 = vst.msk [vmem:[%s7 + $0x60] sm:$0xff] %vm1508, %v1456
  %1522 = vst.msk [vmem:[%s7 + $0x68] sm:$0xff] %vm1508, %v1457
  %1523 = vst.msk [vmem:[%s7 + $0x70] sm:$0xff] %vm1508, %v1458
  %1524 = vst.msk [vmem:[%s7 + $0x78] sm:$0xff] %vm1508, %v1459
  %1525 = vst.msk [vmem:[%s7 + $0x80] sm:$0xff] %vm1508, %v1460
  %1526 = vst.msk [vmem:[%s7 + $0x88] sm:$0xff] %vm1508, %v1461
  %1527 = vst.msk [vmem:[%s7 + $0x90] sm:$0xff] %vm1508, %v1462
  %1528 = vst.msk [vmem:[%s7 + $0x98] sm:$0xff] %vm1508, %v1463
  %1529 = vst.msk [vmem:[%s7 + $0xa0] sm:$0xff] %vm1508, %v1464
  %1530 = vst.msk [vmem:[%s7 + $0xa8] sm:$0xff] %vm1508, %v1465
  %1531 = vst.msk [vmem:[%s7 + $0xb0] sm:$0xff] %vm1508, %v1466
  %1532 = vst.msk [vmem:[%s7 + $0xb8] sm:$0xff] %vm1508, %v1467
  %1533 = vst.msk [vmem:[%s7 + $0xc0] sm:$0xff] %vm1508, %v1468
  %1534 = vst.msk [vmem:[%s7 + $0xc8] sm:$0xff] %vm1508, %v1469
  %1535 = vst.msk [vmem:[%s7 + $0xd0] sm:$0xff] %vm1508, %v1470
  %1536 = vst.msk [vmem:[%s7 + $0xd8] sm:$0xff] %vm1508, %v1471
  %1537 = vst.msk [vmem:[%s7 + $0xe0] sm:$0xff] %vm1508, %v1472
  %1538 = vst.msk [vmem:[%s7 + $0xe8] sm:$0xff] %vm1508, %v1473
  %1539 = vst.msk [vmem:[%s7 + $0xf0] sm:$0xff] %vm1508, %v1474
  %1540 = vst.msk [vmem:[%s7 + $0xf8] sm:$0xff] %vm1508, %v1475
  %1541 = vst.msk [vmem:[%s7 + $0x100] sm:$0xff] %vm1508, %v1476
  %1542 = vst.msk [vmem:[%s7 + $0x108] sm:$0xff] %vm1508, %v1477
  %1543 = vst.msk [vmem:[%s7 + $0x110] sm:$0xff] %vm1508, %v1478
  %1544 = vst.msk [vmem:[%s7 + $0x118] sm:$0xff] %vm1508, %v1479
  %1545 = vst.msk [vmem:[%s7 + $0x120] sm:$0xff] %vm1508, %v1480
  %1546 = vst.msk [vmem:[%s7 + $0x128] sm:$0xff] %vm1508, %v1481
  %1547 = vst.msk [vmem:[%s7 + $0x130] sm:$0xff] %vm1508, %v1482
  %1548 = vst.msk [vmem:[%s7 + $0x138] sm:$0xff] %vm1508, %v1483
  %1549 = vst.msk [vmem:[%s7 + $0x140] sm:$0xff] %vm1508, %v1484
  %1550 = vst.msk [vmem:[%s7 + $0x148] sm:$0xff] %vm1508, %v1485
  %1551 = vst.msk [vmem:[%s7 + $0x150] sm:$0xff] %vm1508, %v1486
  %1552 = vst.msk [vmem:[%s7 + $0x158] sm:$0xff] %vm1508, %v1487
  %1553 = vst.msk [vmem:[%s7 + $0x160] sm:$0xff] %vm1508, %v1488
  %1554 = vst.msk [vmem:[%s7 + $0x168] sm:$0xff] %vm1508, %v1489
  %1555 = vst.msk [vmem:[%s7 + $0x170] sm:$0xff] %vm1508, %v1490
  %1556 = vst.msk [vmem:[%s7 + $0x178] sm:$0xff] %vm1508, %v1491
  %1557 = vst.msk [vmem:[%s7 + $0x180] sm:$0xff] %vm1508, %v1492
  %1558 = vst.msk [vmem:[%s7 + $0x188] sm:$0xff] %vm1508, %v1493
  %1559 = vst.msk [vmem:[%s7 + $0x190] sm:$0xff] %vm1508, %v1494
  %1560 = vst.msk [vmem:[%s7 + $0x198] sm:$0xff] %vm1508, %v1495
  %1561 = vst.msk [vmem:[%s7 + $0x1a0] sm:$0xff] %vm1508, %v1496
  %1562 = vst.msk [vmem:[%s7 + $0x1a8] sm:$0xff] %vm1508, %v1497
  %1563 = vst.msk [vmem:[%s7 + $0x1b0] sm:$0xff] %vm1508, %v1498
  %1564 = vst.msk [vmem:[%s7 + $0x1b8] sm:$0xff] %vm1508, %v1499
  %1565 = vst.msk [vmem:[%s7 + $0x1c0] sm:$0xff] %vm1508, %v1500
  %1566 = vst.msk [vmem:[%s7 + $0x1c8] sm:$0xff] %vm1508, %v1501
  %1567 = vst.msk [vmem:[%s7 + $0x1d0] sm:$0xff] %vm1508, %v1502
  %1568 = vst.msk [vmem:[%s7 + $0x1d8] sm:$0xff] %vm1508, %v1503
  %1569 = vst.msk [vmem:[%s7 + $0x1e0] sm:$0xff] %vm1508, %v1504
  %1570 = vst.msk [vmem:[%s7 + $0x1e8] sm:$0xff] %vm1508, %v1505
  %1571 = vst.msk [vmem:[%s7 + $0x1f0] sm:$0xff] %vm1508, %v1506
  %1572 = vst.msk [vmem:[%s7 + $0x1f8] sm:$0xff] %vm1508, %v1507
  // Predicated region
  $region30: #{_forward_impl.1} parent=0 // pred_check
    _
  $region31: #{_forward_impl.1} parent=0 // pred_check_branch
    %1574 = sbr.rel (0) target = $region33
  $region32: #{_forward_impl.1} parent=0 // pred_region
    _
  $region33: #{_forward_impl.1} parent=0 // pred_fallthru
    _
  // Predicated region
  $region34: #{_forward_impl.1} parent=0 // pred_check
    _
  $region35: #{_forward_impl.1} parent=0 // pred_check_branch
    %1576 = sbr.rel (0) target = $region37
  $region36: #{_forward_impl.1} parent=0 // pred_region
    _
  $region37: #{_forward_impl.1} parent=0 // pred_fallthru
    _

</llo_original>
